<compile_context>
chip_gen: v7x
topology: tpu7x:2x2x1
jax: 0.10.0
libtpu: 0.0.40
codegen_flags: <defaults>
</compile_context>

<pallas_src>
import math
import functools

import jax
import jax.numpy as jnp
from jax import lax
from jax.experimental import pallas as pl
from jax.experimental.pallas import tpu as pltpu

LN_EPS = 1e-5  # PyTorch nn.LayerNorm default


def _gelu_exact(x):
    # nn.GELU() default is the exact erf formulation (kept in f32).
    return 0.5 * x * (1.0 + lax.erf(x * (1.0 / math.sqrt(2.0))))


def _row_tile(n, max_tile=256):
    """Largest multiple-of-8 divisor of n that is <= max_tile (fallback: n)."""
    best = None
    for t in range(8, min(n, max_tile) + 1, 8):
        if n % t == 0:
            best = t
    return best if best is not None else n


# ----------------------------------------------------------------------------
# Fused Token_transformer block kernel.  grid = (B, N // TQ).
#   qi == 0      : LayerNorm1 + fused QKV -> VMEM scratch (Q bf16 pre-scaled,
#                  K^T bf16, V bf16 for P@V, V f32 for the skip connection).
#   every qi     : query-tiled attention + proj + v-skip + LN2 + MLP + residual.
# ----------------------------------------------------------------------------
def fused_block_kernel(x_ref, g1_ref, b1_ref, wqkv_ref, wproj_ref, bproj_ref,
                       g2_ref, b2_ref, wfc1_ref, bfc1_ref, wfc2_ref, bfc2_ref,
                       out_ref,
                       q_scr, kT_scr, vb_scr, vf_scr,
                       *, scale, in_dim, q_tile):
    # ---- stage A: once per batch element ----
    @pl.when(pl.program_id(1) == 0)
    def _():
        x = x_ref[0].astype(jnp.float32)                        # (N, dim) f32

        mu = jnp.mean(x, axis=-1, keepdims=True)
        var = jnp.mean(jnp.square(x - mu), axis=-1, keepdims=True)
        xn = (x - mu) * lax.rsqrt(var + LN_EPS)
        xn = xn * g1_ref[...] + b1_ref[...]

        # one fused QKV matmul (dim x 3*in_dim), bf16 operands, f32 accumulate
        qkv = jnp.dot(xn.astype(jnp.bfloat16), wqkv_ref[...],
                      preferred_element_type=jnp.float32)       # (N, 3*in_dim)
        q = qkv[:, 0 * in_dim:1 * in_dim] * scale               # scale folded in
        k = qkv[:, 1 * in_dim:2 * in_dim]
        v = qkv[:, 2 * in_dim:3 * in_dim]

        q_scr[...] = q.astype(jnp.bfloat16)
        # transpose K ONCE here (f32 XLU transpose) so stage B's score matmul is
        # a plain (TQ, D) @ (D, N) with no per-tile relayout of K.
        kT_scr[...] = k.T.astype(jnp.bfloat16)
        vb_scr[...] = v.astype(jnp.bfloat16)                    # for P @ V
        vf_scr[...] = v                                         # f32 skip path

    # ---- stage B: per query tile ----
    r0 = pl.multiple_of(pl.program_id(1) * q_tile, q_tile)
    q = q_scr[pl.ds(r0, q_tile), :]                             # (TQ, D) bf16

    s = jnp.dot(q, kT_scr[...], preferred_element_type=jnp.float32)   # (TQ, N)
    s = s - jnp.max(s, axis=-1, keepdims=True)
    p = jnp.exp(s)
    denom = jnp.sum(p, axis=-1, keepdims=True)                  # (TQ, 1)

    # softmax(s) @ v == (p @ v) * 1/denom -> fold the normalization after the
    # matmul so the divide is O(TQ*D) instead of O(TQ*N).
    o = jnp.dot(p.astype(jnp.bfloat16), vb_scr[...],
                preferred_element_type=jnp.float32)             # (TQ, D)
    o = o * pl.reciprocal(denom, approx=False)                  # exact recip

    o = jnp.dot(o.astype(jnp.bfloat16), wproj_ref[...],
                preferred_element_type=jnp.float32) + bproj_ref[...]

    # skip connection uses the V rows of this query tile (f32 copy in VMEM)
    xa = vf_scr[pl.ds(r0, q_tile), :] + o

    # norm2 + Mlp (mlp_ratio = 1.0) with residual, f32 math
    mu = jnp.mean(xa, axis=-1, keepdims=True)
    var = jnp.mean(jnp.square(xa - mu), axis=-1, keepdims=True)
    xn = (xa - mu) * lax.rsqrt(var + LN_EPS)
    xn = xn * g2_ref[...] + b2_ref[...]

    h = jnp.dot(xn.astype(jnp.bfloat16), wfc1_ref[...],
                preferred_element_type=jnp.float32) + bfc1_ref[...]
    h = _gelu_exact(h)
    m = jnp.dot(h.astype(jnp.bfloat16), wfc2_ref[...],
                preferred_element_type=jnp.float32) + bfc2_ref[...]

    out_ref[0] = (xa + m).astype(out_ref.dtype)


def token_transformer(x, params, *, in_dim, scale, out_dtype=jnp.bfloat16):
    """x: (B, N, dim) -> (B, N, in_dim).  One fused Token_transformer block."""
    B, N, dim = x.shape
    TQ = _row_tile(N, 256)          # query tile for attention/MLP
    NQ = N // TQ

    y = pl.pallas_call(
        functools.partial(fused_block_kernel,
                          scale=scale, in_dim=in_dim, q_tile=TQ),
        out_shape=jax.ShapeDtypeStruct((B, N, in_dim), out_dtype),
        grid=(B, NQ),
        in_specs=[
            # x stays resident per batch element (same block index for all qi)
            pl.BlockSpec((1, N, dim), lambda b, i: (b, 0, 0)),      # x
            pl.BlockSpec((1, dim), lambda b, i: (0, 0)),            # ln1 gamma
            pl.BlockSpec((1, dim), lambda b, i: (0, 0)),            # ln1 beta
            pl.BlockSpec((dim, 3 * in_dim), lambda b, i: (0, 0)),   # w_qkv (fused)
            pl.BlockSpec((in_dim, in_dim), lambda b, i: (0, 0)),    # w_proj
            pl.BlockSpec((1, in_dim), lambda b, i: (0, 0)),         # b_proj
            pl.BlockSpec((1, in_dim), lambda b, i: (0, 0)),         # ln2 gamma
            pl.BlockSpec((1, in_dim), lambda b, i: (0, 0)),         # ln2 beta
            pl.BlockSpec((in_dim, in_dim), lambda b, i: (0, 0)),    # w_fc1
            pl.BlockSpec((1, in_dim), lambda b, i: (0, 0)),         # b_fc1
            pl.BlockSpec((in_dim, in_dim), lambda b, i: (0, 0)),    # w_fc2
            pl.BlockSpec((1, in_dim), lambda b, i: (0, 0)),         # b_fc2
        ],
        out_specs=pl.BlockSpec((1, TQ, in_dim), lambda b, i: (b, i, 0)),
        scratch_shapes=[
            pltpu.VMEM((N, in_dim), jnp.bfloat16),   # Q (scale folded in)
            pltpu.VMEM((in_dim, N), jnp.bfloat16),   # K^T (pre-transposed)
            pltpu.VMEM((N, in_dim), jnp.bfloat16),   # V for P @ V
            pltpu.VMEM((N, in_dim), jnp.float32),    # V f32 for skip connection
        ],
        compiler_params=pltpu.CompilerParams(
            # batch axis parallel (v7x megacore shards on B); query axis must be
            # arbitrary since stage A at qi==0 feeds the scratch for all qi.
            dimension_semantics=("parallel", "arbitrary")),
    )(x, params["ln1_g"], params["ln1_b"],
      params["w_qkv"].astype(jnp.bfloat16),
      params["w_proj"].astype(jnp.bfloat16), params["b_proj"],
      params["ln2_g"], params["ln2_b"],
      params["w_fc1"].astype(jnp.bfloat16), params["b_fc1"],
      params["w_fc2"].astype(jnp.bfloat16), params["b_fc2"])
    return y


# ----------------------------------------------------------------------------
# Final Linear projection (token_dim*9 -> embed_dim), row-tiled GEMM.
# ----------------------------------------------------------------------------
def linear_kernel(x_ref, w_ref, b_ref, o_ref):
    o_ref[...] = (jnp.dot(x_ref[...].astype(jnp.bfloat16), w_ref[...],
                          preferred_element_type=jnp.float32)
                  + b_ref[...]).astype(o_ref.dtype)


def linear(x2d, w, b, out_dtype=jnp.float32):
    M, K = x2d.shape
    _, N = w.shape
    TM = _row_tile(M, 2048)   # bigger row tile -> fewer grid steps on a BW-bound GEMM
    return pl.pallas_call(
        linear_kernel,
        out_shape=jax.ShapeDtypeStruct((M, N), out_dtype),
        grid=(M // TM,),
        in_specs=[
            pl.BlockSpec((TM, K), lambda i: (i, 0)),
            pl.BlockSpec((K, N), lambda i: (0, 0)),
            pl.BlockSpec((1, N), lambda i: (0, 0)),
        ],
        out_specs=pl.BlockSpec((TM, N), lambda i: (i, 0)),
        compiler_params=pltpu.CompilerParams(
            dimension_semantics=("parallel",)),
    )(x2d, w.astype(jnp.bfloat16), b)


# ----------------------------------------------------------------------------
# nn.Unfold equivalent (im2col), NCHW, PyTorch channel ordering (C, kh, kw).
# ----------------------------------------------------------------------------
# TODO(synk): im2col + inter-stage transpose/reshape are pure data movement and
# are left to XLA; a scalar-prefetch gather index_map could fuse them later.
def unfold_nchw(x, k, stride, pad):
    B, C, H, W = x.shape
    xp = jnp.pad(x, ((0, 0), (0, 0), (pad, pad), (pad, pad)))
    Ho = (H + 2 * pad - k) // stride + 1
    Wo = (W + 2 * pad - k) // stride + 1
    cols = []
    for ki in range(k):
        for kj in range(k):
            cols.append(xp[:, :,
                           ki:ki + stride * (Ho - 1) + 1:stride,
                           kj:kj + stride * (Wo - 1) + 1:stride])
    cols = jnp.stack(cols, axis=2)                   # (B, C, k*k, Ho, Wo)
    return cols.reshape(B, C * k * k, Ho * Wo)       # (B, C*k*k, L)


# ----------------------------------------------------------------------------
# T2T_module forward (tokens_type='transformer')
# ----------------------------------------------------------------------------
def t2t_forward(x, p1, p2, w_project, b_project, *, token_dim):
    B = x.shape[0]

    # soft_split0: Unfold(7,7), stride 4, pad 2 -> (B, L0, C*49)
    x = jnp.transpose(unfold_nchw(x, 7, 4, 2), (0, 2, 1))
    dim1 = x.shape[-1]
    x = token_transformer(x, p1, in_dim=token_dim, scale=float(dim1) ** -0.5,
                          out_dtype=jnp.bfloat16)

    B_, N, C_ = x.shape
    h = int(math.sqrt(N))
    x = jnp.transpose(x, (0, 2, 1)).reshape(B_, C_, h, h)

    # soft_split1: Unfold(3,3), stride 2, pad 1
    x = jnp.transpose(unfold_nchw(x, 3, 2, 1), (0, 2, 1))
    dim2 = x.shape[-1]
    x = token_transformer(x, p2, in_dim=token_dim, scale=float(dim2) ** -0.5,
                          out_dtype=jnp.bfloat16)

    B_, N, C_ = x.shape
    h = int(math.sqrt(N))
    x = jnp.transpose(x, (0, 2, 1)).reshape(B_, C_, h, h)

    # soft_split2: Unfold(3,3), stride 2, pad 1
    x = jnp.transpose(unfold_nchw(x, 3, 2, 1), (0, 2, 1))   # (B, L2, token_dim*9)
    L2, D2 = x.shape[1], x.shape[2]

    # project: nn.Linear(token_dim*9, embed_dim)
    y = linear(x.reshape(B * L2, D2), w_project, b_project, out_dtype=jnp.float32)
    return y.reshape(B, L2, -1)


# ----------------------------------------------------------------------------
# Deterministic parameter init (synthetic weights; shapes match the module).
# ----------------------------------------------------------------------------
def init_token_transformer(key, dim, in_dim):
    ks = jax.random.split(key, 4)
    s = 0.02
    f32 = jnp.float32
    return dict(
        ln1_g=jnp.ones((1, dim), f32),
        ln1_b=jnp.zeros((1, dim), f32),
        w_qkv=jax.random.normal(ks[0], (dim, 3 * in_dim), f32) * s,
        w_proj=jax.random.normal(ks[1], (in_dim, in_dim), f32) * s,
        b_proj=jnp.zeros((1, in_dim), f32),
        ln2_g=jnp.ones((1, in_dim), f32),
        ln2_b=jnp.zeros((1, in_dim), f32),
        w_fc1=jax.random.normal(ks[2], (in_dim, in_dim), f32) * s,
        b_fc1=jnp.zeros((1, in_dim), f32),
        w_fc2=jax.random.normal(ks[3], (in_dim, in_dim), f32) * s,
        b_fc2=jnp.zeros((1, in_dim), f32),
    )


if __name__ == "__main__":
    # Small shapes consistent with the module: img_size=32 -> 4 output tokens.
    B, in_chans, img_size = 2, 3, 32
    token_dim, embed_dim = 32, 64

    key = jax.random.PRNGKey(0)
    kx, k1, k2, k3 = jax.random.split(key, 4)
    x = jax.random.normal(kx, (B, in_chans, img_size, img_size), jnp.float32)

    dim1 = in_chans * 7 * 7        # attention1 input dim
    dim2 = token_dim * 3 * 3       # attention2 / project input dim
    p1 = init_token_transformer(k1, dim1, token_dim)
    p2 = init_token_transformer(k2, dim2, token_dim)
    w_project = jax.random.normal(k3, (dim2, embed_dim), jnp.float32) * 0.02
    b_project = jnp.zeros((1, embed_dim), jnp.float32)

    fwd = jax.jit(functools.partial(t2t_forward, token_dim=token_dim))
    out = fwd(x, p1, p2, w_project, b_project)
    out = jax.block_until_ready(out)

    num_patches = (img_size // 16) * (img_size // 16)
    assert out.shape == (B, num_patches, embed_dim), out.shape
    assert jnp.all(jnp.isfinite(out))
    print("KERNEL_OK")
</pallas_src>

<mosaic_0001>
module attributes {stable_mosaic.version = 11 : i64} {
  func.func @fused_block_kernel(%arg0: i32, %arg1: i32, %arg2: memref<1x64x147xf32, #tpu.memory_space<vmem>>, %arg3: memref<1x147xf32, #tpu.memory_space<vmem>>, %arg4: memref<1x147xf32, #tpu.memory_space<vmem>>, %arg5: memref<147x96xbf16, #tpu.memory_space<vmem>>, %arg6: memref<32x32xbf16, #tpu.memory_space<vmem>>, %arg7: memref<1x32xf32, #tpu.memory_space<vmem>>, %arg8: memref<1x32xf32, #tpu.memory_space<vmem>>, %arg9: memref<1x32xf32, #tpu.memory_space<vmem>>, %arg10: memref<32x32xbf16, #tpu.memory_space<vmem>>, %arg11: memref<1x32xf32, #tpu.memory_space<vmem>>, %arg12: memref<32x32xbf16, #tpu.memory_space<vmem>>, %arg13: memref<1x32xf32, #tpu.memory_space<vmem>>, %arg14: memref<1x64x32xbf16, #tpu.memory_space<vmem>>, %arg15: memref<64x32xbf16, #tpu.memory_space<vmem>>, %arg16: memref<32x64xbf16, #tpu.memory_space<vmem>>, %arg17: memref<64x32xbf16, #tpu.memory_space<vmem>>, %arg18: memref<64x32xf32, #tpu.memory_space<vmem>>) attributes {dimension_semantics = [#tpu.dimension_semantics<parallel>, #tpu.dimension_semantics<arbitrary>], iteration_bounds = array<i64: 2, 1>, scalar_prefetch = 0 : i64, scratch_operands = 4 : i64, tpu.core_type = #tpu.core_type<tc>, window_params = [{transform_indices = @transform_0, window_bounds = array<i64: 1, 64, 147>}, {pipeline_mode = #tpu.pipeline_mode<synchronous>, transform_indices = @transform_1, window_bounds = array<i64: 1, 147>}, {pipeline_mode = #tpu.pipeline_mode<synchronous>, transform_indices = @transform_2, window_bounds = array<i64: 1, 147>}, {pipeline_mode = #tpu.pipeline_mode<synchronous>, transform_indices = @transform_3, window_bounds = array<i64: 147, 96>}, {pipeline_mode = #tpu.pipeline_mode<synchronous>, transform_indices = @transform_4, window_bounds = array<i64: 32, 32>}, {pipeline_mode = #tpu.pipeline_mode<synchronous>, transform_indices = @transform_5, window_bounds = array<i64: 1, 32>}, {pipeline_mode = #tpu.pipeline_mode<synchronous>, transform_indices = @transform_6, window_bounds = array<i64: 1, 32>}, {pipeline_mode = #tpu.pipeline_mode<synchronous>, transform_indices = @transform_7, window_bounds = array<i64: 1, 32>}, {pipeline_mode = #tpu.pipeline_mode<synchronous>, transform_indices = @transform_8, window_bounds = array<i64: 32, 32>}, {pipeline_mode = #tpu.pipeline_mode<synchronous>, transform_indices = @transform_9, window_bounds = array<i64: 1, 32>}, {pipeline_mode = #tpu.pipeline_mode<synchronous>, transform_indices = @transform_10, window_bounds = array<i64: 32, 32>}, {pipeline_mode = #tpu.pipeline_mode<synchronous>, transform_indices = @transform_11, window_bounds = array<i64: 1, 32>}, {transform_indices = @transform_12, window_bounds = array<i64: 1, 64, 32>}]} {
    %c0_i32 = arith.constant 0 : i32
    %0 = arith.cmpi eq, %arg1, %c0_i32 : i32
    %1 = arith.extui %0 : i1 to i32
    %c0_i32_0 = arith.constant 0 : i32
    %2 = arith.cmpi ne, %1, %c0_i32_0 : i32
    scf.if %2 {
      %c0_39 = arith.constant 0 : index
      %c0_40 = arith.constant 0 : index
      %c0_41 = arith.constant 0 : index
      %80 = vector.load %arg2[%c0_39, %c0_40, %c0_41] : memref<1x64x147xf32, #tpu.memory_space<vmem>>, vector<1x64x147xf32>
      %81 = vector.shape_cast %80 : vector<1x64x147xf32> to vector<64x147xf32>
      %cst_42 = arith.constant dense<0.000000e+00> : vector<64xf32>
      %82 = vector.multi_reduction <add>, %81, %cst_42 [1] : vector<64x147xf32> to vector<64xf32>
      %83 = vector.shape_cast %82 : vector<64xf32> to vector<64x1xf32>
      %cst_43 = arith.constant 1.470000e+02 : f32
      %84 = vector.broadcast %cst_43 : f32 to vector<64x1xf32>
      %85 = arith.divf %83, %84 : vector<64x1xf32>
      %86 = vector.broadcast %85 : vector<64x1xf32> to vector<64x147xf32>
      %87 = arith.subf %81, %86 : vector<64x147xf32>
      %88 = arith.mulf %87, %87 : vector<64x147xf32>
      %cst_44 = arith.constant dense<0.000000e+00> : vector<64xf32>
      %89 = vector.multi_reduction <add>, %88, %cst_44 [1] : vector<64x147xf32> to vector<64xf32>
      %90 = vector.shape_cast %89 : vector<64xf32> to vector<64x1xf32>
      %cst_45 = arith.constant 1.470000e+02 : f32
      %91 = vector.broadcast %cst_45 : f32 to vector<64x1xf32>
      %92 = arith.divf %90, %91 : vector<64x1xf32>
      %93 = vector.broadcast %85 : vector<64x1xf32> to vector<64x147xf32>
      %94 = arith.subf %81, %93 : vector<64x147xf32>
      %cst_46 = arith.constant 9.99999974E-6 : f32
      %95 = vector.broadcast %cst_46 : f32 to vector<64x1xf32>
      %96 = arith.addf %92, %95 : vector<64x1xf32>
      %97 = math.rsqrt %96 : vector<64x1xf32>
      %98 = vector.broadcast %97 : vector<64x1xf32> to vector<64x147xf32>
      %99 = arith.mulf %94, %98 : vector<64x147xf32>
      %c0_47 = arith.constant 0 : index
      %c0_48 = arith.constant 0 : index
      %100 = vector.load %arg3[%c0_47, %c0_48] : memref<1x147xf32, #tpu.memory_space<vmem>>, vector<1x147xf32>
      %101 = vector.broadcast %100 : vector<1x147xf32> to vector<64x147xf32>
      %102 = arith.mulf %99, %101 : vector<64x147xf32>
      %c0_49 = arith.constant 0 : index
      %c0_50 = arith.constant 0 : index
      %103 = vector.load %arg4[%c0_49, %c0_50] : memref<1x147xf32, #tpu.memory_space<vmem>>, vector<1x147xf32>
      %104 = vector.broadcast %103 : vector<1x147xf32> to vector<64x147xf32>
      %105 = arith.addf %102, %104 : vector<64x147xf32>
      %106 = arith.truncf %105 : vector<64x147xf32> to vector<64x147xbf16>
      %c0_51 = arith.constant 0 : index
      %c0_52 = arith.constant 0 : index
      %107 = vector.load %arg5[%c0_51, %c0_52] : memref<147x96xbf16, #tpu.memory_space<vmem>>, vector<147x96xbf16>
      %cst_53 = arith.constant dense<0.000000e+00> : vector<64x96xf32>
      %108 = tpu.matmul %106, %107, %cst_53 {dimension_numbers = #tpu.dot_dimension_numbers<[1], [0], [0], [1], [0, 0, 1, 1], [], []>} : vector<64x147xbf16>, vector<147x96xbf16>, vector<64x96xf32> -> vector<64x96xf32>
      %109 = vector.extract_strided_slice %108 {offsets = [0, 0], sizes = [64, 32], strides = [1, 1]} : vector<64x96xf32> to vector<64x32xf32>
      %cst_54 = arith.constant 0.0824786126 : f32
      %110 = vector.broadcast %cst_54 : f32 to vector<64x32xf32>
      %111 = arith.mulf %109, %110 : vector<64x32xf32>
      %112 = vector.extract_strided_slice %108 {offsets = [0, 32], sizes = [64, 32], strides = [1, 1]} : vector<64x96xf32> to vector<64x32xf32>
      %113 = vector.extract_strided_slice %108 {offsets = [0, 64], sizes = [64, 32], strides = [1, 1]} : vector<64x96xf32> to vector<64x32xf32>
      %114 = arith.truncf %111 : vector<64x32xf32> to vector<64x32xbf16>
      %c0_55 = arith.constant 0 : index
      %c0_56 = arith.constant 0 : index
      %115 = vector.load %arg15[%c0_55, %c0_56] : memref<64x32xbf16, #tpu.memory_space<vmem>>, vector<64x32xbf16>
      tpu.vector_store %arg15[%c0_55, %c0_56], %114 {strides = array<i32>} : memref<64x32xbf16, #tpu.memory_space<vmem>>, vector<64x32xbf16>,
      %116 = tpu.transpose %112, [1, 0] : vector<64x32xf32> -> vector<32x64xf32>
      %117 = arith.truncf %116 : vector<32x64xf32> to vector<32x64xbf16>
      %c0_57 = arith.constant 0 : index
      %c0_58 = arith.constant 0 : index
      %118 = vector.load %arg16[%c0_57, %c0_58] : memref<32x64xbf16, #tpu.memory_space<vmem>>, vector<32x64xbf16>
      tpu.vector_store %arg16[%c0_57, %c0_58], %117 {strides = array<i32>} : memref<32x64xbf16, #tpu.memory_space<vmem>>, vector<32x64xbf16>,
      %119 = arith.truncf %113 : vector<64x32xf32> to vector<64x32xbf16>
      %c0_59 = arith.constant 0 : index
      %c0_60 = arith.constant 0 : index
      %120 = vector.load %arg17[%c0_59, %c0_60] : memref<64x32xbf16, #tpu.memory_space<vmem>>, vector<64x32xbf16>
      tpu.vector_store %arg17[%c0_59, %c0_60], %119 {strides = array<i32>} : memref<64x32xbf16, #tpu.memory_space<vmem>>, vector<64x32xbf16>,
      %c0_61 = arith.constant 0 : index
      %c0_62 = arith.constant 0 : index
      %121 = vector.load %arg18[%c0_61, %c0_62] : memref<64x32xf32, #tpu.memory_space<vmem>>, vector<64x32xf32>
      tpu.vector_store %arg18[%c0_61, %c0_62], %113 {strides = array<i32>} : memref<64x32xf32, #tpu.memory_space<vmem>>, vector<64x32xf32>,
    } else {
    }
    %c64_i32 = arith.constant 64 : i32
    %3 = arith.muli %arg1, %c64_i32 : i32
    %4 = tpu.assume_multiple %3, 64 : i32
    %5 = arith.index_cast %4 : i32 to index
    %c0 = arith.constant 0 : index
    %6 = vector.load %arg15[%5, %c0] : memref<64x32xbf16, #tpu.memory_space<vmem>>, vector<64x32xbf16>
    %c0_1 = arith.constant 0 : index
    %c0_2 = arith.constant 0 : index
    %7 = vector.load %arg16[%c0_1, %c0_2] : memref<32x64xbf16, #tpu.memory_space<vmem>>, vector<32x64xbf16>
    %cst = arith.constant dense<0.000000e+00> : vector<64x64xf32>
    %8 = tpu.matmul %6, %7, %cst {dimension_numbers = #tpu.dot_dimension_numbers<[1], [0], [0], [1], [0, 0, 1, 1], [], []>} : vector<64x32xbf16>, vector<32x64xbf16>, vector<64x64xf32> -> vector<64x64xf32>
    %cst_3 = arith.constant dense<0xFF800000> : vector<64xf32>
    %9 = vector.multi_reduction <maximumf>, %8, %cst_3 [1] : vector<64x64xf32> to vector<64xf32>
    %10 = vector.shape_cast %9 : vector<64xf32> to vector<64x1xf32>
    %11 = vector.broadcast %10 : vector<64x1xf32> to vector<64x64xf32>
    %12 = arith.subf %8, %11 : vector<64x64xf32>
    %13 = math.exp %12 : vector<64x64xf32>
    %cst_4 = arith.constant dense<0.000000e+00> : vector<64xf32>
    %14 = vector.multi_reduction <add>, %13, %cst_4 [1] : vector<64x64xf32> to vector<64xf32>
    %15 = vector.shape_cast %14 : vector<64xf32> to vector<64x1xf32>
    %16 = arith.truncf %13 : vector<64x64xf32> to vector<64x64xbf16>
    %c0_5 = arith.constant 0 : index
    %c0_6 = arith.constant 0 : index
    %17 = vector.load %arg17[%c0_5, %c0_6] : memref<64x32xbf16, #tpu.memory_space<vmem>>, vector<64x32xbf16>
    %cst_7 = arith.constant dense<0.000000e+00> : vector<64x32xf32>
    %18 = tpu.matmul %16, %17, %cst_7 {dimension_numbers = #tpu.dot_dimension_numbers<[1], [0], [0], [1], [0, 0, 1, 1], [], []>} : vector<64x64xbf16>, vector<64x32xbf16>, vector<64x32xf32> -> vector<64x32xf32>
    %19 = tpu.reciprocal %15 : vector<64x1xf32> -> vector<64x1xf32>
    %20 = vector.broadcast %19 : vector<64x1xf32> to vector<64x32xf32>
    %21 = arith.mulf %18, %20 : vector<64x32xf32>
    %22 = arith.truncf %21 : vector<64x32xf32> to vector<64x32xbf16>
    %c0_8 = arith.constant 0 : index
    %c0_9 = arith.constant 0 : index
    %23 = vector.load %arg6[%c0_8, %c0_9] : memref<32x32xbf16, #tpu.memory_space<vmem>>, vector<32x32xbf16>
    %cst_10 = arith.constant dense<0.000000e+00> : vector<64x32xf32>
    %24 = tpu.matmul %22, %23, %cst_10 {dimension_numbers = #tpu.dot_dimension_numbers<[1], [0], [0], [1], [0, 0, 1, 1], [], []>} : vector<64x32xbf16>, vector<32x32xbf16>, vector<64x32xf32> -> vector<64x32xf32>
    %c0_11 = arith.constant 0 : index
    %c0_12 = arith.constant 0 : index
    %25 = vector.load %arg7[%c0_11, %c0_12] : memref<1x32xf32, #tpu.memory_space<vmem>>, vector<1x32xf32>
    %26 = vector.broadcast %25 : vector<1x32xf32> to vector<64x32xf32>
    %27 = arith.addf %24, %26 : vector<64x32xf32>
    %28 = arith.index_cast %4 : i32 to index
    %c0_13 = arith.constant 0 : index
    %29 = vector.load %arg18[%28, %c0_13] : memref<64x32xf32, #tpu.memory_space<vmem>>, vector<64x32xf32>
    %30 = arith.addf %29, %27 : vector<64x32xf32>
    %cst_14 = arith.constant dense<0.000000e+00> : vector<64xf32>
    %31 = vector.multi_reduction <add>, %30, %cst_14 [1] : vector<64x32xf32> to vector<64xf32>
    %32 = vector.shape_cast %31 : vector<64xf32> to vector<64x1xf32>
    %cst_15 = arith.constant 3.200000e+01 : f32
    %33 = vector.broadcast %cst_15 : f32 to vector<64x1xf32>
    %34 = arith.divf %32, %33 : vector<64x1xf32>
    %35 = vector.broadcast %34 : vector<64x1xf32> to vector<64x32xf32>
    %36 = arith.subf %30, %35 : vector<64x32xf32>
    %37 = arith.mulf %36, %36 : vector<64x32xf32>
    %cst_16 = arith.constant dense<0.000000e+00> : vector<64xf32>
    %38 = vector.multi_reduction <add>, %37, %cst_16 [1] : vector<64x32xf32> to vector<64xf32>
    %39 = vector.shape_cast %38 : vector<64xf32> to vector<64x1xf32>
    %cst_17 = arith.constant 3.200000e+01 : f32
    %40 = vector.broadcast %cst_17 : f32 to vector<64x1xf32>
    %41 = arith.divf %39, %40 : vector<64x1xf32>
    %42 = vector.broadcast %34 : vector<64x1xf32> to vector<64x32xf32>
    %43 = arith.subf %30, %42 : vector<64x32xf32>
    %cst_18 = arith.constant 9.99999974E-6 : f32
    %44 = vector.broadcast %cst_18 : f32 to vector<64x1xf32>
    %45 = arith.addf %41, %44 : vector<64x1xf32>
    %46 = math.rsqrt %45 : vector<64x1xf32>
    %47 = vector.broadcast %46 : vector<64x1xf32> to vector<64x32xf32>
    %48 = arith.mulf %43, %47 : vector<64x32xf32>
    %c0_19 = arith.constant 0 : index
    %c0_20 = arith.constant 0 : index
    %49 = vector.load %arg8[%c0_19, %c0_20] : memref<1x32xf32, #tpu.memory_space<vmem>>, vector<1x32xf32>
    %50 = vector.broadcast %49 : vector<1x32xf32> to vector<64x32xf32>
    %51 = arith.mulf %48, %50 : vector<64x32xf32>
    %c0_21 = arith.constant 0 : index
    %c0_22 = arith.constant 0 : index
    %52 = vector.load %arg9[%c0_21, %c0_22] : memref<1x32xf32, #tpu.memory_space<vmem>>, vector<1x32xf32>
    %53 = vector.broadcast %52 : vector<1x32xf32> to vector<64x32xf32>
    %54 = arith.addf %51, %53 : vector<64x32xf32>
    %55 = arith.truncf %54 : vector<64x32xf32> to vector<64x32xbf16>
    %c0_23 = arith.constant 0 : index
    %c0_24 = arith.constant 0 : index
    %56 = vector.load %arg10[%c0_23, %c0_24] : memref<32x32xbf16, #tpu.memory_space<vmem>>, vector<32x32xbf16>
    %cst_25 = arith.constant dense<0.000000e+00> : vector<64x32xf32>
    %57 = tpu.matmul %55, %56, %cst_25 {dimension_numbers = #tpu.dot_dimension_numbers<[1], [0], [0], [1], [0, 0, 1, 1], [], []>} : vector<64x32xbf16>, vector<32x32xbf16>, vector<64x32xf32> -> vector<64x32xf32>
    %c0_26 = arith.constant 0 : index
    %c0_27 = arith.constant 0 : index
    %58 = vector.load %arg11[%c0_26, %c0_27] : memref<1x32xf32, #tpu.memory_space<vmem>>, vector<1x32xf32>
    %59 = vector.broadcast %58 : vector<1x32xf32> to vector<64x32xf32>
    %60 = arith.addf %57, %59 : vector<64x32xf32>
    %cst_28 = arith.constant 5.000000e-01 : f32
    %61 = vector.broadcast %cst_28 : f32 to vector<64x32xf32>
    %62 = arith.mulf %61, %60 : vector<64x32xf32>
    %cst_29 = arith.constant 0.707106769 : f32
    %63 = vector.broadcast %cst_29 : f32 to vector<64x32xf32>
    %64 = arith.mulf %60, %63 : vector<64x32xf32>
    %65 = math.erf %64 : vector<64x32xf32>
    %cst_30 = arith.constant 1.000000e+00 : f32
    %66 = vector.broadcast %cst_30 : f32 to vector<64x32xf32>
    %67 = arith.addf %66, %65 : vector<64x32xf32>
    %68 = arith.mulf %62, %67 : vector<64x32xf32>
    %69 = arith.truncf %68 : vector<64x32xf32> to vector<64x32xbf16>
    %c0_31 = arith.constant 0 : index
    %c0_32 = arith.constant 0 : index
    %70 = vector.load %arg12[%c0_31, %c0_32] : memref<32x32xbf16, #tpu.memory_space<vmem>>, vector<32x32xbf16>
    %cst_33 = arith.constant dense<0.000000e+00> : vector<64x32xf32>
    %71 = tpu.matmul %69, %70, %cst_33 {dimension_numbers = #tpu.dot_dimension_numbers<[1], [0], [0], [1], [0, 0, 1, 1], [], []>} : vector<64x32xbf16>, vector<32x32xbf16>, vector<64x32xf32> -> vector<64x32xf32>
    %c0_34 = arith.constant 0 : index
    %c0_35 = arith.constant 0 : index
    %72 = vector.load %arg13[%c0_34, %c0_35] : memref<1x32xf32, #tpu.memory_space<vmem>>, vector<1x32xf32>
    %73 = vector.broadcast %72 : vector<1x32xf32> to vector<64x32xf32>
    %74 = arith.addf %71, %73 : vector<64x32xf32>
    %75 = arith.addf %30, %74 : vector<64x32xf32>
    %76 = arith.truncf %75 : vector<64x32xf32> to vector<64x32xbf16>
    %c0_36 = arith.constant 0 : index
    %c0_37 = arith.constant 0 : index
    %c0_38 = arith.constant 0 : index
    %77 = vector.load %arg14[%c0_36, %c0_37, %c0_38] : memref<1x64x32xbf16, #tpu.memory_space<vmem>>, vector<1x64x32xbf16>
    %78 = vector.shape_cast %77 : vector<1x64x32xbf16> to vector<64x32xbf16>
    %79 = vector.shape_cast %76 : vector<64x32xbf16> to vector<1x64x32xbf16>
    tpu.vector_store %arg14[%c0_36, %c0_37, %c0_38], %79 {strides = array<i32>} : memref<1x64x32xbf16, #tpu.memory_space<vmem>>, vector<1x64x32xbf16>,
    return
  }
  func.func @transform_0(%arg0: i32, %arg1: i32) -> (i32, i32, i32) {
    %c0_i32 = arith.constant 0 : i32
    %c0_i32_0 = arith.constant 0 : i32
    %c0_i32_1 = arith.constant 0 : i32
    return %arg0, %c0_i32, %c0_i32_0 : i32, i32, i32
  }
  func.func @transform_1(%arg0: i32, %arg1: i32) -> (i32, i32) {
    %c0_i32 = arith.constant 0 : i32
    %c0_i32_0 = arith.constant 0 : i32
    %c0_i32_1 = arith.constant 0 : i32
    return %c0_i32, %c0_i32_0 : i32, i32
  }
  func.func @transform_2(%arg0: i32, %arg1: i32) -> (i32, i32) {
    %c0_i32 = arith.constant 0 : i32
    %c0_i32_0 = arith.constant 0 : i32
    %c0_i32_1 = arith.constant 0 : i32
    return %c0_i32, %c0_i32_0 : i32, i32
  }
  func.func @transform_3(%arg0: i32, %arg1: i32) -> (i32, i32) {
    %c0_i32 = arith.constant 0 : i32
    %c0_i32_0 = arith.constant 0 : i32
    %c0_i32_1 = arith.constant 0 : i32
    return %c0_i32, %c0_i32_0 : i32, i32
  }
  func.func @transform_4(%arg0: i32, %arg1: i32) -> (i32, i32) {
    %c0_i32 = arith.constant 0 : i32
    %c0_i32_0 = arith.constant 0 : i32
    %c0_i32_1 = arith.constant 0 : i32
    return %c0_i32, %c0_i32_0 : i32, i32
  }
  func.func @transform_5(%arg0: i32, %arg1: i32) -> (i32, i32) {
    %c0_i32 = arith.constant 0 : i32
    %c0_i32_0 = arith.constant 0 : i32
    %c0_i32_1 = arith.constant 0 : i32
    return %c0_i32, %c0_i32_0 : i32, i32
  }
  func.func @transform_6(%arg0: i32, %arg1: i32) -> (i32, i32) {
    %c0_i32 = arith.constant 0 : i32
    %c0_i32_0 = arith.constant 0 : i32
    %c0_i32_1 = arith.constant 0 : i32
    return %c0_i32, %c0_i32_0 : i32, i32
  }
  func.func @transform_7(%arg0: i32, %arg1: i32) -> (i32, i32) {
    %c0_i32 = arith.constant 0 : i32
    %c0_i32_0 = arith.constant 0 : i32
    %c0_i32_1 = arith.constant 0 : i32
    return %c0_i32, %c0_i32_0 : i32, i32
  }
  func.func @transform_8(%arg0: i32, %arg1: i32) -> (i32, i32) {
    %c0_i32 = arith.constant 0 : i32
    %c0_i32_0 = arith.constant 0 : i32
    %c0_i32_1 = arith.constant 0 : i32
    return %c0_i32, %c0_i32_0 : i32, i32
  }
  func.func @transform_9(%arg0: i32, %arg1: i32) -> (i32, i32) {
    %c0_i32 = arith.constant 0 : i32
    %c0_i32_0 = arith.constant 0 : i32
    %c0_i32_1 = arith.constant 0 : i32
    return %c0_i32, %c0_i32_0 : i32, i32
  }
  func.func @transform_10(%arg0: i32, %arg1: i32) -> (i32, i32) {
    %c0_i32 = arith.constant 0 : i32
    %c0_i32_0 = arith.constant 0 : i32
    %c0_i32_1 = arith.constant 0 : i32
    return %c0_i32, %c0_i32_0 : i32, i32
  }
  func.func @transform_11(%arg0: i32, %arg1: i32) -> (i32, i32) {
    %c0_i32 = arith.constant 0 : i32
    %c0_i32_0 = arith.constant 0 : i32
    %c0_i32_1 = arith.constant 0 : i32
    return %c0_i32, %c0_i32_0 : i32, i32
  }
  func.func @transform_12(%arg0: i32, %arg1: i32) -> (i32, i32, i32) {
    %c0_i32 = arith.constant 0 : i32
    %c0_i32_0 = arith.constant 0 : i32
    return %arg0, %arg1, %c0_i32 : i32, i32, i32
  }
}

module attributes {stable_mosaic.version = 11 : i64} {
  func.func @fused_block_kernel(%arg0: i32, %arg1: i32, %arg2: memref<1x16x288xbf16, #tpu.memory_space<vmem>>, %arg3: memref<1x288xf32, #tpu.memory_space<vmem>>, %arg4: memref<1x288xf32, #tpu.memory_space<vmem>>, %arg5: memref<288x96xbf16, #tpu.memory_space<vmem>>, %arg6: memref<32x32xbf16, #tpu.memory_space<vmem>>, %arg7: memref<1x32xf32, #tpu.memory_space<vmem>>, %arg8: memref<1x32xf32, #tpu.memory_space<vmem>>, %arg9: memref<1x32xf32, #tpu.memory_space<vmem>>, %arg10: memref<32x32xbf16, #tpu.memory_space<vmem>>, %arg11: memref<1x32xf32, #tpu.memory_space<vmem>>, %arg12: memref<32x32xbf16, #tpu.memory_space<vmem>>, %arg13: memref<1x32xf32, #tpu.memory_space<vmem>>, %arg14: memref<1x16x32xbf16, #tpu.memory_space<vmem>>, %arg15: memref<16x32xbf16, #tpu.memory_space<vmem>>, %arg16: memref<32x16xbf16, #tpu.memory_space<vmem>>, %arg17: memref<16x32xbf16, #tpu.memory_space<vmem>>, %arg18: memref<16x32xf32, #tpu.memory_space<vmem>>) attributes {dimension_semantics = [#tpu.dimension_semantics<parallel>, #tpu.dimension_semantics<arbitrary>], iteration_bounds = array<i64: 2, 1>, scalar_prefetch = 0 : i64, scratch_operands = 4 : i64, tpu.core_type = #tpu.core_type<tc>, window_params = [{transform_indices = @transform_0, window_bounds = array<i64: 1, 16, 288>}, {pipeline_mode = #tpu.pipeline_mode<synchronous>, transform_indices = @transform_1, window_bounds = array<i64: 1, 288>}, {pipeline_mode = #tpu.pipeline_mode<synchronous>, transform_indices = @transform_2, window_bounds = array<i64: 1, 288>}, {pipeline_mode = #tpu.pipeline_mode<synchronous>, transform_indices = @transform_3, window_bounds = array<i64: 288, 96>}, {pipeline_mode = #tpu.pipeline_mode<synchronous>, transform_indices = @transform_4, window_bounds = array<i64: 32, 32>}, {pipeline_mode = #tpu.pipeline_mode<synchronous>, transform_indices = @transform_5, window_bounds = array<i64: 1, 32>}, {pipeline_mode = #tpu.pipeline_mode<synchronous>, transform_indices = @transform_6, window_bounds = array<i64: 1, 32>}, {pipeline_mode = #tpu.pipeline_mode<synchronous>, transform_indices = @transform_7, window_bounds = array<i64: 1, 32>}, {pipeline_mode = #tpu.pipeline_mode<synchronous>, transform_indices = @transform_8, window_bounds = array<i64: 32, 32>}, {pipeline_mode = #tpu.pipeline_mode<synchronous>, transform_indices = @transform_9, window_bounds = array<i64: 1, 32>}, {pipeline_mode = #tpu.pipeline_mode<synchronous>, transform_indices = @transform_10, window_bounds = array<i64: 32, 32>}, {pipeline_mode = #tpu.pipeline_mode<synchronous>, transform_indices = @transform_11, window_bounds = array<i64: 1, 32>}, {transform_indices = @transform_12, window_bounds = array<i64: 1, 16, 32>}]} {
    %c0_i32 = arith.constant 0 : i32
    %0 = arith.cmpi eq, %arg1, %c0_i32 : i32
    %1 = arith.extui %0 : i1 to i32
    %c0_i32_0 = arith.constant 0 : i32
    %2 = arith.cmpi ne, %1, %c0_i32_0 : i32
    scf.if %2 {
      %c0_39 = arith.constant 0 : index
      %c0_40 = arith.constant 0 : index
      %c0_41 = arith.constant 0 : index
      %80 = vector.load %arg2[%c0_39, %c0_40, %c0_41] : memref<1x16x288xbf16, #tpu.memory_space<vmem>>, vector<1x16x288xbf16>
      %81 = vector.shape_cast %80 : vector<1x16x288xbf16> to vector<16x288xbf16>
      %82 = arith.extf %81 : vector<16x288xbf16> to vector<16x288xf32>
      %cst_42 = arith.constant dense<0.000000e+00> : vector<16xf32>
      %83 = vector.multi_reduction <add>, %82, %cst_42 [1] : vector<16x288xf32> to vector<16xf32>
      %84 = vector.shape_cast %83 : vector<16xf32> to vector<16x1xf32>
      %cst_43 = arith.constant 2.880000e+02 : f32
      %85 = vector.broadcast %cst_43 : f32 to vector<16x1xf32>
      %86 = arith.divf %84, %85 : vector<16x1xf32>
      %87 = vector.broadcast %86 : vector<16x1xf32> to vector<16x288xf32>
      %88 = arith.subf %82, %87 : vector<16x288xf32>
      %89 = arith.mulf %88, %88 : vector<16x288xf32>
      %cst_44 = arith.constant dense<0.000000e+00> : vector<16xf32>
      %90 = vector.multi_reduction <add>, %89, %cst_44 [1] : vector<16x288xf32> to vector<16xf32>
      %91 = vector.shape_cast %90 : vector<16xf32> to vector<16x1xf32>
      %cst_45 = arith.constant 2.880000e+02 : f32
      %92 = vector.broadcast %cst_45 : f32 to vector<16x1xf32>
      %93 = arith.divf %91, %92 : vector<16x1xf32>
      %94 = vector.broadcast %86 : vector<16x1xf32> to vector<16x288xf32>
      %95 = arith.subf %82, %94 : vector<16x288xf32>
      %cst_46 = arith.constant 9.99999974E-6 : f32
      %96 = vector.broadcast %cst_46 : f32 to vector<16x1xf32>
      %97 = arith.addf %93, %96 : vector<16x1xf32>
      %98 = math.rsqrt %97 : vector<16x1xf32>
      %99 = vector.broadcast %98 : vector<16x1xf32> to vector<16x288xf32>
      %100 = arith.mulf %95, %99 : vector<16x288xf32>
      %c0_47 = arith.constant 0 : index
      %c0_48 = arith.constant 0 : index
      %101 = vector.load %arg3[%c0_47, %c0_48] : memref<1x288xf32, #tpu.memory_space<vmem>>, vector<1x288xf32>
      %102 = vector.broadcast %101 : vector<1x288xf32> to vector<16x288xf32>
      %103 = arith.mulf %100, %102 : vector<16x288xf32>
      %c0_49 = arith.constant 0 : index
      %c0_50 = arith.constant 0 : index
      %104 = vector.load %arg4[%c0_49, %c0_50] : memref<1x288xf32, #tpu.memory_space<vmem>>, vector<1x288xf32>
      %105 = vector.broadcast %104 : vector<1x288xf32> to vector<16x288xf32>
      %106 = arith.addf %103, %105 : vector<16x288xf32>
      %107 = arith.truncf %106 : vector<16x288xf32> to vector<16x288xbf16>
      %c0_51 = arith.constant 0 : index
      %c0_52 = arith.constant 0 : index
      %108 = vector.load %arg5[%c0_51, %c0_52] : memref<288x96xbf16, #tpu.memory_space<vmem>>, vector<288x96xbf16>
      %cst_53 = arith.constant dense<0.000000e+00> : vector<16x96xf32>
      %109 = tpu.matmul %107, %108, %cst_53 {dimension_numbers = #tpu.dot_dimension_numbers<[1], [0], [0], [1], [0, 0, 1, 1], [], []>} : vector<16x288xbf16>, vector<288x96xbf16>, vector<16x96xf32> -> vector<16x96xf32>
      %110 = vector.extract_strided_slice %109 {offsets = [0, 0], sizes = [16, 32], strides = [1, 1]} : vector<16x96xf32> to vector<16x32xf32>
      %cst_54 = arith.constant 0.0589255653 : f32
      %111 = vector.broadcast %cst_54 : f32 to vector<16x32xf32>
      %112 = arith.mulf %110, %111 : vector<16x32xf32>
      %113 = vector.extract_strided_slice %109 {offsets = [0, 32], sizes = [16, 32], strides = [1, 1]} : vector<16x96xf32> to vector<16x32xf32>
      %114 = vector.extract_strided_slice %109 {offsets = [0, 64], sizes = [16, 32], strides = [1, 1]} : vector<16x96xf32> to vector<16x32xf32>
      %115 = arith.truncf %112 : vector<16x32xf32> to vector<16x32xbf16>
      %c0_55 = arith.constant 0 : index
      %c0_56 = arith.constant 0 : index
      %116 = vector.load %arg15[%c0_55, %c0_56] : memref<16x32xbf16, #tpu.memory_space<vmem>>, vector<16x32xbf16>
      tpu.vector_store %arg15[%c0_55, %c0_56], %115 {strides = array<i32>} : memref<16x32xbf16, #tpu.memory_space<vmem>>, vector<16x32xbf16>,
      %117 = tpu.transpose %113, [1, 0] : vector<16x32xf32> -> vector<32x16xf32>
      %118 = arith.truncf %117 : vector<32x16xf32> to vector<32x16xbf16>
      %c0_57 = arith.constant 0 : index
      %c0_58 = arith.constant 0 : index
      %119 = vector.load %arg16[%c0_57, %c0_58] : memref<32x16xbf16, #tpu.memory_space<vmem>>, vector<32x16xbf16>
      tpu.vector_store %arg16[%c0_57, %c0_58], %118 {strides = array<i32>} : memref<32x16xbf16, #tpu.memory_space<vmem>>, vector<32x16xbf16>,
      %120 = arith.truncf %114 : vector<16x32xf32> to vector<16x32xbf16>
      %c0_59 = arith.constant 0 : index
      %c0_60 = arith.constant 0 : index
      %121 = vector.load %arg17[%c0_59, %c0_60] : memref<16x32xbf16, #tpu.memory_space<vmem>>, vector<16x32xbf16>
      tpu.vector_store %arg17[%c0_59, %c0_60], %120 {strides = array<i32>} : memref<16x32xbf16, #tpu.memory_space<vmem>>, vector<16x32xbf16>,
      %c0_61 = arith.constant 0 : index
      %c0_62 = arith.constant 0 : index
      %122 = vector.load %arg18[%c0_61, %c0_62] : memref<16x32xf32, #tpu.memory_space<vmem>>, vector<16x32xf32>
      tpu.vector_store %arg18[%c0_61, %c0_62], %114 {strides = array<i32>} : memref<16x32xf32, #tpu.memory_space<vmem>>, vector<16x32xf32>,
    } else {
    }
    %c16_i32 = arith.constant 16 : i32
    %3 = arith.muli %arg1, %c16_i32 : i32
    %4 = tpu.assume_multiple %3, 16 : i32
    %5 = arith.index_cast %4 : i32 to index
    %c0 = arith.constant 0 : index
    %6 = vector.load %arg15[%5, %c0] : memref<16x32xbf16, #tpu.memory_space<vmem>>, vector<16x32xbf16>
    %c0_1 = arith.constant 0 : index
    %c0_2 = arith.constant 0 : index
    %7 = vector.load %arg16[%c0_1, %c0_2] : memref<32x16xbf16, #tpu.memory_space<vmem>>, vector<32x16xbf16>
    %cst = arith.constant dense<0.000000e+00> : vector<16x16xf32>
    %8 = tpu.matmul %6, %7, %cst {dimension_numbers = #tpu.dot_dimension_numbers<[1], [0], [0], [1], [0, 0, 1, 1], [], []>} : vector<16x32xbf16>, vector<32x16xbf16>, vector<16x16xf32> -> vector<16x16xf32>
    %cst_3 = arith.constant dense<0xFF800000> : vector<16xf32>
    %9 = vector.multi_reduction <maximumf>, %8, %cst_3 [1] : vector<16x16xf32> to vector<16xf32>
    %10 = vector.shape_cast %9 : vector<16xf32> to vector<16x1xf32>
    %11 = vector.broadcast %10 : vector<16x1xf32> to vector<16x16xf32>
    %12 = arith.subf %8, %11 : vector<16x16xf32>
    %13 = math.exp %12 : vector<16x16xf32>
    %cst_4 = arith.constant dense<0.000000e+00> : vector<16xf32>
    %14 = vector.multi_reduction <add>, %13, %cst_4 [1] : vector<16x16xf32> to vector<16xf32>
    %15 = vector.shape_cast %14 : vector<16xf32> to vector<16x1xf32>
    %16 = arith.truncf %13 : vector<16x16xf32> to vector<16x16xbf16>
    %c0_5 = arith.constant 0 : index
    %c0_6 = arith.constant 0 : index
    %17 = vector.load %arg17[%c0_5, %c0_6] : memref<16x32xbf16, #tpu.memory_space<vmem>>, vector<16x32xbf16>
    %cst_7 = arith.constant dense<0.000000e+00> : vector<16x32xf32>
    %18 = tpu.matmul %16, %17, %cst_7 {dimension_numbers = #tpu.dot_dimension_numbers<[1], [0], [0], [1], [0, 0, 1, 1], [], []>} : vector<16x16xbf16>, vector<16x32xbf16>, vector<16x32xf32> -> vector<16x32xf32>
    %19 = tpu.reciprocal %15 : vector<16x1xf32> -> vector<16x1xf32>
    %20 = vector.broadcast %19 : vector<16x1xf32> to vector<16x32xf32>
    %21 = arith.mulf %18, %20 : vector<16x32xf32>
    %22 = arith.truncf %21 : vector<16x32xf32> to vector<16x32xbf16>
    %c0_8 = arith.constant 0 : index
    %c0_9 = arith.constant 0 : index
    %23 = vector.load %arg6[%c0_8, %c0_9] : memref<32x32xbf16, #tpu.memory_space<vmem>>, vector<32x32xbf16>
    %cst_10 = arith.constant dense<0.000000e+00> : vector<16x32xf32>
    %24 = tpu.matmul %22, %23, %cst_10 {dimension_numbers = #tpu.dot_dimension_numbers<[1], [0], [0], [1], [0, 0, 1, 1], [], []>} : vector<16x32xbf16>, vector<32x32xbf16>, vector<16x32xf32> -> vector<16x32xf32>
    %c0_11 = arith.constant 0 : index
    %c0_12 = arith.constant 0 : index
    %25 = vector.load %arg7[%c0_11, %c0_12] : memref<1x32xf32, #tpu.memory_space<vmem>>, vector<1x32xf32>
    %26 = vector.broadcast %25 : vector<1x32xf32> to vector<16x32xf32>
    %27 = arith.addf %24, %26 : vector<16x32xf32>
    %28 = arith.index_cast %4 : i32 to index
    %c0_13 = arith.constant 0 : index
    %29 = vector.load %arg18[%28, %c0_13] : memref<16x32xf32, #tpu.memory_space<vmem>>, vector<16x32xf32>
    %30 = arith.addf %29, %27 : vector<16x32xf32>
    %cst_14 = arith.constant dense<0.000000e+00> : vector<16xf32>
    %31 = vector.multi_reduction <add>, %30, %cst_14 [1] : vector<16x32xf32> to vector<16xf32>
    %32 = vector.shape_cast %31 : vector<16xf32> to vector<16x1xf32>
    %cst_15 = arith.constant 3.200000e+01 : f32
    %33 = vector.broadcast %cst_15 : f32 to vector<16x1xf32>
    %34 = arith.divf %32, %33 : vector<16x1xf32>
    %35 = vector.broadcast %34 : vector<16x1xf32> to vector<16x32xf32>
    %36 = arith.subf %30, %35 : vector<16x32xf32>
    %37 = arith.mulf %36, %36 : vector<16x32xf32>
    %cst_16 = arith.constant dense<0.000000e+00> : vector<16xf32>
    %38 = vector.multi_reduction <add>, %37, %cst_16 [1] : vector<16x32xf32> to vector<16xf32>
    %39 = vector.shape_cast %38 : vector<16xf32> to vector<16x1xf32>
    %cst_17 = arith.constant 3.200000e+01 : f32
    %40 = vector.broadcast %cst_17 : f32 to vector<16x1xf32>
    %41 = arith.divf %39, %40 : vector<16x1xf32>
    %42 = vector.broadcast %34 : vector<16x1xf32> to vector<16x32xf32>
    %43 = arith.subf %30, %42 : vector<16x32xf32>
    %cst_18 = arith.constant 9.99999974E-6 : f32
    %44 = vector.broadcast %cst_18 : f32 to vector<16x1xf32>
    %45 = arith.addf %41, %44 : vector<16x1xf32>
    %46 = math.rsqrt %45 : vector<16x1xf32>
    %47 = vector.broadcast %46 : vector<16x1xf32> to vector<16x32xf32>
    %48 = arith.mulf %43, %47 : vector<16x32xf32>
    %c0_19 = arith.constant 0 : index
    %c0_20 = arith.constant 0 : index
    %49 = vector.load %arg8[%c0_19, %c0_20] : memref<1x32xf32, #tpu.memory_space<vmem>>, vector<1x32xf32>
    %50 = vector.broadcast %49 : vector<1x32xf32> to vector<16x32xf32>
    %51 = arith.mulf %48, %50 : vector<16x32xf32>
    %c0_21 = arith.constant 0 : index
    %c0_22 = arith.constant 0 : index
    %52 = vector.load %arg9[%c0_21, %c0_22] : memref<1x32xf32, #tpu.memory_space<vmem>>, vector<1x32xf32>
    %53 = vector.broadcast %52 : vector<1x32xf32> to vector<16x32xf32>
    %54 = arith.addf %51, %53 : vector<16x32xf32>
    %55 = arith.truncf %54 : vector<16x32xf32> to vector<16x32xbf16>
    %c0_23 = arith.constant 0 : index
    %c0_24 = arith.constant 0 : index
    %56 = vector.load %arg10[%c0_23, %c0_24] : memref<32x32xbf16, #tpu.memory_space<vmem>>, vector<32x32xbf16>
    %cst_25 = arith.constant dense<0.000000e+00> : vector<16x32xf32>
    %57 = tpu.matmul %55, %56, %cst_25 {dimension_numbers = #tpu.dot_dimension_numbers<[1], [0], [0], [1], [0, 0, 1, 1], [], []>} : vector<16x32xbf16>, vector<32x32xbf16>, vector<16x32xf32> -> vector<16x32xf32>
    %c0_26 = arith.constant 0 : index
    %c0_27 = arith.constant 0 : index
    %58 = vector.load %arg11[%c0_26, %c0_27] : memref<1x32xf32, #tpu.memory_space<vmem>>, vector<1x32xf32>
    %59 = vector.broadcast %58 : vector<1x32xf32> to vector<16x32xf32>
    %60 = arith.addf %57, %59 : vector<16x32xf32>
    %cst_28 = arith.constant 5.000000e-01 : f32
    %61 = vector.broadcast %cst_28 : f32 to vector<16x32xf32>
    %62 = arith.mulf %61, %60 : vector<16x32xf32>
    %cst_29 = arith.constant 0.707106769 : f32
    %63 = vector.broadcast %cst_29 : f32 to vector<16x32xf32>
    %64 = arith.mulf %60, %63 : vector<16x32xf32>
    %65 = math.erf %64 : vector<16x32xf32>
    %cst_30 = arith.constant 1.000000e+00 : f32
    %66 = vector.broadcast %cst_30 : f32 to vector<16x32xf32>
    %67 = arith.addf %66, %65 : vector<16x32xf32>
    %68 = arith.mulf %62, %67 : vector<16x32xf32>
    %69 = arith.truncf %68 : vector<16x32xf32> to vector<16x32xbf16>
    %c0_31 = arith.constant 0 : index
    %c0_32 = arith.constant 0 : index
    %70 = vector.load %arg12[%c0_31, %c0_32] : memref<32x32xbf16, #tpu.memory_space<vmem>>, vector<32x32xbf16>
    %cst_33 = arith.constant dense<0.000000e+00> : vector<16x32xf32>
    %71 = tpu.matmul %69, %70, %cst_33 {dimension_numbers = #tpu.dot_dimension_numbers<[1], [0], [0], [1], [0, 0, 1, 1], [], []>} : vector<16x32xbf16>, vector<32x32xbf16>, vector<16x32xf32> -> vector<16x32xf32>
    %c0_34 = arith.constant 0 : index
    %c0_35 = arith.constant 0 : index
    %72 = vector.load %arg13[%c0_34, %c0_35] : memref<1x32xf32, #tpu.memory_space<vmem>>, vector<1x32xf32>
    %73 = vector.broadcast %72 : vector<1x32xf32> to vector<16x32xf32>
    %74 = arith.addf %71, %73 : vector<16x32xf32>
    %75 = arith.addf %30, %74 : vector<16x32xf32>
    %76 = arith.truncf %75 : vector<16x32xf32> to vector<16x32xbf16>
    %c0_36 = arith.constant 0 : index
    %c0_37 = arith.constant 0 : index
    %c0_38 = arith.constant 0 : index
    %77 = vector.load %arg14[%c0_36, %c0_37, %c0_38] : memref<1x16x32xbf16, #tpu.memory_space<vmem>>, vector<1x16x32xbf16>
    %78 = vector.shape_cast %77 : vector<1x16x32xbf16> to vector<16x32xbf16>
    %79 = vector.shape_cast %76 : vector<16x32xbf16> to vector<1x16x32xbf16>
    tpu.vector_store %arg14[%c0_36, %c0_37, %c0_38], %79 {strides = array<i32>} : memref<1x16x32xbf16, #tpu.memory_space<vmem>>, vector<1x16x32xbf16>,
    return
  }
  func.func @transform_0(%arg0: i32, %arg1: i32) -> (i32, i32, i32) {
    %c0_i32 = arith.constant 0 : i32
    %c0_i32_0 = arith.constant 0 : i32
    %c0_i32_1 = arith.constant 0 : i32
    return %arg0, %c0_i32, %c0_i32_0 : i32, i32, i32
  }
  func.func @transform_1(%arg0: i32, %arg1: i32) -> (i32, i32) {
    %c0_i32 = arith.constant 0 : i32
    %c0_i32_0 = arith.constant 0 : i32
    %c0_i32_1 = arith.constant 0 : i32
    return %c0_i32, %c0_i32_0 : i32, i32
  }
  func.func @transform_2(%arg0: i32, %arg1: i32) -> (i32, i32) {
    %c0_i32 = arith.constant 0 : i32
    %c0_i32_0 = arith.constant 0 : i32
    %c0_i32_1 = arith.constant 0 : i32
    return %c0_i32, %c0_i32_0 : i32, i32
  }
  func.func @transform_3(%arg0: i32, %arg1: i32) -> (i32, i32) {
    %c0_i32 = arith.constant 0 : i32
    %c0_i32_0 = arith.constant 0 : i32
    %c0_i32_1 = arith.constant 0 : i32
    return %c0_i32, %c0_i32_0 : i32, i32
  }
  func.func @transform_4(%arg0: i32, %arg1: i32) -> (i32, i32) {
    %c0_i32 = arith.constant 0 : i32
    %c0_i32_0 = arith.constant 0 : i32
    %c0_i32_1 = arith.constant 0 : i32
    return %c0_i32, %c0_i32_0 : i32, i32
  }
  func.func @transform_5(%arg0: i32, %arg1: i32) -> (i32, i32) {
    %c0_i32 = arith.constant 0 : i32
    %c0_i32_0 = arith.constant 0 : i32
    %c0_i32_1 = arith.constant 0 : i32
    return %c0_i32, %c0_i32_0 : i32, i32
  }
  func.func @transform_6(%arg0: i32, %arg1: i32) -> (i32, i32) {
    %c0_i32 = arith.constant 0 : i32
    %c0_i32_0 = arith.constant 0 : i32
    %c0_i32_1 = arith.constant 0 : i32
    return %c0_i32, %c0_i32_0 : i32, i32
  }
  func.func @transform_7(%arg0: i32, %arg1: i32) -> (i32, i32) {
    %c0_i32 = arith.constant 0 : i32
    %c0_i32_0 = arith.constant 0 : i32
    %c0_i32_1 = arith.constant 0 : i32
    return %c0_i32, %c0_i32_0 : i32, i32
  }
  func.func @transform_8(%arg0: i32, %arg1: i32) -> (i32, i32) {
    %c0_i32 = arith.constant 0 : i32
    %c0_i32_0 = arith.constant 0 : i32
    %c0_i32_1 = arith.constant 0 : i32
    return %c0_i32, %c0_i32_0 : i32, i32
  }
  func.func @transform_9(%arg0: i32, %arg1: i32) -> (i32, i32) {
    %c0_i32 = arith.constant 0 : i32
    %c0_i32_0 = arith.constant 0 : i32
    %c0_i32_1 = arith.constant 0 : i32
    return %c0_i32, %c0_i32_0 : i32, i32
  }
  func.func @transform_10(%arg0: i32, %arg1: i32) -> (i32, i32) {
    %c0_i32 = arith.constant 0 : i32
    %c0_i32_0 = arith.constant 0 : i32
    %c0_i32_1 = arith.constant 0 : i32
    return %c0_i32, %c0_i32_0 : i32, i32
  }
  func.func @transform_11(%arg0: i32, %arg1: i32) -> (i32, i32) {
    %c0_i32 = arith.constant 0 : i32
    %c0_i32_0 = arith.constant 0 : i32
    %c0_i32_1 = arith.constant 0 : i32
    return %c0_i32, %c0_i32_0 : i32, i32
  }
  func.func @transform_12(%arg0: i32, %arg1: i32) -> (i32, i32, i32) {
    %c0_i32 = arith.constant 0 : i32
    %c0_i32_0 = arith.constant 0 : i32
    return %arg0, %arg1, %c0_i32 : i32, i32, i32
  }
}

module attributes {stable_mosaic.version = 11 : i64} {
  func.func @linear_kernel(%arg0: i32, %arg1: memref<8x288xbf16, #tpu.memory_space<vmem>>, %arg2: memref<288x64xbf16, #tpu.memory_space<vmem>>, %arg3: memref<1x64xf32, #tpu.memory_space<vmem>>, %arg4: memref<8x64xf32, #tpu.memory_space<vmem>>) attributes {dimension_semantics = [#tpu.dimension_semantics<parallel>], iteration_bounds = array<i64: 1>, scalar_prefetch = 0 : i64, scratch_operands = 0 : i64, tpu.core_type = #tpu.core_type<tc>, window_params = [{transform_indices = @transform_0, window_bounds = array<i64: 8, 288>}, {pipeline_mode = #tpu.pipeline_mode<synchronous>, transform_indices = @transform_1, window_bounds = array<i64: 288, 64>}, {pipeline_mode = #tpu.pipeline_mode<synchronous>, transform_indices = @transform_2, window_bounds = array<i64: 1, 64>}, {transform_indices = @transform_3, window_bounds = array<i64: 8, 64>}]} {
    %c0 = arith.constant 0 : index
    %c0_0 = arith.constant 0 : index
    %0 = vector.load %arg1[%c0, %c0_0] : memref<8x288xbf16, #tpu.memory_space<vmem>>, vector<8x288xbf16>
    %c0_1 = arith.constant 0 : index
    %c0_2 = arith.constant 0 : index
    %1 = vector.load %arg2[%c0_1, %c0_2] : memref<288x64xbf16, #tpu.memory_space<vmem>>, vector<288x64xbf16>
    %cst = arith.constant dense<0.000000e+00> : vector<8x64xf32>
    %2 = tpu.matmul %0, %1, %cst {dimension_numbers = #tpu.dot_dimension_numbers<[1], [0], [0], [1], [0, 0, 1, 1], [], []>} : vector<8x288xbf16>, vector<288x64xbf16>, vector<8x64xf32> -> vector<8x64xf32>
    %c0_3 = arith.constant 0 : index
    %c0_4 = arith.constant 0 : index
    %3 = vector.load %arg3[%c0_3, %c0_4] : memref<1x64xf32, #tpu.memory_space<vmem>>, vector<1x64xf32>
    %4 = vector.broadcast %3 : vector<1x64xf32> to vector<8x64xf32>
    %5 = arith.addf %2, %4 : vector<8x64xf32>
    %c0_5 = arith.constant 0 : index
    %c0_6 = arith.constant 0 : index
    %6 = vector.load %arg4[%c0_5, %c0_6] : memref<8x64xf32, #tpu.memory_space<vmem>>, vector<8x64xf32>
    tpu.vector_store %arg4[%c0_5, %c0_6], %5 {strides = array<i32>} : memref<8x64xf32, #tpu.memory_space<vmem>>, vector<8x64xf32>,
    return
  }
  func.func @transform_0(%arg0: i32) -> (i32, i32) {
    %c0_i32 = arith.constant 0 : i32
    %c0_i32_0 = arith.constant 0 : i32
    return %arg0, %c0_i32 : i32, i32
  }
  func.func @transform_1(%arg0: i32) -> (i32, i32) {
    %c0_i32 = arith.constant 0 : i32
    %c0_i32_0 = arith.constant 0 : i32
    %c0_i32_1 = arith.constant 0 : i32
    return %c0_i32, %c0_i32_0 : i32, i32
  }
  func.func @transform_2(%arg0: i32) -> (i32, i32) {
    %c0_i32 = arith.constant 0 : i32
    %c0_i32_0 = arith.constant 0 : i32
    %c0_i32_1 = arith.constant 0 : i32
    return %c0_i32, %c0_i32_0 : i32, i32
  }
  func.func @transform_3(%arg0: i32) -> (i32, i32) {
    %c0_i32 = arith.constant 0 : i32
    %c0_i32_0 = arith.constant 0 : i32
    return %arg0, %c0_i32 : i32, i32
  }
}

</mosaic_0001>

<llo_original>
// kernel: t2t_forward.3
$region0: #{t2t_forward.3}
  #allocation0 [shape = 'u32[]', space=smem, size = 0x4, offset = 0x4, fixed_abs, tag = 'smem constant byte address 0x4 - core index']
  #allocation1 [shape = 'u32[144,128]{1,0:T(1,128)}', space=vmem, size = 0x12000, scoped, tag = 'internal scratch']
  #allocation2 [shape = 'bf16[64,32]{1,0:T(16,128)(2,1)}', space=vmem, size = 0x4000, scoped, tag = 'scratch operand']
  #allocation3 [shape = 'bf16[32,64]{1,0:T(16,128)(2,1)}', space=vmem, size = 0x2000, scoped, tag = 'scratch operand']
  #allocation4 [shape = 'bf16[64,32]{1,0:T(16,128)(2,1)}', space=vmem, size = 0x4000, scoped, tag = 'scratch operand']
  #allocation5 [shape = 'f32[64,32]{1,0:T(8,128)}', space=vmem, size = 0x8000, scoped, tag = 'scratch operand']
  %s0 = inlined_call_operand.vmem [shape: f32[2,64,147], index: 0, kind: input, shape index: {}]
  %s1 = inlined_call_operand.vmem [shape: f32[1,147], index: 1, kind: input, shape index: {}]
  %s2 = inlined_call_operand.vmem [shape: f32[1,147], index: 2, kind: input, shape index: {}]
  %s3 = inlined_call_operand.vmem [shape: bf16[147,96], index: 3, kind: input, shape index: {}]
  %s4 = inlined_call_operand.vmem [shape: bf16[32,32], index: 4, kind: input, shape index: {}]
  %s5 = inlined_call_operand.vmem [shape: f32[1,32], index: 5, kind: input, shape index: {}]
  %s6 = inlined_call_operand.vmem [shape: f32[1,32], index: 6, kind: input, shape index: {}]
  %s7 = inlined_call_operand.vmem [shape: f32[1,32], index: 7, kind: input, shape index: {}]
  %s8 = inlined_call_operand.vmem [shape: bf16[32,32], index: 8, kind: input, shape index: {}]
  %s9 = inlined_call_operand.vmem [shape: f32[1,32], index: 9, kind: input, shape index: {}]
  %s10 = inlined_call_operand.vmem [shape: bf16[32,32], index: 10, kind: input, shape index: {}]
  %s11 = inlined_call_operand.vmem [shape: f32[1,32], index: 11, kind: input, shape index: {}]
  %s12 = inlined_call_operand.vmem [shape: bf16[2,64,32], index: 12, kind: output, shape index: {}]
  %s13 = sld [smem:[#allocation0]]
  $region85: #{t2t_forward.3} parent=0
    _
  %s15 = ssub.s32 1, %s13
  %s16 = scalar_select 0, %s15, %s13
  loop: start=0, step=1, limit=4
  $region2: #{t2t_forward.3} parent=0 // loop_pre_header
    _
  $region3: #{t2t_forward.3} parent=0 // loop_header
    %s18 = sphi 0, %s22
    %p19 = scmp.ge.s32.totalorder %s18, 4
    %s25 = sphi 0, %s37
    %s26 = sphi 0, %s33
    %s27 = sphi 0, %s25
    %s28 = sphi 0, %s26
    %s29 = sphi 0, %s27
    %s30 = sphi 0, %s28
    %s40 = sphi 0, %s42
    %s43 = sphi 0, %s40
    %s44 = sphi 0, %s43
    %s60 = sphi 0, %s44
    %s64 = sphi 0, %s64
    %s66 = sphi 0, %s64
    %s67 = sphi 0, %s66
    %s81 = sphi 0, %s67
    %s85 = sphi 0, %s85
    %s87 = sphi 0, %s85
    %s88 = sphi 0, %s87
    %s102 = sphi 0, %s88
    %s106 = sphi 0, %s106
    %s108 = sphi 0, %s106
    %s109 = sphi 0, %s108
    %s123 = sphi 0, %s109
    %s127 = sphi 0, %s127
    %s129 = sphi 0, %s127
    %s130 = sphi 0, %s129
    %s144 = sphi 0, %s130
    %s148 = sphi 0, %s148
    %s150 = sphi 0, %s148
    %s151 = sphi 0, %s150
    %s165 = sphi 0, %s151
    %s169 = sphi 0, %s169
    %s171 = sphi 0, %s169
    %s172 = sphi 0, %s171
    %s186 = sphi 0, %s172
    %s190 = sphi 0, %s190
    %s192 = sphi 0, %s190
    %s193 = sphi 0, %s192
    %s207 = sphi 0, %s193
    %s211 = sphi 0, %s211
    %s213 = sphi 0, %s211
    %s214 = sphi 0, %s213
    %s228 = sphi 0, %s214
    %s232 = sphi 0, %s232
    %s234 = sphi 0, %s232
    %s235 = sphi 0, %s234
    %s249 = sphi 0, %s235
    %s253 = sphi 0, %s253
    %s255 = sphi 0, %s253
    %s256 = sphi 0, %s255
    %s270 = sphi 0, %s256
    %s274 = sphi 0, %s274
    %s276 = sphi 0, %s274
    %s277 = sphi 0, %s276
    %s291 = sphi 0, %s277
    %s299 = sphi 0, %s301
    %s302 = sphi 0, %s299
    %s303 = sphi 0, %s302
    %s319 = sphi 0, %s303
  $region4: #{t2t_forward.3} parent=0 // loop_header_branch
    %21 = sbr.rel (%p19) target = $region8
  $region5: #{t2t_forward.3} parent=0 // loop_body
    %s23 = ssub.s32 %s18, 1
    %s24 = ssub.s32 %s18, 2
    %s31 = sadd.s32 1, %s26
    %p32 = scmp.ge.s32.totalorder %s31, 1
    %s33 = scalar_select %p32, 0, %s31
    %s34 = sadd.s32 1, %s25
    %s35 = scalar_select %p32, %s34, %s25
    %p36 = scmp.ge.s32.totalorder %s35, 2
    %s37 = scalar_select %p36, 0, %s35
    %s38 = ssub.s32 %s25, %s37
    %p39 = scmp.eq.s32.totalorder %s38, 0
    %s41 = sadd.s32 %s40, 1
    %s42 = scalar_select %p39, %s40, %s41
    %p45 = pneg %p39
    %p46 = scmp.eq.s32.totalorder %s18, 1
    %p47 = por %p45, %p46
    %p48 = scmp.ne.s32.totalorder %s40, %s43
    %p49 = scmp.eq.s32.totalorder %s18, 0
    %p50 = por %p48, %p49
    %p51 = scmp.ne.s32.totalorder %s40, %s43
    %p52 = scmp.eq.s32.totalorder %s23, 1
    %p53 = por %p51, %p52
    %p54 = scmp.ne.s32.totalorder %s43, %s44
    %p55 = scmp.eq.s32.totalorder %s23, 0
    %p56 = por %p54, %p55
    %p57 = scmp.ne.s32.totalorder %s43, %s44
    %p58 = scmp.eq.s32.totalorder %s24, 1
    %p59 = por %p57, %p58
    %p61 = scmp.ne.s32.totalorder %s44, %s60
    %p62 = scmp.eq.s32.totalorder %s24, 0
    %p63 = por %p61, %p62
    %s65 = sadd.s32 %s64, 1
    %p68 = scmp.eq.s32.totalorder %s18, 1
    %p69 = scmp.ne.s32.totalorder %s64, %s66
    %p70 = scmp.eq.s32.totalorder %s18, 0
    %p71 = por %p69, %p70
    %p72 = scmp.ne.s32.totalorder %s64, %s66
    %p73 = scmp.eq.s32.totalorder %s23, 1
    %p74 = por %p72, %p73
    %p75 = scmp.ne.s32.totalorder %s66, %s67
    %p76 = scmp.eq.s32.totalorder %s23, 0
    %p77 = por %p75, %p76
    %p78 = scmp.ne.s32.totalorder %s66, %s67
    %p79 = scmp.eq.s32.totalorder %s24, 1
    %p80 = por %p78, %p79
    %p82 = scmp.ne.s32.totalorder %s67, %s81
    %p83 = scmp.eq.s32.totalorder %s24, 0
    %p84 = por %p82, %p83
    %s86 = sadd.s32 %s85, 1
    %p89 = scmp.eq.s32.totalorder %s18, 1
    %p90 = scmp.ne.s32.totalorder %s85, %s87
    %p91 = scmp.eq.s32.totalorder %s18, 0
    %p92 = por %p90, %p91
    %p93 = scmp.ne.s32.totalorder %s85, %s87
    %p94 = scmp.eq.s32.totalorder %s23, 1
    %p95 = por %p93, %p94
    %p96 = scmp.ne.s32.totalorder %s87, %s88
    %p97 = scmp.eq.s32.totalorder %s23, 0
    %p98 = por %p96, %p97
    %p99 = scmp.ne.s32.totalorder %s87, %s88
    %p100 = scmp.eq.s32.totalorder %s24, 1
    %p101 = por %p99, %p100
    %p103 = scmp.ne.s32.totalorder %s88, %s102
    %p104 = scmp.eq.s32.totalorder %s24, 0
    %p105 = por %p103, %p104
    %s107 = sadd.s32 %s106, 1
    %p110 = scmp.eq.s32.totalorder %s18, 1
    %p111 = scmp.ne.s32.totalorder %s106, %s108
    %p112 = scmp.eq.s32.totalorder %s18, 0
    %p113 = por %p111, %p112
    %p114 = scmp.ne.s32.totalorder %s106, %s108
    %p115 = scmp.eq.s32.totalorder %s23, 1
    %p116 = por %p114, %p115
    %p117 = scmp.ne.s32.totalorder %s108, %s109
    %p118 = scmp.eq.s32.totalorder %s23, 0
    %p119 = por %p117, %p118
    %p120 = scmp.ne.s32.totalorder %s108, %s109
    %p121 = scmp.eq.s32.totalorder %s24, 1
    %p122 = por %p120, %p121
    %p124 = scmp.ne.s32.totalorder %s109, %s123
    %p125 = scmp.eq.s32.totalorder %s24, 0
    %p126 = por %p124, %p125
    %s128 = sadd.s32 %s127, 1
    %p131 = scmp.eq.s32.totalorder %s18, 1
    %p132 = scmp.ne.s32.totalorder %s127, %s129
    %p133 = scmp.eq.s32.totalorder %s18, 0
    %p134 = por %p132, %p133
    %p135 = scmp.ne.s32.totalorder %s127, %s129
    %p136 = scmp.eq.s32.totalorder %s23, 1
    %p137 = por %p135, %p136
    %p138 = scmp.ne.s32.totalorder %s129, %s130
    %p139 = scmp.eq.s32.totalorder %s23, 0
    %p140 = por %p138, %p139
    %p141 = scmp.ne.s32.totalorder %s129, %s130
    %p142 = scmp.eq.s32.totalorder %s24, 1
    %p143 = por %p141, %p142
    %p145 = scmp.ne.s32.totalorder %s130, %s144
    %p146 = scmp.eq.s32.totalorder %s24, 0
    %p147 = por %p145, %p146
    %s149 = sadd.s32 %s148, 1
    %p152 = scmp.eq.s32.totalorder %s18, 1
    %p153 = scmp.ne.s32.totalorder %s148, %s150
    %p154 = scmp.eq.s32.totalorder %s18, 0
    %p155 = por %p153, %p154
    %p156 = scmp.ne.s32.totalorder %s148, %s150
    %p157 = scmp.eq.s32.totalorder %s23, 1
    %p158 = por %p156, %p157
    %p159 = scmp.ne.s32.totalorder %s150, %s151
    %p160 = scmp.eq.s32.totalorder %s23, 0
    %p161 = por %p159, %p160
    %p162 = scmp.ne.s32.totalorder %s150, %s151
    %p163 = scmp.eq.s32.totalorder %s24, 1
    %p164 = por %p162, %p163
    %p166 = scmp.ne.s32.totalorder %s151, %s165
    %p167 = scmp.eq.s32.totalorder %s24, 0
    %p168 = por %p166, %p167
    %s170 = sadd.s32 %s169, 1
    %p173 = scmp.eq.s32.totalorder %s18, 1
    %p174 = scmp.ne.s32.totalorder %s169, %s171
    %p175 = scmp.eq.s32.totalorder %s18, 0
    %p176 = por %p174, %p175
    %p177 = scmp.ne.s32.totalorder %s169, %s171
    %p178 = scmp.eq.s32.totalorder %s23, 1
    %p179 = por %p177, %p178
    %p180 = scmp.ne.s32.totalorder %s171, %s172
    %p181 = scmp.eq.s32.totalorder %s23, 0
    %p182 = por %p180, %p181
    %p183 = scmp.ne.s32.totalorder %s171, %s172
    %p184 = scmp.eq.s32.totalorder %s24, 1
    %p185 = por %p183, %p184
    %p187 = scmp.ne.s32.totalorder %s172, %s186
    %p188 = scmp.eq.s32.totalorder %s24, 0
    %p189 = por %p187, %p188
    %s191 = sadd.s32 %s190, 1
    %p194 = scmp.eq.s32.totalorder %s18, 1
    %p195 = scmp.ne.s32.totalorder %s190, %s192
    %p196 = scmp.eq.s32.totalorder %s18, 0
    %p197 = por %p195, %p196
    %p198 = scmp.ne.s32.totalorder %s190, %s192
    %p199 = scmp.eq.s32.totalorder %s23, 1
    %p200 = por %p198, %p199
    %p201 = scmp.ne.s32.totalorder %s192, %s193
    %p202 = scmp.eq.s32.totalorder %s23, 0
    %p203 = por %p201, %p202
    %p204 = scmp.ne.s32.totalorder %s192, %s193
    %p205 = scmp.eq.s32.totalorder %s24, 1
    %p206 = por %p204, %p205
    %p208 = scmp.ne.s32.totalorder %s193, %s207
    %p209 = scmp.eq.s32.totalorder %s24, 0
    %p210 = por %p208, %p209
    %s212 = sadd.s32 %s211, 1
    %p215 = scmp.eq.s32.totalorder %s18, 1
    %p216 = scmp.ne.s32.totalorder %s211, %s213
    %p217 = scmp.eq.s32.totalorder %s18, 0
    %p218 = por %p216, %p217
    %p219 = scmp.ne.s32.totalorder %s211, %s213
    %p220 = scmp.eq.s32.totalorder %s23, 1
    %p221 = por %p219, %p220
    %p222 = scmp.ne.s32.totalorder %s213, %s214
    %p223 = scmp.eq.s32.totalorder %s23, 0
    %p224 = por %p222, %p223
    %p225 = scmp.ne.s32.totalorder %s213, %s214
    %p226 = scmp.eq.s32.totalorder %s24, 1
    %p227 = por %p225, %p226
    %p229 = scmp.ne.s32.totalorder %s214, %s228
    %p230 = scmp.eq.s32.totalorder %s24, 0
    %p231 = por %p229, %p230
    %s233 = sadd.s32 %s232, 1
    %p236 = scmp.eq.s32.totalorder %s18, 1
    %p237 = scmp.ne.s32.totalorder %s232, %s234
    %p238 = scmp.eq.s32.totalorder %s18, 0
    %p239 = por %p237, %p238
    %p240 = scmp.ne.s32.totalorder %s232, %s234
    %p241 = scmp.eq.s32.totalorder %s23, 1
    %p242 = por %p240, %p241
    %p243 = scmp.ne.s32.totalorder %s234, %s235
    %p244 = scmp.eq.s32.totalorder %s23, 0
    %p245 = por %p243, %p244
    %p246 = scmp.ne.s32.totalorder %s234, %s235
    %p247 = scmp.eq.s32.totalorder %s24, 1
    %p248 = por %p246, %p247
    %p250 = scmp.ne.s32.totalorder %s235, %s249
    %p251 = scmp.eq.s32.totalorder %s24, 0
    %p252 = por %p250, %p251
    %s254 = sadd.s32 %s253, 1
    %p257 = scmp.eq.s32.totalorder %s18, 1
    %p258 = scmp.ne.s32.totalorder %s253, %s255
    %p259 = scmp.eq.s32.totalorder %s18, 0
    %p260 = por %p258, %p259
    %p261 = scmp.ne.s32.totalorder %s253, %s255
    %p262 = scmp.eq.s32.totalorder %s23, 1
    %p263 = por %p261, %p262
    %p264 = scmp.ne.s32.totalorder %s255, %s256
    %p265 = scmp.eq.s32.totalorder %s23, 0
    %p266 = por %p264, %p265
    %p267 = scmp.ne.s32.totalorder %s255, %s256
    %p268 = scmp.eq.s32.totalorder %s24, 1
    %p269 = por %p267, %p268
    %p271 = scmp.ne.s32.totalorder %s256, %s270
    %p272 = scmp.eq.s32.totalorder %s24, 0
    %p273 = por %p271, %p272
    %s275 = sadd.s32 %s274, 1
    %p278 = scmp.eq.s32.totalorder %s18, 1
    %p279 = scmp.ne.s32.totalorder %s274, %s276
    %p280 = scmp.eq.s32.totalorder %s18, 0
    %p281 = por %p279, %p280
    %p282 = scmp.ne.s32.totalorder %s274, %s276
    %p283 = scmp.eq.s32.totalorder %s23, 1
    %p284 = por %p282, %p283
    %p285 = scmp.ne.s32.totalorder %s276, %s277
    %p286 = scmp.eq.s32.totalorder %s23, 0
    %p287 = por %p285, %p286
    %p288 = scmp.ne.s32.totalorder %s276, %s277
    %p289 = scmp.eq.s32.totalorder %s24, 1
    %p290 = por %p288, %p289
    %p292 = scmp.ne.s32.totalorder %s277, %s291
    %p293 = scmp.eq.s32.totalorder %s24, 0
    %p294 = por %p292, %p293
    %s295 = ssub.s32 %s25, %s37
    %s296 = ssub.s32 %s26, %s33
    %s297 = sor.u32 %s295, %s296
    %p298 = scmp.eq.s32.totalorder %s297, 0
    %s300 = sadd.s32 %s299, 1
    %s301 = scalar_select %p298, %s299, %s300
    %p304 = pneg %p298
    %p305 = scmp.eq.s32.totalorder %s18, 1
    %p306 = por %p304, %p305
    %p307 = scmp.ne.s32.totalorder %s299, %s302
    %p308 = scmp.eq.s32.totalorder %s18, 0
    %p309 = por %p307, %p308
    %p310 = scmp.ne.s32.totalorder %s299, %s302
    %p311 = scmp.eq.s32.totalorder %s23, 1
    %p312 = por %p310, %p311
    %p313 = scmp.ne.s32.totalorder %s302, %s303
    %p314 = scmp.eq.s32.totalorder %s23, 0
    %p315 = por %p313, %p314
    %p316 = scmp.ne.s32.totalorder %s302, %s303
    %p317 = scmp.eq.s32.totalorder %s24, 1
    %p318 = por %p316, %p317
    %p320 = scmp.ne.s32.totalorder %s303, %s319
    %p321 = scmp.eq.s32.totalorder %s24, 0
    %p322 = por %p320, %p321
    %p323 = scmp.le.s32.totalorder 1, %s18
    %p324 = scmp.lt.s32.totalorder %s18, 3
    %p325 = pnand %p323, %p324
    %p326 = pneg %p325
    // Predicated region
    $region9: #{t2t_forward.3} parent=5 // pred_check
      _
    $region10: #{t2t_forward.3} parent=5 // pred_check_branch
      %328 = sbr.rel (%p325) target = $region12
    $region11: #{t2t_forward.3} parent=5 // pred_region
      %s329 = ssub.s32 %s18, 1
      // Predicated region
      $region13: #{t2t_forward.3} parent=11 // pred_check
        %p330 = pneg %p77
      $region14: #{t2t_forward.3} parent=11 // pred_check_branch
        %332 = sbr.rel (%p330) target = $region16
      $region15: #{t2t_forward.3} parent=11 // pred_region
        _
      $region16: #{t2t_forward.3} parent=11 // pred_fallthru
        _
      // Predicated region
      $region17: #{t2t_forward.3} parent=11 // pred_check
        %p333 = pneg %p98
      $region18: #{t2t_forward.3} parent=11 // pred_check_branch
        %335 = sbr.rel (%p333) target = $region20
      $region19: #{t2t_forward.3} parent=11 // pred_region
        _
      $region20: #{t2t_forward.3} parent=11 // pred_fallthru
        _
      // Predicated region
      $region21: #{t2t_forward.3} parent=11 // pred_check
        %p336 = pneg %p119
      $region22: #{t2t_forward.3} parent=11 // pred_check_branch
        %338 = sbr.rel (%p336) target = $region24
      $region23: #{t2t_forward.3} parent=11 // pred_region
        _
      $region24: #{t2t_forward.3} parent=11 // pred_fallthru
        _
      // Predicated region
      $region25: #{t2t_forward.3} parent=11 // pred_check
        %p339 = pneg %p140
      $region26: #{t2t_forward.3} parent=11 // pred_check_branch
        %341 = sbr.rel (%p339) target = $region28
      $region27: #{t2t_forward.3} parent=11 // pred_region
        _
      $region28: #{t2t_forward.3} parent=11 // pred_fallthru
        _
      // Predicated region
      $region29: #{t2t_forward.3} parent=11 // pred_check
        %p342 = pneg %p161
      $region30: #{t2t_forward.3} parent=11 // pred_check_branch
        %344 = sbr.rel (%p342) target = $region32
      $region31: #{t2t_forward.3} parent=11 // pred_region
        _
      $region32: #{t2t_forward.3} parent=11 // pred_fallthru
        _
      // Predicated region
      $region33: #{t2t_forward.3} parent=11 // pred_check
        %p345 = pneg %p182
      $region34: #{t2t_forward.3} parent=11 // pred_check_branch
        %347 = sbr.rel (%p345) target = $region36
      $region35: #{t2t_forward.3} parent=11 // pred_region
        _
      $region36: #{t2t_forward.3} parent=11 // pred_fallthru
        _
      // Predicated region
      $region37: #{t2t_forward.3} parent=11 // pred_check
        %p348 = pneg %p203
      $region38: #{t2t_forward.3} parent=11 // pred_check_branch
        %350 = sbr.rel (%p348) target = $region40
      $region39: #{t2t_forward.3} parent=11 // pred_region
        _
      $region40: #{t2t_forward.3} parent=11 // pred_fallthru
        _
      // Predicated region
      $region41: #{t2t_forward.3} parent=11 // pred_check
        %p351 = pneg %p224
      $region42: #{t2t_forward.3} parent=11 // pred_check_branch
        %353 = sbr.rel (%p351) target = $region44
      $region43: #{t2t_forward.3} parent=11 // pred_region
        _
      $region44: #{t2t_forward.3} parent=11 // pred_fallthru
        _
      // Predicated region
      $region45: #{t2t_forward.3} parent=11 // pred_check
        %p354 = pneg %p245
      $region46: #{t2t_forward.3} parent=11 // pred_check_branch
        %356 = sbr.rel (%p354) target = $region48
      $region47: #{t2t_forward.3} parent=11 // pred_region
        _
      $region48: #{t2t_forward.3} parent=11 // pred_fallthru
        _
      // Predicated region
      $region49: #{t2t_forward.3} parent=11 // pred_check
        %p357 = pneg %p266
      $region50: #{t2t_forward.3} parent=11 // pred_check_branch
        %359 = sbr.rel (%p357) target = $region52
      $region51: #{t2t_forward.3} parent=11 // pred_region
        _
      $region52: #{t2t_forward.3} parent=11 // pred_fallthru
        _
      // Predicated region
      $region53: #{t2t_forward.3} parent=11 // pred_check
        %p360 = pneg %p287
      $region54: #{t2t_forward.3} parent=11 // pred_check_branch
        %362 = sbr.rel (%p360) target = $region56
      $region55: #{t2t_forward.3} parent=11 // pred_region
        _
      $region56: #{t2t_forward.3} parent=11 // pred_fallthru
        _
    $region12: #{t2t_forward.3} parent=5 // pred_fallthru
      _
    %p363 = scmp.lt.s32.totalorder %s18, 2
    // Predicated region
    $region57: #{t2t_forward.3} parent=5 // pred_check
      %p364 = pneg %p363
    $region58: #{t2t_forward.3} parent=5 // pred_check_branch
      %366 = sbr.rel (%p364) target = $region60
    $region59: #{t2t_forward.3} parent=5 // pred_region
      // Predicated region
      $region61: #{t2t_forward.3} parent=59 // pred_check
        %p367 = pneg %p50
      $region62: #{t2t_forward.3} parent=59 // pred_check_branch
        %369 = sbr.rel (%p367) target = $region64
      $region63: #{t2t_forward.3} parent=59 // pred_region
        %p370 = scmp.lt.s32.totalorder %s25, 1
        %s371 = scalar_select %p370, %s25, 1
        %s372 = smul.addr %s371, 16
        %s373 = smul.addr %s372, 8
        %s374 = scalar_lea.vmem %s0, %s373
      $region64: #{t2t_forward.3} parent=59 // pred_fallthru
        _
    $region60: #{t2t_forward.3} parent=5 // pred_fallthru
      _
    %p375 = scmp.le.s32.totalorder 1, %s18
    %p376 = scmp.lt.s32.totalorder %s18, 3
    %p377 = pnand %p375, %p376
    %p378 = pneg %p377
    // Predicated region
    $region65: #{t2t_forward.3} parent=5 // pred_check
      _
    $region66: #{t2t_forward.3} parent=5 // pred_check_branch
      %380 = sbr.rel (%p377) target = $region68
    $region67: #{t2t_forward.3} parent=5 // pred_region
      %s381 = ssub.s32 %s18, 1
      %p382 = scmp.lt.s32.totalorder %s27, 1
      %s383 = scalar_select %p382, %s27, 1
      %s384 = smul.addr %s383, 16
      %s385 = smul.addr %s384, 8
      %s386 = scalar_lea.vmem %s0, %s385
      %p387 = pneg %p56
      %p388 = pneg %p53
      %p389 = pneg %p77
      %p390 = pneg %p74
      %p391 = pneg %p98
      %p392 = pneg %p95
      %p393 = pneg %p119
      %p394 = pneg %p116
      %p395 = pneg %p140
      %p396 = pneg %p137
      %p397 = pneg %p161
      %p398 = pneg %p158
      %p399 = pneg %p182
      %p400 = pneg %p179
      %p401 = pneg %p203
      %p402 = pneg %p200
      %p403 = pneg %p224
      %p404 = pneg %p221
      %p405 = pneg %p245
      %p406 = pneg %p242
      %p407 = pneg %p266
      %p408 = pneg %p263
      %p409 = pneg %p287
      %p410 = pneg %p284
      %p411 = pneg %p315
      %p412 = pneg %p312
      %s413 = smul.u32 8, %s28
      %p414 = scmp.lt.s32.totalorder %s27, 1
      %s415 = scalar_select %p414, %s27, 1
      %p416 = scmp.lt.s32.totalorder %s413, 7
      %s417 = scalar_select %p416, %s413, 7
      %s418 = smul.addr %s415, 8
      %s419 = sadd.s32 %s417, %s418
      %s420 = smul.addr %s419, 4
      %s421 = scalar_lea.vmem %s12, %s420
      %p422 = scmp.lt.s32.totalorder %s27, 1
      %s423 = scalar_select %p422, %s27, 1
      %s424 = smul.addr %s423, 16
      %s425 = smul.addr %s424, 8
      %s426 = scalar_lea.vmem %s0, %s425
      %s427 = smul.u32 8, %s28
      %p428 = scmp.lt.s32.totalorder %s27, 1
      %s429 = scalar_select %p428, %s27, 1
      %p430 = scmp.lt.s32.totalorder %s427, 7
      %s431 = scalar_select %p430, %s427, 7
      %s432 = smul.addr %s429, 8
      %s433 = sadd.s32 %s431, %s432
      %s434 = smul.addr %s433, 4
      %s435 = scalar_lea.vmem %s12, %s434
      %s436 = smul.u32 8, %s28
      %p438 = scmp.eq.s32.totalorder %s28, 0
      // Predicated region
      $region69: #{t2t_forward.3} parent=67 // pred_check
        %p439 = pneg %p438
      $region70: #{t2t_forward.3} parent=67 // pred_check_branch
        %441 = sbr.rel (%p439) target = $region72
      $region71: #{t2t_forward.3} parent=67 // pred_region
        %v442 = vld [vmem:[%s426] sm:$0xff]
        %v443 = vld [vmem:[%s426 + $0x8] sm:$0xff]
        %v444 = vld [vmem:[%s426 + $0x10] sm:$0xff]
        %v445 = vld [vmem:[%s426 + $0x18] sm:$0xff]
        %v446 = vld [vmem:[%s426 + $0x20] sm:$0xff]
        %v447 = vld [vmem:[%s426 + $0x28] sm:$0xff]
        %v448 = vld [vmem:[%s426 + $0x30] sm:$0xff]
        %v449 = vld [vmem:[%s426 + $0x38] sm:$0xff]
        %v450 = vld [vmem:[%s426 + $0x40] sm:$0xff]
        %v451 = vld [vmem:[%s426 + $0x48] sm:$0xff]
        %v452 = vld [vmem:[%s426 + $0x50] sm:$0xff]
        %v453 = vld [vmem:[%s426 + $0x58] sm:$0xff]
        %v454 = vld [vmem:[%s426 + $0x60] sm:$0xff]
        %v455 = vld [vmem:[%s426 + $0x68] sm:$0xff]
        %v456 = vld [vmem:[%s426 + $0x70] sm:$0xff]
        %v457 = vld [vmem:[%s426 + $0x78] sm:$0xff]
        %vm458 = vcmask 154624
        %v459 = vsel %vm458, %v443, 0.0
        %v460 = vadd.f32 %v442, %v459
        %461 = vadd.xlane.f32.xlu0 %v460
        %v462 = vpop.xlane.xlu0 %461
        %v463 = vsel %vm458, %v445, 0.0
        %v464 = vadd.f32 %v444, %v463
        %465 = vadd.xlane.f32.xlu0 %v464
        %v466 = vpop.xlane.xlu0 %465
        %v467 = vsel %vm458, %v447, 0.0
        %v468 = vadd.f32 %v446, %v467
        %469 = vadd.xlane.f32.xlu0 %v468
        %v470 = vpop.xlane.xlu0 %469
        %v471 = vsel %vm458, %v449, 0.0
        %v472 = vadd.f32 %v448, %v471
        %473 = vadd.xlane.f32.xlu0 %v472
        %v474 = vpop.xlane.xlu0 %473
        %v475 = vsel %vm458, %v451, 0.0
        %v476 = vadd.f32 %v450, %v475
        %477 = vadd.xlane.f32.xlu0 %v476
        %v478 = vpop.xlane.xlu0 %477
        %v479 = vsel %vm458, %v453, 0.0
        %v480 = vadd.f32 %v452, %v479
        %481 = vadd.xlane.f32.xlu0 %v480
        %v482 = vpop.xlane.xlu0 %481
        %v483 = vsel %vm458, %v455, 0.0
        %v484 = vadd.f32 %v454, %v483
        %485 = vadd.xlane.f32.xlu0 %v484
        %v486 = vpop.xlane.xlu0 %485
        %v487 = vsel %vm458, %v457, 0.0
        %v488 = vadd.f32 %v456, %v487
        %489 = vadd.xlane.f32.xlu0 %v488
        %v490 = vpop.xlane.xlu0 %489
        %v491 = vrcp.pop 147.0
        %v492 = vmul.f32 %v462, %v491
        %v493 = vmul.f32 %v466, %v491
        %v494 = vmul.f32 %v470, %v491
        %v495 = vmul.f32 %v474, %v491
        %v496 = vmul.f32 %v478, %v491
        %v497 = vmul.f32 %v482, %v491
        %v498 = vmul.f32 %v486, %v491
        %v499 = vmul.f32 %v490, %v491
        %v500 = vsub.f32 %v442, %v492
        %v501 = vsub.f32 %v443, %v492
        %v502 = vsub.f32 %v444, %v493
        %v503 = vsub.f32 %v445, %v493
        %v504 = vsub.f32 %v446, %v494
        %v505 = vsub.f32 %v447, %v494
        %v506 = vsub.f32 %v448, %v495
        %v507 = vsub.f32 %v449, %v495
        %v508 = vsub.f32 %v450, %v496
        %v509 = vsub.f32 %v451, %v496
        %v510 = vsub.f32 %v452, %v497
        %v511 = vsub.f32 %v453, %v497
        %v512 = vsub.f32 %v454, %v498
        %v513 = vsub.f32 %v455, %v498
        %v514 = vsub.f32 %v456, %v499
        %v515 = vsub.f32 %v457, %v499
        %v516 = vmul.f32 %v500, %v500
        %v517 = vmul.f32 %v501, %v501
        %v518 = vmul.f32 %v502, %v502
        %v519 = vmul.f32 %v503, %v503
        %v520 = vmul.f32 %v504, %v504
        %v521 = vmul.f32 %v505, %v505
        %v522 = vmul.f32 %v506, %v506
        %v523 = vmul.f32 %v507, %v507
        %v524 = vmul.f32 %v508, %v508
        %v525 = vmul.f32 %v509, %v509
        %v526 = vmul.f32 %v510, %v510
        %v527 = vmul.f32 %v511, %v511
        %v528 = vmul.f32 %v512, %v512
        %v529 = vmul.f32 %v513, %v513
        %v530 = vmul.f32 %v514, %v514
        %v531 = vmul.f32 %v515, %v515
        %v532 = vsel %vm458, %v517, 0.0
        %v533 = vadd.f32 %v516, %v532
        %534 = vadd.xlane.f32.xlu0 %v533
        %v535 = vpop.xlane.xlu0 %534
        %v536 = vsel %vm458, %v519, 0.0
        %v537 = vadd.f32 %v518, %v536
        %538 = vadd.xlane.f32.xlu0 %v537
        %v539 = vpop.xlane.xlu0 %538
        %v540 = vsel %vm458, %v521, 0.0
        %v541 = vadd.f32 %v520, %v540
        %542 = vadd.xlane.f32.xlu0 %v541
        %v543 = vpop.xlane.xlu0 %542
        %v544 = vsel %vm458, %v523, 0.0
        %v545 = vadd.f32 %v522, %v544
        %546 = vadd.xlane.f32.xlu0 %v545
        %v547 = vpop.xlane.xlu0 %546
        %v548 = vsel %vm458, %v525, 0.0
        %v549 = vadd.f32 %v524, %v548
        %550 = vadd.xlane.f32.xlu0 %v549
        %v551 = vpop.xlane.xlu0 %550
        %v552 = vsel %vm458, %v527, 0.0
        %v553 = vadd.f32 %v526, %v552
        %554 = vadd.xlane.f32.xlu0 %v553
        %v555 = vpop.xlane.xlu0 %554
        %v556 = vsel %vm458, %v529, 0.0
        %v557 = vadd.f32 %v528, %v556
        %558 = vadd.xlane.f32.xlu0 %v557
        %v559 = vpop.xlane.xlu0 %558
        %v560 = vsel %vm458, %v531, 0.0
        %v561 = vadd.f32 %v530, %v560
        %562 = vadd.xlane.f32.xlu0 %v561
        %v563 = vpop.xlane.xlu0 %562
        %v564 = vmul.f32 %v535, %v491
        %v565 = vmul.f32 %v539, %v491
        %v566 = vmul.f32 %v543, %v491
        %v567 = vmul.f32 %v547, %v491
        %v568 = vmul.f32 %v551, %v491
        %v569 = vmul.f32 %v555, %v491
        %v570 = vmul.f32 %v559, %v491
        %v571 = vmul.f32 %v563, %v491
        %v572 = vadd.f32 %v564, 1e-05
        %v573 = vadd.f32 %v565, 1e-05
        %v574 = vadd.f32 %v566, 1e-05
        %v575 = vadd.f32 %v567, 1e-05
        %v576 = vadd.f32 %v568, 1e-05
        %v577 = vadd.f32 %v569, 1e-05
        %v578 = vadd.f32 %v570, 1e-05
        %v579 = vadd.f32 %v571, 1e-05
        %v580 = vrsqrt.pop %v572
        %v581 = vrsqrt.pop %v573
        %v582 = vrsqrt.pop %v574
        %v583 = vrsqrt.pop %v575
        %v584 = vrsqrt.pop %v576
        %v585 = vrsqrt.pop %v577
        %v586 = vrsqrt.pop %v578
        %v587 = vrsqrt.pop %v579
        %v588 = vmul.f32 %v500, %v580
        %v589 = vmul.f32 %v501, %v580
        %v590 = vmul.f32 %v502, %v581
        %v591 = vmul.f32 %v503, %v581
        %v592 = vmul.f32 %v504, %v582
        %v593 = vmul.f32 %v505, %v582
        %v594 = vmul.f32 %v506, %v583
        %v595 = vmul.f32 %v507, %v583
        %v596 = vmul.f32 %v508, %v584
        %v597 = vmul.f32 %v509, %v584
        %v598 = vmul.f32 %v510, %v585
        %v599 = vmul.f32 %v511, %v585
        %v600 = vmul.f32 %v512, %v586
        %v601 = vmul.f32 %v513, %v586
        %v602 = vmul.f32 %v514, %v587
        %v603 = vmul.f32 %v515, %v587
        %v604 = vld [vmem:[%s1] sm:$0x3]
        %v606 = vlaneseq
        %v607 = vshrl.u32 %v606, 7
        %v608 = vsub.s32 0, %v607
        %v609 = vrot.slane %v604, %v608
        %v610 = vlaneseq
        %v611 = vshrl.u32 %v610, 7
        %v612 = vsub.s32 1, %v611
        %v613 = vrot.slane %v604, %v612
        %v616 = vmul.f32 %v588, %v609
        %v617 = vmul.f32 %v589, %v613
        %v618 = vmul.f32 %v590, %v609
        %v619 = vmul.f32 %v591, %v613
        %v620 = vmul.f32 %v592, %v609
        %v621 = vmul.f32 %v593, %v613
        %v622 = vmul.f32 %v594, %v609
        %v623 = vmul.f32 %v595, %v613
        %v624 = vmul.f32 %v596, %v609
        %v625 = vmul.f32 %v597, %v613
        %v626 = vmul.f32 %v598, %v609
        %v627 = vmul.f32 %v599, %v613
        %v628 = vmul.f32 %v600, %v609
        %v629 = vmul.f32 %v601, %v613
        %v630 = vmul.f32 %v602, %v609
        %v631 = vmul.f32 %v603, %v613
        %v632 = vld [vmem:[%s2] sm:$0x3]
        %v634 = vlaneseq
        %v635 = vshrl.u32 %v634, 7
        %v636 = vsub.s32 0, %v635
        %v637 = vrot.slane %v632, %v636
        %v638 = vlaneseq
        %v639 = vshrl.u32 %v638, 7
        %v640 = vsub.s32 1, %v639
        %v641 = vrot.slane %v632, %v640
        %v644 = vadd.f32 %v616, %v637
        %v645 = vadd.f32 %v617, %v641
        %v646 = vadd.f32 %v618, %v637
        %v647 = vadd.f32 %v619, %v641
        %v648 = vadd.f32 %v620, %v637
        %v649 = vadd.f32 %v621, %v641
        %v650 = vadd.f32 %v622, %v637
        %v651 = vadd.f32 %v623, %v641
        %v652 = vadd.f32 %v624, %v637
        %v653 = vadd.f32 %v625, %v641
        %v654 = vadd.f32 %v626, %v637
        %v655 = vadd.f32 %v627, %v641
        %v656 = vadd.f32 %v628, %v637
        %v657 = vadd.f32 %v629, %v641
        %v658 = vadd.f32 %v630, %v637
        %v659 = vadd.f32 %v631, %v641
        %v660 = vpack.c.bf16 %v646, %v644
        %v661 = vpack.c.bf16 %v647, %v645
        %v662 = vpack.c.bf16 %v650, %v648
        %v663 = vpack.c.bf16 %v651, %v649
        %v664 = vpack.c.bf16 %v654, %v652
        %v665 = vpack.c.bf16 %v655, %v653
        %v666 = vpack.c.bf16 %v658, %v656
        %v667 = vpack.c.bf16 %v659, %v657
        %v668 = vld [vmem:[%s3] sm:$0xf]
        %v669 = vld [vmem:[%s3 + $0x4] sm:$0xf]
        %v670 = vld [vmem:[%s3 + $0x8] sm:$0xf]
        %v671 = vld [vmem:[%s3 + $0xc] sm:$0xf]
        %v672 = vld [vmem:[%s3 + $0x10] sm:$0xf]
        %v673 = vld [vmem:[%s3 + $0x14] sm:$0xf]
        %v674 = vld [vmem:[%s3 + $0x18] sm:$0xf]
        %v675 = vld [vmem:[%s3 + $0x1c] sm:$0xf]
        %v676 = vld [vmem:[%s3 + $0x20] sm:$0xf]
        %v677 = vld [vmem:[%s3 + $0x24] sm:$0xf]
        %v678 = vld [vmem:[%s3 + $0x28] sm:$0xf]
        %v679 = vld [vmem:[%s3 + $0x2c] sm:$0xf]
        %v680 = vld [vmem:[%s3 + $0x30] sm:$0xf]
        %v681 = vld [vmem:[%s3 + $0x34] sm:$0xf]
        %v682 = vld [vmem:[%s3 + $0x38] sm:$0xf]
        %v683 = vld [vmem:[%s3 + $0x3c] sm:$0xf]
        %v684 = vld [vmem:[%s3 + $0x40] sm:$0xf]
        %v685 = vld [vmem:[%s3 + $0x44] sm:$0xf]
        %v686 = vld [vmem:[%s3 + $0x48] sm:$0x3]
        %v706 = vunpack.c.l.b16 %v668
        %v707 = vunpack.c.l.b16 %v669
        %v708 = vunpack.c.l.b16 %v670
        %v709 = vunpack.c.l.b16 %v671
        %v710 = vunpack.c.l.b16 %v672
        %v711 = vunpack.c.l.b16 %v673
        %v712 = vunpack.c.l.b16 %v674
        %v713 = vunpack.c.l.b16 %v675
        %v714 = vunpack.c.l.b16 %v676
        %v715 = vunpack.c.l.b16 %v677
        %v716 = vunpack.c.l.b16 %v678
        %v717 = vunpack.c.l.b16 %v679
        %v718 = vunpack.c.l.b16 %v680
        %v719 = vunpack.c.l.b16 %v681
        %v720 = vunpack.c.l.b16 %v682
        %v721 = vunpack.c.l.b16 %v683
        %v722 = vunpack.c.l.b16 %v684
        %v723 = vunpack.c.l.b16 %v685
        %v724 = vunpack.c.l.b16 %v686
        %v725 = vpack.c.b16 %v707, %v706
        %v726 = vpack.c.b16 %v709, %v708
        %v727 = vpack.c.b16 %v711, %v710
        %v728 = vpack.c.b16 %v713, %v712
        %v729 = vpack.c.b16 %v715, %v714
        %v730 = vpack.c.b16 %v717, %v716
        %v731 = vpack.c.b16 %v719, %v718
        %v732 = vpack.c.b16 %v721, %v720
        %v733 = vpack.c.b16 %v723, %v722
        %v734 = vpack.c.b16 %v724, %v724
        %v745 = vsel %vm458, %v661, 0
        %v748 = vsel %vm458, %v663, 0
        %v751 = vsel %vm458, %v665, 0
        %v754 = vsel %vm458, %v667, 0
        %vm756 = vcmask 1040384
        %vm757 = vcmask 1041408
        %v758 = vsel %vm756, 4294967295, 65535
        %v759 = vsel %vm757, %v758, 0
        %v761 = vand.u32 %v734, %v759
        %763 = vmatprep.subr.bf16.mxu0 0
        %764 = vmatpush1.bf16.msra.mxu0 %v725
        %765 = vmatprep.subr.bf16.mxu0 0
        %766 = vmatpush1.bf16.msra.mxu0 %v726
        %767 = vmatprep.subr.bf16.mxu0 0
        %768 = vmatpush1.bf16.msra.mxu0 %v727
        %769 = vmatprep.subr.bf16.mxu0 0
        %770 = vmatpush1.bf16.msra.mxu0 %v728
        %771 = vmatprep.subr.bf16.mxu0 0
        %772 = vmatpush1.bf16.msra.mxu0 %v729
        %773 = vmatprep.subr.bf16.mxu0 0
        %774 = vmatpush1.bf16.msra.mxu0 %v730
        %775 = vmatprep.subr.bf16.mxu0 0
        %776 = vmatpush1.bf16.msra.mxu0 %v731
        %777 = vmatprep.subr.bf16.mxu0 0
        %778 = vmatpush1.bf16.msra.mxu0 %v732
        %779 = vmatprep.subr.bf16.mxu0 0
        %780 = vmatpush1.bf16.msra.mxu0 %v733
        %781 = vmatprep.subr.bf16.mxu0 0
        %782 = vmatpush1.bf16.msra.mxu0 %v761
        %783 = vmatprep.subr.bf16.mxu0 0
        %784 = vmatpush1.bf16.msra.mxu0 0
        %785 = vmatprep.subr.bf16.mxu0 0
        %786 = vmatpush1.bf16.msra.mxu0 0
        %787 = vmatprep.subr.bf16.mxu0 0
        %788 = vmatpush1.bf16.msra.mxu0 0
        %789 = vmatprep.subr.bf16.mxu0 0
        %790 = vmatpush1.bf16.msra.mxu0 0
        %791 = vmatprep.subr.bf16.mxu0 0
        %792 = vmatpush1.bf16.msra.mxu0 0
        %793 = vmatprep.subr.bf16.mxu0 0
        %794 = vmatpush1.bf16.msra.mxu0 0
        %795 = vmatprep.mubr.bf16.mxu0 %v745
        %796 = vmatmul.mubr.bf16.gmra.mrb[0].mxu0 %v660
        %v797 = vpop.f32.mrb[0].mxu0
        %v798 = vadd.f32 0.0, %v797
        %v799 = vpop.f32.mrb[0].mxu0
        %v800 = vpop.f32.mrb[0].mxu0
        %v801 = vadd.f32 0.0, %v800
        %v802 = vpop.f32.mrb[0].mxu0
        %803 = vmatprep.mubr.bf16.mxu0 %v748
        %804 = vmatmul.mubr.bf16.gmra.mrb[0].mxu0 %v662
        %v805 = vpop.f32.mrb[0].mxu0
        %v806 = vadd.f32 0.0, %v805
        %v807 = vpop.f32.mrb[0].mxu0
        %v808 = vpop.f32.mrb[0].mxu0
        %v809 = vadd.f32 0.0, %v808
        %v810 = vpop.f32.mrb[0].mxu0
        %811 = vmatprep.mubr.bf16.mxu0 %v751
        %812 = vmatmul.mubr.bf16.gmra.mrb[0].mxu0 %v664
        %v813 = vpop.f32.mrb[0].mxu0
        %v814 = vadd.f32 0.0, %v813
        %v815 = vpop.f32.mrb[0].mxu0
        %v816 = vpop.f32.mrb[0].mxu0
        %v817 = vadd.f32 0.0, %v816
        %v818 = vpop.f32.mrb[0].mxu0
        %819 = vmatprep.mubr.bf16.mxu0 %v754
        %820 = vmatmul.mubr.bf16.gmra.mrb[0].mxu0 %v666
        %v821 = vpop.f32.mrb[0].mxu0
        %v822 = vadd.f32 0.0, %v821
        %v823 = vpop.f32.mrb[0].mxu0
        %v824 = vpop.f32.mrb[0].mxu0
        %v825 = vadd.f32 0.0, %v824
        %v826 = vpop.f32.mrb[0].mxu0
        %827 = vdwg.mxu0
        %v828 = vmul.f32 %v798, 0.08247861
        %v829 = vmul.f32 %v801, 0.08247861
        %v830 = vmul.f32 %v806, 0.08247861
        %v831 = vmul.f32 %v809, 0.08247861
        %v832 = vmul.f32 %v814, 0.08247861
        %v833 = vmul.f32 %v817, 0.08247861
        %v834 = vmul.f32 %v822, 0.08247861
        %v835 = vmul.f32 %v825, 0.08247861
        %v836 = vpack.c.bf16 %v829, %v828
        %v837 = vpack.c.bf16 %v831, %v830
        %v838 = vpack.c.bf16 %v833, %v832
        %v839 = vpack.c.bf16 %v835, %v834
        %vm840 = vcmask 261120
        %841 = vst.msk [vmem:[#allocation2] sm:$0xff] %vm840, %v836
        %842 = vst.msk [vmem:[#allocation2 + $0x8] sm:$0xff] %vm840, %v837
        %843 = vst.msk [vmem:[#allocation2 + $0x10] sm:$0xff] %vm840, %v838
        %844 = vst.msk [vmem:[#allocation2 + $0x18] sm:$0xff] %vm840, %v839
        %853 = vrot.lane.b32.xlu0 %v798, 96
        %v854 = vpop.permute.xlu0 %853
        %855 = vrot.lane.b32.xlu0 %v801, 96
        %v856 = vpop.permute.xlu0 %855
        %857 = vrot.lane.b32.xlu0 %v806, 96
        %v858 = vpop.permute.xlu0 %857
        %859 = vrot.lane.b32.xlu0 %v809, 96
        %v860 = vpop.permute.xlu0 %859
        %861 = vrot.lane.b32.xlu0 %v814, 96
        %v862 = vpop.permute.xlu0 %861
        %863 = vrot.lane.b32.xlu0 %v817, 96
        %v864 = vpop.permute.xlu0 %863
        %865 = vrot.lane.b32.xlu0 %v822, 96
        %v866 = vpop.permute.xlu0 %865
        %867 = vrot.lane.b32.xlu0 %v825, 96
        %v868 = vpop.permute.xlu0 %867
        %877 = vxpose.xlu0.b32.start [1/16] %v854, 128
        %878 = vxpose.xlu0.b32.cont [2/16] %v856, 128
        %879 = vxpose.xlu0.b32.cont [3/16] %v858, 128
        %880 = vxpose.xlu0.b32.cont [4/16] %v860, 128
        %881 = vxpose.xlu0.b32.cont [5/16] %v862, 128
        %882 = vxpose.xlu0.b32.cont [6/16] %v864, 128
        %883 = vxpose.xlu0.b32.cont [7/16] %v866, 128
        %884 = vxpose.xlu0.b32.cont [8/16] %v868, 128
        %885 = vxpose.xlu0.b32.cont [9/16] 0.0, 128
        %886 = vxpose.xlu0.b32.cont [10/16] 0.0, 128
        %887 = vxpose.xlu0.b32.cont [11/16] 0.0, 128
        %888 = vxpose.xlu0.b32.cont [12/16] 0.0, 128
        %889 = vxpose.xlu0.b32.cont [13/16] 0.0, 128
        %890 = vxpose.xlu0.b32.cont [14/16] 0.0, 128
        %891 = vxpose.xlu0.b32.cont [15/16] 0.0, 128
        %892 = vxpose.xlu0.b32.end [16/16] 0.0, 128
        %v893 = vpop.trf.xlu0
        %v894 = vpop.trf.xlu0
        %v895 = vpop.trf.xlu0
        %v896 = vpop.trf.xlu0
        %v897 = vpop.trf.xlu0
        %v898 = vpop.trf.xlu0
        %v899 = vpop.trf.xlu0
        %v900 = vpop.trf.xlu0
        %v901 = vpop.trf.xlu0
        %v902 = vpop.trf.xlu0
        %v903 = vpop.trf.xlu0
        %v904 = vpop.trf.xlu0
        %v905 = vpop.trf.xlu0
        %v906 = vpop.trf.xlu0
        %v907 = vpop.trf.xlu0
        %v908 = vpop.trf.xlu0
        %v909 = vpack.c.bf16 %v894, %v893
        %v910 = vpack.c.bf16 %v896, %v895
        %vm911 = vcmask 523264
        %912 = vst.msk [vmem:[#allocation3] sm:$0xff] %vm911, %v909
        %913 = vst.msk [vmem:[#allocation3 + $0x8] sm:$0xff] %vm911, %v910
        %v914 = vpack.c.bf16 %v801, %v798
        %v915 = vpack.c.bf16 %v809, %v806
        %v916 = vpack.c.bf16 %v817, %v814
        %v917 = vpack.c.bf16 %v825, %v822
        %922 = vrot.lane.b32.xlu0 %v914, 64
        %v923 = vpop.permute.xlu0 %922
        %924 = vrot.lane.b32.xlu0 %v915, 64
        %v925 = vpop.permute.xlu0 %924
        %926 = vrot.lane.b32.xlu0 %v916, 64
        %v927 = vpop.permute.xlu0 %926
        %928 = vrot.lane.b32.xlu0 %v917, 64
        %v929 = vpop.permute.xlu0 %928
        %934 = vst.msk [vmem:[#allocation4] sm:$0xff] %vm840, %v923
        %935 = vst.msk [vmem:[#allocation4 + $0x8] sm:$0xff] %vm840, %v925
        %936 = vst.msk [vmem:[#allocation4 + $0x10] sm:$0xff] %vm840, %v927
        %937 = vst.msk [vmem:[#allocation4 + $0x18] sm:$0xff] %vm840, %v929
        %938 = vrot.lane.b32.xlu0 %v798, 64
        %v939 = vpop.permute.xlu0 %938
        %940 = vrot.lane.b32.xlu0 %v801, 64
        %v941 = vpop.permute.xlu0 %940
        %942 = vrot.lane.b32.xlu0 %v806, 64
        %v943 = vpop.permute.xlu0 %942
        %944 = vrot.lane.b32.xlu0 %v809, 64
        %v945 = vpop.permute.xlu0 %944
        %946 = vrot.lane.b32.xlu0 %v814, 64
        %v947 = vpop.permute.xlu0 %946
        %948 = vrot.lane.b32.xlu0 %v817, 64
        %v949 = vpop.permute.xlu0 %948
        %950 = vrot.lane.b32.xlu0 %v822, 64
        %v951 = vpop.permute.xlu0 %950
        %952 = vrot.lane.b32.xlu0 %v825, 64
        %v953 = vpop.permute.xlu0 %952
        %962 = vst.msk [vmem:[#allocation5] sm:$0xff] %vm840, %v939
        %963 = vst.msk [vmem:[#allocation5 + $0x8] sm:$0xff] %vm840, %v941
        %964 = vst.msk [vmem:[#allocation5 + $0x10] sm:$0xff] %vm840, %v943
        %965 = vst.msk [vmem:[#allocation5 + $0x18] sm:$0xff] %vm840, %v945
        %966 = vst.msk [vmem:[#allocation5 + $0x20] sm:$0xff] %vm840, %v947
        %967 = vst.msk [vmem:[#allocation5 + $0x28] sm:$0xff] %vm840, %v949
        %968 = vst.msk [vmem:[#allocation5 + $0x30] sm:$0xff] %vm840, %v951
        %969 = vst.msk [vmem:[#allocation5 + $0x38] sm:$0xff] %vm840, %v953
      $region72: #{t2t_forward.3} parent=67 // pred_fallthru
        _
      %s970 = smul.u32 %s28, 64
      %s971 = sshra.s32 %s970, 4
      %s972 = sand.u32 %s970, 15
      %s973 = smul.addr %s971, 8
      %s974 = scalar_lea.vmem [#allocation2], %s973
      %v975 = vld [vmem:[%s974] sm:$0xff]
      %v976 = vld [vmem:[%s974 + $0x8] sm:$0xff]
      %v977 = vld [vmem:[%s974 + $0x10] sm:$0xff]
      %v978 = vld [vmem:[%s974 + $0x18] sm:$0xff]
      %v979 = vld [vmem:[#allocation3] sm:$0xff]
      %v980 = vld [vmem:[#allocation3 + $0x8] sm:$0xff]
      %vm981 = vcmask 261120
      %v983 = vsel %vm981, %v975, 0
      %v986 = vsel %vm981, %v976, 0
      %v989 = vsel %vm981, %v977, 0
      %v992 = vsel %vm981, %v978, 0
      %994 = vmatprep.subr.bf16.mxu0 0
      %995 = vmatpush1.bf16.msra.mxu0 %v979
      %996 = vmatprep.subr.bf16.mxu0 0
      %997 = vmatpush1.bf16.msra.mxu0 %v980
      %998 = vmatprep.subr.bf16.mxu0 0
      %999 = vmatpush1.bf16.msra.mxu0 0
      %1000 = vmatprep.subr.bf16.mxu0 0
      %1001 = vmatpush1.bf16.msra.mxu0 0
      %1002 = vmatprep.subr.bf16.mxu0 0
      %1003 = vmatpush1.bf16.msra.mxu0 0
      %1004 = vmatprep.subr.bf16.mxu0 0
      %1005 = vmatpush1.bf16.msra.mxu0 0
      %1006 = vmatprep.subr.bf16.mxu0 0
      %1007 = vmatpush1.bf16.msra.mxu0 0
      %1008 = vmatprep.subr.bf16.mxu0 0
      %1009 = vmatpush1.bf16.msra.mxu0 0
      %1010 = vmatprep.subr.bf16.mxu0 0
      %1011 = vmatpush1.bf16.msra.mxu0 0
      %1012 = vmatprep.subr.bf16.mxu0 0
      %1013 = vmatpush1.bf16.msra.mxu0 0
      %1014 = vmatprep.subr.bf16.mxu0 0
      %1015 = vmatpush1.bf16.msra.mxu0 0
      %1016 = vmatprep.subr.bf16.mxu0 0
      %1017 = vmatpush1.bf16.msra.mxu0 0
      %1018 = vmatprep.subr.bf16.mxu0 0
      %1019 = vmatpush1.bf16.msra.mxu0 0
      %1020 = vmatprep.subr.bf16.mxu0 0
      %1021 = vmatpush1.bf16.msra.mxu0 0
      %1022 = vmatprep.subr.bf16.mxu0 0
      %1023 = vmatpush1.bf16.msra.mxu0 0
      %1024 = vmatprep.subr.bf16.mxu0 0
      %1025 = vmatpush1.bf16.msra.mxu0 0
      %1026 = vmatprep.mubr.bf16.mxu0 0
      %1027 = vmatmul.mubr.bf16.gmra.mrb[0].mxu0 %v983
      %v1028 = vpop.f32.mrb[0].mxu0
      %v1029 = vadd.f32 0.0, %v1028
      %v1030 = vpop.f32.mrb[0].mxu0
      %v1031 = vpop.f32.mrb[0].mxu0
      %v1032 = vadd.f32 0.0, %v1031
      %v1033 = vpop.f32.mrb[0].mxu0
      %1034 = vmatprep.mubr.bf16.mxu0 0
      %1035 = vmatmul.mubr.bf16.gmra.mrb[0].mxu0 %v986
      %v1036 = vpop.f32.mrb[0].mxu0
      %v1037 = vadd.f32 0.0, %v1036
      %v1038 = vpop.f32.mrb[0].mxu0
      %v1039 = vpop.f32.mrb[0].mxu0
      %v1040 = vadd.f32 0.0, %v1039
      %v1041 = vpop.f32.mrb[0].mxu0
      %1042 = vmatprep.mubr.bf16.mxu0 0
      %1043 = vmatmul.mubr.bf16.gmra.mrb[0].mxu0 %v989
      %v1044 = vpop.f32.mrb[0].mxu0
      %v1045 = vadd.f32 0.0, %v1044
      %v1046 = vpop.f32.mrb[0].mxu0
      %v1047 = vpop.f32.mrb[0].mxu0
      %v1048 = vadd.f32 0.0, %v1047
      %v1049 = vpop.f32.mrb[0].mxu0
      %1050 = vmatprep.mubr.bf16.mxu0 0
      %1051 = vmatmul.mubr.bf16.gmra.mrb[0].mxu0 %v992
      %v1052 = vpop.f32.mrb[0].mxu0
      %v1053 = vadd.f32 0.0, %v1052
      %v1054 = vpop.f32.mrb[0].mxu0
      %v1055 = vpop.f32.mrb[0].mxu0
      %v1056 = vadd.f32 0.0, %v1055
      %v1057 = vpop.f32.mrb[0].mxu0
      %1058 = vdwg.mxu0
      %vm1059 = vcmask 523264
      %v1060 = vsel %vm1059, %v1029, -inf
      %1061 = vmax.xlane.f32.xlu0 %v1060
      %v1062 = vpop.xlane.xlu0 %1061
      %v1063 = vsel %vm1059, %v1032, -inf
      %1064 = vmax.xlane.f32.xlu0 %v1063
      %v1065 = vpop.xlane.xlu0 %1064
      %v1066 = vsel %vm1059, %v1037, -inf
      %1067 = vmax.xlane.f32.xlu0 %v1066
      %v1068 = vpop.xlane.xlu0 %1067
      %v1069 = vsel %vm1059, %v1040, -inf
      %1070 = vmax.xlane.f32.xlu0 %v1069
      %v1071 = vpop.xlane.xlu0 %1070
      %v1072 = vsel %vm1059, %v1045, -inf
      %1073 = vmax.xlane.f32.xlu0 %v1072
      %v1074 = vpop.xlane.xlu0 %1073
      %v1075 = vsel %vm1059, %v1048, -inf
      %1076 = vmax.xlane.f32.xlu0 %v1075
      %v1077 = vpop.xlane.xlu0 %1076
      %v1078 = vsel %vm1059, %v1053, -inf
      %1079 = vmax.xlane.f32.xlu0 %v1078
      %v1080 = vpop.xlane.xlu0 %1079
      %v1081 = vsel %vm1059, %v1056, -inf
      %1082 = vmax.xlane.f32.xlu0 %v1081
      %v1083 = vpop.xlane.xlu0 %1082
      %v1084 = vsub.f32 %v1029, %v1062
      %v1085 = vsub.f32 %v1032, %v1065
      %v1086 = vsub.f32 %v1037, %v1068
      %v1087 = vsub.f32 %v1040, %v1071
      %v1088 = vsub.f32 %v1045, %v1074
      %v1089 = vsub.f32 %v1048, %v1077
      %v1090 = vsub.f32 %v1053, %v1080
      %v1091 = vsub.f32 %v1056, %v1083
      %v1092 = vmul.f32 %v1084, 1.442695
      %v1093 = vpow.pop %v1092
      %v1094 = vmul.f32 %v1085, 1.442695
      %v1095 = vpow.pop %v1094
      %v1096 = vmul.f32 %v1086, 1.442695
      %v1097 = vpow.pop %v1096
      %v1098 = vmul.f32 %v1087, 1.442695
      %v1099 = vpow.pop %v1098
      %v1100 = vmul.f32 %v1088, 1.442695
      %v1101 = vpow.pop %v1100
      %v1102 = vmul.f32 %v1089, 1.442695
      %v1103 = vpow.pop %v1102
      %v1104 = vmul.f32 %v1090, 1.442695
      %v1105 = vpow.pop %v1104
      %v1106 = vmul.f32 %v1091, 1.442695
      %v1107 = vpow.pop %v1106
      %v1108 = vsel %vm1059, %v1093, 0.0
      %1109 = vadd.xlane.f32.xlu0 %v1108
      %v1110 = vpop.xlane.xlu0 %1109
      %v1111 = vsel %vm1059, %v1095, 0.0
      %1112 = vadd.xlane.f32.xlu0 %v1111
      %v1113 = vpop.xlane.xlu0 %1112
      %v1114 = vsel %vm1059, %v1097, 0.0
      %1115 = vadd.xlane.f32.xlu0 %v1114
      %v1116 = vpop.xlane.xlu0 %1115
      %v1117 = vsel %vm1059, %v1099, 0.0
      %1118 = vadd.xlane.f32.xlu0 %v1117
      %v1119 = vpop.xlane.xlu0 %1118
      %v1120 = vsel %vm1059, %v1101, 0.0
      %1121 = vadd.xlane.f32.xlu0 %v1120
      %v1122 = vpop.xlane.xlu0 %1121
      %v1123 = vsel %vm1059, %v1103, 0.0
      %1124 = vadd.xlane.f32.xlu0 %v1123
      %v1125 = vpop.xlane.xlu0 %1124
      %v1126 = vsel %vm1059, %v1105, 0.0
      %1127 = vadd.xlane.f32.xlu0 %v1126
      %v1128 = vpop.xlane.xlu0 %1127
      %v1129 = vsel %vm1059, %v1107, 0.0
      %1130 = vadd.xlane.f32.xlu0 %v1129
      %v1131 = vpop.xlane.xlu0 %1130
      %v1132 = vpack.c.bf16 %v1095, %v1093
      %v1133 = vpack.c.bf16 %v1099, %v1097
      %v1134 = vpack.c.bf16 %v1103, %v1101
      %v1135 = vpack.c.bf16 %v1107, %v1105
      %v1136 = vld [vmem:[#allocation4] sm:$0xff]
      %v1137 = vld [vmem:[#allocation4 + $0x8] sm:$0xff]
      %v1138 = vld [vmem:[#allocation4 + $0x10] sm:$0xff]
      %v1139 = vld [vmem:[#allocation4 + $0x18] sm:$0xff]
      %v1141 = vsel %vm1059, %v1132, 0
      %v1144 = vsel %vm1059, %v1133, 0
      %v1147 = vsel %vm1059, %v1134, 0
      %v1150 = vsel %vm1059, %v1135, 0
      %1152 = vmatprep.subr.bf16.mxu0 0
      %1153 = vmatpush1.bf16.msra.mxu0 %v1136
      %1154 = vmatprep.subr.bf16.mxu0 0
      %1155 = vmatpush1.bf16.msra.mxu0 %v1137
      %1156 = vmatprep.subr.bf16.mxu0 0
      %1157 = vmatpush1.bf16.msra.mxu0 %v1138
      %1158 = vmatprep.subr.bf16.mxu0 0
      %1159 = vmatpush1.bf16.msra.mxu0 %v1139
      %1160 = vmatprep.subr.bf16.mxu0 0
      %1161 = vmatpush1.bf16.msra.mxu0 0
      %1162 = vmatprep.subr.bf16.mxu0 0
      %1163 = vmatpush1.bf16.msra.mxu0 0
      %1164 = vmatprep.subr.bf16.mxu0 0
      %1165 = vmatpush1.bf16.msra.mxu0 0
      %1166 = vmatprep.subr.bf16.mxu0 0
      %1167 = vmatpush1.bf16.msra.mxu0 0
      %1168 = vmatprep.subr.bf16.mxu0 0
      %1169 = vmatpush1.bf16.msra.mxu0 0
      %1170 = vmatprep.subr.bf16.mxu0 0
      %1171 = vmatpush1.bf16.msra.mxu0 0
      %1172 = vmatprep.subr.bf16.mxu0 0
      %1173 = vmatpush1.bf16.msra.mxu0 0
      %1174 = vmatprep.subr.bf16.mxu0 0
      %1175 = vmatpush1.bf16.msra.mxu0 0
      %1176 = vmatprep.subr.bf16.mxu0 0
      %1177 = vmatpush1.bf16.msra.mxu0 0
      %1178 = vmatprep.subr.bf16.mxu0 0
      %1179 = vmatpush1.bf16.msra.mxu0 0
      %1180 = vmatprep.subr.bf16.mxu0 0
      %1181 = vmatpush1.bf16.msra.mxu0 0
      %1182 = vmatprep.subr.bf16.mxu0 0
      %1183 = vmatpush1.bf16.msra.mxu0 0
      %1184 = vmatprep.mubr.bf16.mxu0 0
      %1185 = vmatmul.mubr.bf16.gmra.mrb[0].mxu0 %v1141
      %v1186 = vpop.f32.mrb[0].mxu0
      %v1187 = vadd.f32 0.0, %v1186
      %v1188 = vpop.f32.mrb[0].mxu0
      %v1189 = vpop.f32.mrb[0].mxu0
      %v1190 = vadd.f32 0.0, %v1189
      %v1191 = vpop.f32.mrb[0].mxu0
      %1192 = vmatprep.mubr.bf16.mxu0 0
      %1193 = vmatmul.mubr.bf16.gmra.mrb[0].mxu0 %v1144
      %v1194 = vpop.f32.mrb[0].mxu0
      %v1195 = vadd.f32 0.0, %v1194
      %v1196 = vpop.f32.mrb[0].mxu0
      %v1197 = vpop.f32.mrb[0].mxu0
      %v1198 = vadd.f32 0.0, %v1197
      %v1199 = vpop.f32.mrb[0].mxu0
      %1200 = vmatprep.mubr.bf16.mxu0 0
      %1201 = vmatmul.mubr.bf16.gmra.mrb[0].mxu0 %v1147
      %v1202 = vpop.f32.mrb[0].mxu0
      %v1203 = vadd.f32 0.0, %v1202
      %v1204 = vpop.f32.mrb[0].mxu0
      %v1205 = vpop.f32.mrb[0].mxu0
      %v1206 = vadd.f32 0.0, %v1205
      %v1207 = vpop.f32.mrb[0].mxu0
      %1208 = vmatprep.mubr.bf16.mxu0 0
      %1209 = vmatmul.mubr.bf16.gmra.mrb[0].mxu0 %v1150
      %v1210 = vpop.f32.mrb[0].mxu0
      %v1211 = vadd.f32 0.0, %v1210
      %v1212 = vpop.f32.mrb[0].mxu0
      %v1213 = vpop.f32.mrb[0].mxu0
      %v1214 = vadd.f32 0.0, %v1213
      %v1215 = vpop.f32.mrb[0].mxu0
      %1216 = vdwg.mxu0
      %v1217 = vrcp.pop %v1110
      %v1218 = vrcp.pop %v1113
      %v1219 = vrcp.pop %v1116
      %v1220 = vrcp.pop %v1119
      %v1221 = vrcp.pop %v1122
      %v1222 = vrcp.pop %v1125
      %v1223 = vrcp.pop %v1128
      %v1224 = vrcp.pop %v1131
      %v1225 = vmul.f32 %v1187, %v1217
      %v1226 = vmul.f32 %v1190, %v1218
      %v1227 = vmul.f32 %v1195, %v1219
      %v1228 = vmul.f32 %v1198, %v1220
      %v1229 = vmul.f32 %v1203, %v1221
      %v1230 = vmul.f32 %v1206, %v1222
      %v1231 = vmul.f32 %v1211, %v1223
      %v1232 = vmul.f32 %v1214, %v1224
      %v1233 = vpack.c.bf16 %v1226, %v1225
      %v1234 = vpack.c.bf16 %v1228, %v1227
      %v1235 = vpack.c.bf16 %v1230, %v1229
      %v1236 = vpack.c.bf16 %v1232, %v1231
      %v1237 = vld [vmem:[%s4] sm:$0xf]
      %v1238 = vld [vmem:[%s4 + $0x4] sm:$0xf]
      %v1239 = vld [vmem:[%s4 + $0x8] sm:$0xf]
      %v1240 = vld [vmem:[%s4 + $0xc] sm:$0xf]
      %v1241 = vld [vmem:[%s5] sm:$0x1]
      %v1243 = vlaneseq
      %v1244 = vshrl.u32 %v1243, 7
      %v1245 = vsub.s32 0, %v1244
      %v1246 = vrot.slane %v1241, %v1245
      %v1252 = vunpack.c.l.b16 %v1237
      %v1253 = vunpack.c.l.b16 %v1238
      %v1254 = vunpack.c.l.b16 %v1239
      %v1255 = vunpack.c.l.b16 %v1240
      %v1256 = vpack.c.b16 %v1253, %v1252
      %v1257 = vpack.c.b16 %v1255, %v1254
      %v1261 = vsel %vm981, %v1233, 0
      %v1264 = vsel %vm981, %v1234, 0
      %v1267 = vsel %vm981, %v1235, 0
      %v1270 = vsel %vm981, %v1236, 0
      %1272 = vmatprep.subr.bf16.mxu0 0
      %1273 = vmatpush1.bf16.msra.mxu0 %v1256
      %1274 = vmatprep.subr.bf16.mxu0 0
      %1275 = vmatpush1.bf16.msra.mxu0 %v1257
      %1276 = vmatprep.subr.bf16.mxu0 0
      %1277 = vmatpush1.bf16.msra.mxu0 0
      %1278 = vmatprep.subr.bf16.mxu0 0
      %1279 = vmatpush1.bf16.msra.mxu0 0
      %1280 = vmatprep.subr.bf16.mxu0 0
      %1281 = vmatpush1.bf16.msra.mxu0 0
      %1282 = vmatprep.subr.bf16.mxu0 0
      %1283 = vmatpush1.bf16.msra.mxu0 0
      %1284 = vmatprep.subr.bf16.mxu0 0
      %1285 = vmatpush1.bf16.msra.mxu0 0
      %1286 = vmatprep.subr.bf16.mxu0 0
      %1287 = vmatpush1.bf16.msra.mxu0 0
      %1288 = vmatprep.subr.bf16.mxu0 0
      %1289 = vmatpush1.bf16.msra.mxu0 0
      %1290 = vmatprep.subr.bf16.mxu0 0
      %1291 = vmatpush1.bf16.msra.mxu0 0
      %1292 = vmatprep.subr.bf16.mxu0 0
      %1293 = vmatpush1.bf16.msra.mxu0 0
      %1294 = vmatprep.subr.bf16.mxu0 0
      %1295 = vmatpush1.bf16.msra.mxu0 0
      %1296 = vmatprep.subr.bf16.mxu0 0
      %1297 = vmatpush1.bf16.msra.mxu0 0
      %1298 = vmatprep.subr.bf16.mxu0 0
      %1299 = vmatpush1.bf16.msra.mxu0 0
      %1300 = vmatprep.subr.bf16.mxu0 0
      %1301 = vmatpush1.bf16.msra.mxu0 0
      %1302 = vmatprep.subr.bf16.mxu0 0
      %1303 = vmatpush1.bf16.msra.mxu0 0
      %1304 = vmatprep.mubr.bf16.mxu0 0
      %1305 = vmatmul.mubr.bf16.gmra.mrb[0].mxu0 %v1261
      %v1306 = vpop.f32.mrb[0].mxu0
      %v1307 = vadd.f32 %v1246, %v1306
      %v1308 = vpop.f32.mrb[0].mxu0
      %v1309 = vpop.f32.mrb[0].mxu0
      %v1310 = vadd.f32 %v1246, %v1309
      %v1311 = vpop.f32.mrb[0].mxu0
      %1312 = vmatprep.mubr.bf16.mxu0 0
      %1313 = vmatmul.mubr.bf16.gmra.mrb[0].mxu0 %v1264
      %v1314 = vpop.f32.mrb[0].mxu0
      %v1315 = vadd.f32 %v1246, %v1314
      %v1316 = vpop.f32.mrb[0].mxu0
      %v1317 = vpop.f32.mrb[0].mxu0
      %v1318 = vadd.f32 %v1246, %v1317
      %v1319 = vpop.f32.mrb[0].mxu0
      %1320 = vmatprep.mubr.bf16.mxu0 0
      %1321 = vmatmul.mubr.bf16.gmra.mrb[0].mxu0 %v1267
      %v1322 = vpop.f32.mrb[0].mxu0
      %v1323 = vadd.f32 %v1246, %v1322
      %v1324 = vpop.f32.mrb[0].mxu0
      %v1325 = vpop.f32.mrb[0].mxu0
      %v1326 = vadd.f32 %v1246, %v1325
      %v1327 = vpop.f32.mrb[0].mxu0
      %1328 = vmatprep.mubr.bf16.mxu0 0
      %1329 = vmatmul.mubr.bf16.gmra.mrb[0].mxu0 %v1270
      %v1330 = vpop.f32.mrb[0].mxu0
      %v1331 = vadd.f32 %v1246, %v1330
      %v1332 = vpop.f32.mrb[0].mxu0
      %v1333 = vpop.f32.mrb[0].mxu0
      %v1334 = vadd.f32 %v1246, %v1333
      %v1335 = vpop.f32.mrb[0].mxu0
      %1336 = vdwg.mxu0
      %s1337 = scalar_lea.vmem [#allocation5], %s970
      %v1338 = vld [vmem:[%s1337] sm:$0xff]
      %v1339 = vld [vmem:[%s1337 + $0x8] sm:$0xff]
      %v1340 = vld [vmem:[%s1337 + $0x10] sm:$0xff]
      %v1341 = vld [vmem:[%s1337 + $0x18] sm:$0xff]
      %v1342 = vld [vmem:[%s1337 + $0x20] sm:$0xff]
      %v1343 = vld [vmem:[%s1337 + $0x28] sm:$0xff]
      %v1344 = vld [vmem:[%s1337 + $0x30] sm:$0xff]
      %v1345 = vld [vmem:[%s1337 + $0x38] sm:$0xff]
      %v1346 = vadd.f32 %v1338, %v1307
      %v1347 = vadd.f32 %v1339, %v1310
      %v1348 = vadd.f32 %v1340, %v1315
      %v1349 = vadd.f32 %v1341, %v1318
      %v1350 = vadd.f32 %v1342, %v1323
      %v1351 = vadd.f32 %v1343, %v1326
      %v1352 = vadd.f32 %v1344, %v1331
      %v1353 = vadd.f32 %v1345, %v1334
      %v1354 = vsel %vm981, %v1346, 0.0
      %1355 = vadd.xlane.f32.xlu0 %v1354
      %v1356 = vpop.xlane.xlu0 %1355
      %v1357 = vsel %vm981, %v1347, 0.0
      %1358 = vadd.xlane.f32.xlu0 %v1357
      %v1359 = vpop.xlane.xlu0 %1358
      %v1360 = vsel %vm981, %v1348, 0.0
      %1361 = vadd.xlane.f32.xlu0 %v1360
      %v1362 = vpop.xlane.xlu0 %1361
      %v1363 = vsel %vm981, %v1349, 0.0
      %1364 = vadd.xlane.f32.xlu0 %v1363
      %v1365 = vpop.xlane.xlu0 %1364
      %v1366 = vsel %vm981, %v1350, 0.0
      %1367 = vadd.xlane.f32.xlu0 %v1366
      %v1368 = vpop.xlane.xlu0 %1367
      %v1369 = vsel %vm981, %v1351, 0.0
      %1370 = vadd.xlane.f32.xlu0 %v1369
      %v1371 = vpop.xlane.xlu0 %1370
      %v1372 = vsel %vm981, %v1352, 0.0
      %1373 = vadd.xlane.f32.xlu0 %v1372
      %v1374 = vpop.xlane.xlu0 %1373
      %v1375 = vsel %vm981, %v1353, 0.0
      %1376 = vadd.xlane.f32.xlu0 %v1375
      %v1377 = vpop.xlane.xlu0 %1376
      %v1378 = vrcp.pop 32.0
      %v1379 = vmul.f32 %v1356, %v1378
      %v1380 = vmul.f32 %v1359, %v1378
      %v1381 = vmul.f32 %v1362, %v1378
      %v1382 = vmul.f32 %v1365, %v1378
      %v1383 = vmul.f32 %v1368, %v1378
      %v1384 = vmul.f32 %v1371, %v1378
      %v1385 = vmul.f32 %v1374, %v1378
      %v1386 = vmul.f32 %v1377, %v1378
      %v1387 = vsub.f32 %v1346, %v1379
      %v1388 = vsub.f32 %v1347, %v1380
      %v1389 = vsub.f32 %v1348, %v1381
      %v1390 = vsub.f32 %v1349, %v1382
      %v1391 = vsub.f32 %v1350, %v1383
      %v1392 = vsub.f32 %v1351, %v1384
      %v1393 = vsub.f32 %v1352, %v1385
      %v1394 = vsub.f32 %v1353, %v1386
      %v1395 = vmul.f32 %v1387, %v1387
      %v1396 = vmul.f32 %v1388, %v1388
      %v1397 = vmul.f32 %v1389, %v1389
      %v1398 = vmul.f32 %v1390, %v1390
      %v1399 = vmul.f32 %v1391, %v1391
      %v1400 = vmul.f32 %v1392, %v1392
      %v1401 = vmul.f32 %v1393, %v1393
      %v1402 = vmul.f32 %v1394, %v1394
      %v1403 = vsel %vm981, %v1395, 0.0
      %1404 = vadd.xlane.f32.xlu0 %v1403
      %v1405 = vpop.xlane.xlu0 %1404
      %v1406 = vsel %vm981, %v1396, 0.0
      %1407 = vadd.xlane.f32.xlu0 %v1406
      %v1408 = vpop.xlane.xlu0 %1407
      %v1409 = vsel %vm981, %v1397, 0.0
      %1410 = vadd.xlane.f32.xlu0 %v1409
      %v1411 = vpop.xlane.xlu0 %1410
      %v1412 = vsel %vm981, %v1398, 0.0
      %1413 = vadd.xlane.f32.xlu0 %v1412
      %v1414 = vpop.xlane.xlu0 %1413
      %v1415 = vsel %vm981, %v1399, 0.0
      %1416 = vadd.xlane.f32.xlu0 %v1415
      %v1417 = vpop.xlane.xlu0 %1416
      %v1418 = vsel %vm981, %v1400, 0.0
      %1419 = vadd.xlane.f32.xlu0 %v1418
      %v1420 = vpop.xlane.xlu0 %1419
      %v1421 = vsel %vm981, %v1401, 0.0
      %1422 = vadd.xlane.f32.xlu0 %v1421
      %v1423 = vpop.xlane.xlu0 %1422
      %v1424 = vsel %vm981, %v1402, 0.0
      %1425 = vadd.xlane.f32.xlu0 %v1424
      %v1426 = vpop.xlane.xlu0 %1425
      %v1427 = vmul.f32 %v1405, %v1378
      %v1428 = vmul.f32 %v1408, %v1378
      %v1429 = vmul.f32 %v1411, %v1378
      %v1430 = vmul.f32 %v1414, %v1378
      %v1431 = vmul.f32 %v1417, %v1378
      %v1432 = vmul.f32 %v1420, %v1378
      %v1433 = vmul.f32 %v1423, %v1378
      %v1434 = vmul.f32 %v1426, %v1378
      %v1435 = vadd.f32 %v1427, 1e-05
      %v1436 = vadd.f32 %v1428, 1e-05
      %v1437 = vadd.f32 %v1429, 1e-05
      %v1438 = vadd.f32 %v1430, 1e-05
      %v1439 = vadd.f32 %v1431, 1e-05
      %v1440 = vadd.f32 %v1432, 1e-05
      %v1441 = vadd.f32 %v1433, 1e-05
      %v1442 = vadd.f32 %v1434, 1e-05
      %v1443 = vrsqrt.pop %v1435
      %v1444 = vrsqrt.pop %v1436
      %v1445 = vrsqrt.pop %v1437
      %v1446 = vrsqrt.pop %v1438
      %v1447 = vrsqrt.pop %v1439
      %v1448 = vrsqrt.pop %v1440
      %v1449 = vrsqrt.pop %v1441
      %v1450 = vrsqrt.pop %v1442
      %v1451 = vmul.f32 %v1387, %v1443
      %v1452 = vmul.f32 %v1388, %v1444
      %v1453 = vmul.f32 %v1389, %v1445
      %v1454 = vmul.f32 %v1390, %v1446
      %v1455 = vmul.f32 %v1391, %v1447
      %v1456 = vmul.f32 %v1392, %v1448
      %v1457 = vmul.f32 %v1393, %v1449
      %v1458 = vmul.f32 %v1394, %v1450
      %v1459 = vld [vmem:[%s6] sm:$0x1]
      %v1461 = vlaneseq
      %v1462 = vshrl.u32 %v1461, 7
      %v1463 = vsub.s32 0, %v1462
      %v1464 = vrot.slane %v1459, %v1463
      %v1466 = vmul.f32 %v1451, %v1464
      %v1467 = vmul.f32 %v1452, %v1464
      %v1468 = vmul.f32 %v1453, %v1464
      %v1469 = vmul.f32 %v1454, %v1464
      %v1470 = vmul.f32 %v1455, %v1464
      %v1471 = vmul.f32 %v1456, %v1464
      %v1472 = vmul.f32 %v1457, %v1464
      %v1473 = vmul.f32 %v1458, %v1464
      %v1474 = vld [vmem:[%s7] sm:$0x1]
      %v1476 = vlaneseq
      %v1477 = vshrl.u32 %v1476, 7
      %v1478 = vsub.s32 0, %v1477
      %v1479 = vrot.slane %v1474, %v1478
      %v1481 = vadd.f32 %v1466, %v1479
      %v1482 = vadd.f32 %v1467, %v1479
      %v1483 = vadd.f32 %v1468, %v1479
      %v1484 = vadd.f32 %v1469, %v1479
      %v1485 = vadd.f32 %v1470, %v1479
      %v1486 = vadd.f32 %v1471, %v1479
      %v1487 = vadd.f32 %v1472, %v1479
      %v1488 = vadd.f32 %v1473, %v1479
      %v1489 = vpack.c.bf16 %v1482, %v1481
      %v1490 = vpack.c.bf16 %v1484, %v1483
      %v1491 = vpack.c.bf16 %v1486, %v1485
      %v1492 = vpack.c.bf16 %v1488, %v1487
      %v1493 = vld [vmem:[%s8] sm:$0xf]
      %v1494 = vld [vmem:[%s8 + $0x4] sm:$0xf]
      %v1495 = vld [vmem:[%s8 + $0x8] sm:$0xf]
      %v1496 = vld [vmem:[%s8 + $0xc] sm:$0xf]
      %v1497 = vld [vmem:[%s9] sm:$0x1]
      %v1499 = vlaneseq
      %v1500 = vshrl.u32 %v1499, 7
      %v1501 = vsub.s32 0, %v1500
      %v1502 = vrot.slane %v1497, %v1501
      %v1508 = vunpack.c.l.b16 %v1493
      %v1509 = vunpack.c.l.b16 %v1494
      %v1510 = vunpack.c.l.b16 %v1495
      %v1511 = vunpack.c.l.b16 %v1496
      %v1512 = vpack.c.b16 %v1509, %v1508
      %v1513 = vpack.c.b16 %v1511, %v1510
      %v1517 = vsel %vm981, %v1489, 0
      %v1520 = vsel %vm981, %v1490, 0
      %v1523 = vsel %vm981, %v1491, 0
      %v1526 = vsel %vm981, %v1492, 0
      %1528 = vmatprep.subr.bf16.mxu0 0
      %1529 = vmatpush1.bf16.msra.mxu0 %v1512
      %1530 = vmatprep.subr.bf16.mxu0 0
      %1531 = vmatpush1.bf16.msra.mxu0 %v1513
      %1532 = vmatprep.subr.bf16.mxu0 0
      %1533 = vmatpush1.bf16.msra.mxu0 0
      %1534 = vmatprep.subr.bf16.mxu0 0
      %1535 = vmatpush1.bf16.msra.mxu0 0
      %1536 = vmatprep.subr.bf16.mxu0 0
      %1537 = vmatpush1.bf16.msra.mxu0 0
      %1538 = vmatprep.subr.bf16.mxu0 0
      %1539 = vmatpush1.bf16.msra.mxu0 0
      %1540 = vmatprep.subr.bf16.mxu0 0
      %1541 = vmatpush1.bf16.msra.mxu0 0
      %1542 = vmatprep.subr.bf16.mxu0 0
      %1543 = vmatpush1.bf16.msra.mxu0 0
      %1544 = vmatprep.subr.bf16.mxu0 0
      %1545 = vmatpush1.bf16.msra.mxu0 0
      %1546 = vmatprep.subr.bf16.mxu0 0
      %1547 = vmatpush1.bf16.msra.mxu0 0
      %1548 = vmatprep.subr.bf16.mxu0 0
      %1549 = vmatpush1.bf16.msra.mxu0 0
      %1550 = vmatprep.subr.bf16.mxu0 0
      %1551 = vmatpush1.bf16.msra.mxu0 0
      %1552 = vmatprep.subr.bf16.mxu0 0
      %1553 = vmatpush1.bf16.msra.mxu0 0
      %1554 = vmatprep.subr.bf16.mxu0 0
      %1555 = vmatpush1.bf16.msra.mxu0 0
      %1556 = vmatprep.subr.bf16.mxu0 0
      %1557 = vmatpush1.bf16.msra.mxu0 0
      %1558 = vmatprep.subr.bf16.mxu0 0
      %1559 = vmatpush1.bf16.msra.mxu0 0
      %1560 = vmatprep.mubr.bf16.mxu0 0
      %1561 = vmatmul.mubr.bf16.gmra.mrb[0].mxu0 %v1517
      %v1562 = vpop.f32.mrb[0].mxu0
      %v1563 = vadd.f32 %v1502, %v1562
      %v1564 = vpop.f32.mrb[0].mxu0
      %v1565 = vpop.f32.mrb[0].mxu0
      %v1566 = vadd.f32 %v1502, %v1565
      %v1567 = vpop.f32.mrb[0].mxu0
      %1568 = vmatprep.mubr.bf16.mxu0 0
      %1569 = vmatmul.mubr.bf16.gmra.mrb[0].mxu0 %v1520
      %v1570 = vpop.f32.mrb[0].mxu0
      %v1571 = vadd.f32 %v1502, %v1570
      %v1572 = vpop.f32.mrb[0].mxu0
      %v1573 = vpop.f32.mrb[0].mxu0
      %v1574 = vadd.f32 %v1502, %v1573
      %v1575 = vpop.f32.mrb[0].mxu0
      %1576 = vmatprep.mubr.bf16.mxu0 0
      %1577 = vmatmul.mubr.bf16.gmra.mrb[0].mxu0 %v1523
      %v1578 = vpop.f32.mrb[0].mxu0
      %v1579 = vadd.f32 %v1502, %v1578
      %v1580 = vpop.f32.mrb[0].mxu0
      %v1581 = vpop.f32.mrb[0].mxu0
      %v1582 = vadd.f32 %v1502, %v1581
      %v1583 = vpop.f32.mrb[0].mxu0
      %1584 = vmatprep.mubr.bf16.mxu0 0
      %1585 = vmatmul.mubr.bf16.gmra.mrb[0].mxu0 %v1526
      %v1586 = vpop.f32.mrb[0].mxu0
      %v1587 = vadd.f32 %v1502, %v1586
      %v1588 = vpop.f32.mrb[0].mxu0
      %v1589 = vpop.f32.mrb[0].mxu0
      %v1590 = vadd.f32 %v1502, %v1589
      %v1591 = vpop.f32.mrb[0].mxu0
      %1592 = vdwg.mxu0
      %v1593 = vmul.f32 %v1563, 0.5
      %v1594 = vmul.f32 %v1566, 0.5
      %v1595 = vmul.f32 %v1571, 0.5
      %v1596 = vmul.f32 %v1574, 0.5
      %v1597 = vmul.f32 %v1579, 0.5
      %v1598 = vmul.f32 %v1582, 0.5
      %v1599 = vmul.f32 %v1587, 0.5
      %v1600 = vmul.f32 %v1590, 0.5
      %v1601 = vmul.f32 %v1563, 0.70710677
      %v1602 = vmul.f32 %v1566, 0.70710677
      %v1603 = vmul.f32 %v1571, 0.70710677
      %v1604 = vmul.f32 %v1574, 0.70710677
      %v1605 = vmul.f32 %v1579, 0.70710677
      %v1606 = vmul.f32 %v1582, 0.70710677
      %v1607 = vmul.f32 %v1587, 0.70710677
      %v1608 = vmul.f32 %v1590, 0.70710677
      %v1609 = verf.f32.pop %v1601
      %v1610 = verf.f32.pop %v1602
      %v1611 = verf.f32.pop %v1603
      %v1612 = verf.f32.pop %v1604
      %v1613 = verf.f32.pop %v1605
      %v1614 = verf.f32.pop %v1606
      %v1615 = verf.f32.pop %v1607
      %v1616 = verf.f32.pop %v1608
      %v1617 = vadd.f32 %v1609, 1.0
      %v1618 = vadd.f32 %v1610, 1.0
      %v1619 = vadd.f32 %v1611, 1.0
      %v1620 = vadd.f32 %v1612, 1.0
      %v1621 = vadd.f32 %v1613, 1.0
      %v1622 = vadd.f32 %v1614, 1.0
      %v1623 = vadd.f32 %v1615, 1.0
      %v1624 = vadd.f32 %v1616, 1.0
      %v1625 = vmul.f32 %v1593, %v1617
      %v1626 = vmul.f32 %v1594, %v1618
      %v1627 = vmul.f32 %v1595, %v1619
      %v1628 = vmul.f32 %v1596, %v1620
      %v1629 = vmul.f32 %v1597, %v1621
      %v1630 = vmul.f32 %v1598, %v1622
      %v1631 = vmul.f32 %v1599, %v1623
      %v1632 = vmul.f32 %v1600, %v1624
      %v1633 = vpack.c.bf16 %v1626, %v1625
      %v1634 = vpack.c.bf16 %v1628, %v1627
      %v1635 = vpack.c.bf16 %v1630, %v1629
      %v1636 = vpack.c.bf16 %v1632, %v1631
      %v1637 = vld [vmem:[%s10] sm:$0xf]
      %v1638 = vld [vmem:[%s10 + $0x4] sm:$0xf]
      %v1639 = vld [vmem:[%s10 + $0x8] sm:$0xf]
      %v1640 = vld [vmem:[%s10 + $0xc] sm:$0xf]
      %v1641 = vld [vmem:[%s11] sm:$0x1]
      %v1643 = vlaneseq
      %v1644 = vshrl.u32 %v1643, 7
      %v1645 = vsub.s32 0, %v1644
      %v1646 = vrot.slane %v1641, %v1645
      %v1652 = vunpack.c.l.b16 %v1637
      %v1653 = vunpack.c.l.b16 %v1638
      %v1654 = vunpack.c.l.b16 %v1639
      %v1655 = vunpack.c.l.b16 %v1640
      %v1656 = vpack.c.b16 %v1653, %v1652
      %v1657 = vpack.c.b16 %v1655, %v1654
      %v1661 = vsel %vm981, %v1633, 0
      %v1664 = vsel %vm981, %v1634, 0
      %v1667 = vsel %vm981, %v1635, 0
      %v1670 = vsel %vm981, %v1636, 0
      %1672 = vmatprep.subr.bf16.mxu0 0
      %1673 = vmatpush1.bf16.msra.mxu0 %v1656
      %1674 = vmatprep.subr.bf16.mxu0 0
      %1675 = vmatpush1.bf16.msra.mxu0 %v1657
      %1676 = vmatprep.subr.bf16.mxu0 0
      %1677 = vmatpush1.bf16.msra.mxu0 0
      %1678 = vmatprep.subr.bf16.mxu0 0
      %1679 = vmatpush1.bf16.msra.mxu0 0
      %1680 = vmatprep.subr.bf16.mxu0 0
      %1681 = vmatpush1.bf16.msra.mxu0 0
      %1682 = vmatprep.subr.bf16.mxu0 0
      %1683 = vmatpush1.bf16.msra.mxu0 0
      %1684 = vmatprep.subr.bf16.mxu0 0
      %1685 = vmatpush1.bf16.msra.mxu0 0
      %1686 = vmatprep.subr.bf16.mxu0 0
      %1687 = vmatpush1.bf16.msra.mxu0 0
      %1688 = vmatprep.subr.bf16.mxu0 0
      %1689 = vmatpush1.bf16.msra.mxu0 0
      %1690 = vmatprep.subr.bf16.mxu0 0
      %1691 = vmatpush1.bf16.msra.mxu0 0
      %1692 = vmatprep.subr.bf16.mxu0 0
      %1693 = vmatpush1.bf16.msra.mxu0 0
      %1694 = vmatprep.subr.bf16.mxu0 0
      %1695 = vmatpush1.bf16.msra.mxu0 0
      %1696 = vmatprep.subr.bf16.mxu0 0
      %1697 = vmatpush1.bf16.msra.mxu0 0
      %1698 = vmatprep.subr.bf16.mxu0 0
      %1699 = vmatpush1.bf16.msra.mxu0 0
      %1700 = vmatprep.subr.bf16.mxu0 0
      %1701 = vmatpush1.bf16.msra.mxu0 0
      %1702 = vmatprep.subr.bf16.mxu0 0
      %1703 = vmatpush1.bf16.msra.mxu0 0
      %1704 = vmatprep.mubr.bf16.mxu0 0
      %1705 = vmatmul.mubr.bf16.gmra.mrb[0].mxu0 %v1661
      %v1706 = vpop.f32.mrb[0].mxu0
      %v1707 = vadd.f32 %v1646, %v1706
      %v1708 = vpop.f32.mrb[0].mxu0
      %v1709 = vpop.f32.mrb[0].mxu0
      %v1710 = vadd.f32 %v1646, %v1709
      %v1711 = vpop.f32.mrb[0].mxu0
      %1712 = vmatprep.mubr.bf16.mxu0 0
      %1713 = vmatmul.mubr.bf16.gmra.mrb[0].mxu0 %v1664
      %v1714 = vpop.f32.mrb[0].mxu0
      %v1715 = vadd.f32 %v1646, %v1714
      %v1716 = vpop.f32.mrb[0].mxu0
      %v1717 = vpop.f32.mrb[0].mxu0
      %v1718 = vadd.f32 %v1646, %v1717
      %v1719 = vpop.f32.mrb[0].mxu0
      %1720 = vmatprep.mubr.bf16.mxu0 0
      %1721 = vmatmul.mubr.bf16.gmra.mrb[0].mxu0 %v1667
      %v1722 = vpop.f32.mrb[0].mxu0
      %v1723 = vadd.f32 %v1646, %v1722
      %v1724 = vpop.f32.mrb[0].mxu0
      %v1725 = vpop.f32.mrb[0].mxu0
      %v1726 = vadd.f32 %v1646, %v1725
      %v1727 = vpop.f32.mrb[0].mxu0
      %1728 = vmatprep.mubr.bf16.mxu0 0
      %1729 = vmatmul.mubr.bf16.gmra.mrb[0].mxu0 %v1670
      %v1730 = vpop.f32.mrb[0].mxu0
      %v1731 = vadd.f32 %v1646, %v1730
      %v1732 = vpop.f32.mrb[0].mxu0
      %v1733 = vpop.f32.mrb[0].mxu0
      %v1734 = vadd.f32 %v1646, %v1733
      %v1735 = vpop.f32.mrb[0].mxu0
      %1736 = vdwg.mxu0
      %v1737 = vadd.f32 %v1346, %v1707
      %v1738 = vadd.f32 %v1347, %v1710
      %v1739 = vadd.f32 %v1348, %v1715
      %v1740 = vadd.f32 %v1349, %v1718
      %v1741 = vadd.f32 %v1350, %v1723
      %v1742 = vadd.f32 %v1351, %v1726
      %v1743 = vadd.f32 %v1352, %v1731
      %v1744 = vadd.f32 %v1353, %v1734
      %v1745 = vpack.c.bf16 %v1738, %v1737
      %v1746 = vpack.c.bf16 %v1740, %v1739
      %v1747 = vpack.c.bf16 %v1742, %v1741
      %v1748 = vpack.c.bf16 %v1744, %v1743
      %v1753 = vunpack.c.l.b16 %v1745
      %v1754 = vunpack.c.h.b16 %v1745
      %v1755 = vunpack.c.l.b16 %v1746
      %v1756 = vunpack.c.h.b16 %v1746
      %v1757 = vunpack.c.l.b16 %v1747
      %v1758 = vunpack.c.h.b16 %v1747
      %v1759 = vunpack.c.l.b16 %v1748
      %v1760 = vunpack.c.h.b16 %v1748
      %v1761 = vpack.c.b16 %v1753, %v1753
      %v1762 = vpack.c.b16 %v1754, %v1754
      %v1763 = vpack.c.b16 %v1755, %v1755
      %v1764 = vpack.c.b16 %v1756, %v1756
      %v1765 = vpack.c.b16 %v1757, %v1757
      %v1766 = vpack.c.b16 %v1758, %v1758
      %v1767 = vpack.c.b16 %v1759, %v1759
      %v1768 = vpack.c.b16 %v1760, %v1760
      %vm1777 = vcmask 257024
      %1778 = vst.msk [vmem:[%s435] sm:$0xf] %vm1777, %v1761
      %1779 = vst.msk [vmem:[%s435 + $0x4] sm:$0xf] %vm1777, %v1762
      %1780 = vst.msk [vmem:[%s435 + $0x8] sm:$0xf] %vm1777, %v1763
      %1781 = vst.msk [vmem:[%s435 + $0xc] sm:$0xf] %vm1777, %v1764
      %1782 = vst.msk [vmem:[%s435 + $0x10] sm:$0xf] %vm1777, %v1765
      %1783 = vst.msk [vmem:[%s435 + $0x14] sm:$0xf] %vm1777, %v1766
      %1784 = vst.msk [vmem:[%s435 + $0x18] sm:$0xf] %vm1777, %v1767
      %1785 = vst.msk [vmem:[%s435 + $0x1c] sm:$0xf] %vm1777, %v1768
      %s1786 = smul.u32 8, %s28
      %p1787 = scmp.lt.s32.totalorder %s27, 1
      %s1788 = scalar_select %p1787, %s27, 1
      %p1789 = scmp.lt.s32.totalorder %s1786, 7
      %s1790 = scalar_select %p1789, %s1786, 7
      %s1791 = smul.addr %s1788, 8
      %s1792 = sadd.s32 %s1790, %s1791
      %s1793 = smul.addr %s1792, 4
      %s1794 = scalar_lea.vmem %s12, %s1793
      // Predicated region
      $region73: #{t2t_forward.3} parent=67 // pred_check
        %p1795 = pneg %p312
      $region74: #{t2t_forward.3} parent=67 // pred_check_branch
        %1797 = sbr.rel (%p1795) target = $region76
      $region75: #{t2t_forward.3} parent=67 // pred_region
        %s1798 = smul.u32 8, %s28
      $region76: #{t2t_forward.3} parent=67 // pred_fallthru
        _
    $region68: #{t2t_forward.3} parent=5 // pred_fallthru
      _
    %p1799 = scmp.le.s32.totalorder 2, %s18
    // Predicated region
    $region77: #{t2t_forward.3} parent=5 // pred_check
      %p1800 = pneg %p1799
    $region78: #{t2t_forward.3} parent=5 // pred_check_branch
      %1802 = sbr.rel (%p1800) target = $region80
    $region79: #{t2t_forward.3} parent=5 // pred_region
      %s1803 = ssub.s32 %s18, 2
      // Predicated region
      $region81: #{t2t_forward.3} parent=79 // pred_check
        %p1804 = pneg %p318
      $region82: #{t2t_forward.3} parent=79 // pred_check_branch
        %1806 = sbr.rel (%p1804) target = $region84
      $region83: #{t2t_forward.3} parent=79 // pred_region
        %s1807 = smul.u32 8, %s30
        %p1808 = scmp.lt.s32.totalorder %s29, 1
        %s1809 = scalar_select %p1808, %s29, 1
        %p1810 = scmp.lt.s32.totalorder %s1807, 7
        %s1811 = scalar_select %p1810, %s1807, 7
        %s1812 = smul.addr %s1809, 8
        %s1813 = sadd.s32 %s1811, %s1812
        %s1814 = smul.addr %s1813, 4
        %s1815 = scalar_lea.vmem %s12, %s1814
      $region84: #{t2t_forward.3} parent=79 // pred_fallthru
        _
    $region80: #{t2t_forward.3} parent=5 // pred_fallthru
      _
  $region6: #{t2t_forward.3} parent=0 // loop_footer
    %s22 = sadd.s32 1, %s18
  $region7: #{t2t_forward.3} parent=0 // loop_footer_branch
    %17 = sbr.rel target = $region3
  $region8: #{t2t_forward.3} parent=0 // loop_exit
    _

// kernel: t2t_forward.4
$region0: #{t2t_forward.4}
  #allocation0 [shape = 'u32[]', space=smem, size = 0x4, offset = 0x4, fixed_abs, tag = 'smem constant byte address 0x4 - core index']
  #allocation1 [shape = 'u32[144,128]{1,0:T(1,128)}', space=vmem, size = 0x12000, scoped, tag = 'internal scratch']
  #allocation2 [shape = 'bf16[16,32]{1,0:T(16,128)(2,1)}', space=vmem, size = 0x1000, scoped, tag = 'scratch operand']
  #allocation3 [shape = 'bf16[32,16]{1,0:T(16,128)(2,1)}', space=vmem, size = 0x2000, scoped, tag = 'scratch operand']
  #allocation4 [shape = 'bf16[16,32]{1,0:T(16,128)(2,1)}', space=vmem, size = 0x1000, scoped, tag = 'scratch operand']
  #allocation5 [shape = 'f32[16,32]{1,0:T(8,128)}', space=vmem, size = 0x2000, scoped, tag = 'scratch operand']
  %s0 = inlined_call_operand.vmem [shape: bf16[2,16,288], index: 0, kind: input, shape index: {}]
  %s1 = inlined_call_operand.vmem [shape: f32[1,288], index: 1, kind: input, shape index: {}]
  %s2 = inlined_call_operand.vmem [shape: f32[1,288], index: 2, kind: input, shape index: {}]
  %s3 = inlined_call_operand.vmem [shape: bf16[288,96], index: 3, kind: input, shape index: {}]
  %s4 = inlined_call_operand.vmem [shape: bf16[32,32], index: 4, kind: input, shape index: {}]
  %s5 = inlined_call_operand.vmem [shape: f32[1,32], index: 5, kind: input, shape index: {}]
  %s6 = inlined_call_operand.vmem [shape: f32[1,32], index: 6, kind: input, shape index: {}]
  %s7 = inlined_call_operand.vmem [shape: f32[1,32], index: 7, kind: input, shape index: {}]
  %s8 = inlined_call_operand.vmem [shape: bf16[32,32], index: 8, kind: input, shape index: {}]
  %s9 = inlined_call_operand.vmem [shape: f32[1,32], index: 9, kind: input, shape index: {}]
  %s10 = inlined_call_operand.vmem [shape: bf16[32,32], index: 10, kind: input, shape index: {}]
  %s11 = inlined_call_operand.vmem [shape: f32[1,32], index: 11, kind: input, shape index: {}]
  %s12 = inlined_call_operand.vmem [shape: bf16[2,16,32], index: 12, kind: output, shape index: {}]
  %s13 = sld [smem:[#allocation0]]
  $region85: #{t2t_forward.4} parent=0
    _
  %s15 = ssub.s32 1, %s13
  %s16 = scalar_select 0, %s15, %s13
  loop: start=0, step=1, limit=4
  $region2: #{t2t_forward.4} parent=0 // loop_pre_header
    _
  $region3: #{t2t_forward.4} parent=0 // loop_header
    %s18 = sphi 0, %s22
    %p19 = scmp.ge.s32.totalorder %s18, 4
    %s25 = sphi 0, %s37
    %s26 = sphi 0, %s33
    %s27 = sphi 0, %s25
    %s28 = sphi 0, %s26
    %s29 = sphi 0, %s27
    %s30 = sphi 0, %s28
    %s40 = sphi 0, %s42
    %s43 = sphi 0, %s40
    %s44 = sphi 0, %s43
    %s60 = sphi 0, %s44
    %s64 = sphi 0, %s64
    %s66 = sphi 0, %s64
    %s67 = sphi 0, %s66
    %s81 = sphi 0, %s67
    %s85 = sphi 0, %s85
    %s87 = sphi 0, %s85
    %s88 = sphi 0, %s87
    %s102 = sphi 0, %s88
    %s106 = sphi 0, %s106
    %s108 = sphi 0, %s106
    %s109 = sphi 0, %s108
    %s123 = sphi 0, %s109
    %s127 = sphi 0, %s127
    %s129 = sphi 0, %s127
    %s130 = sphi 0, %s129
    %s144 = sphi 0, %s130
    %s148 = sphi 0, %s148
    %s150 = sphi 0, %s148
    %s151 = sphi 0, %s150
    %s165 = sphi 0, %s151
    %s169 = sphi 0, %s169
    %s171 = sphi 0, %s169
    %s172 = sphi 0, %s171
    %s186 = sphi 0, %s172
    %s190 = sphi 0, %s190
    %s192 = sphi 0, %s190
    %s193 = sphi 0, %s192
    %s207 = sphi 0, %s193
    %s211 = sphi 0, %s211
    %s213 = sphi 0, %s211
    %s214 = sphi 0, %s213
    %s228 = sphi 0, %s214
    %s232 = sphi 0, %s232
    %s234 = sphi 0, %s232
    %s235 = sphi 0, %s234
    %s249 = sphi 0, %s235
    %s253 = sphi 0, %s253
    %s255 = sphi 0, %s253
    %s256 = sphi 0, %s255
    %s270 = sphi 0, %s256
    %s274 = sphi 0, %s274
    %s276 = sphi 0, %s274
    %s277 = sphi 0, %s276
    %s291 = sphi 0, %s277
    %s299 = sphi 0, %s301
    %s302 = sphi 0, %s299
    %s303 = sphi 0, %s302
    %s319 = sphi 0, %s303
  $region4: #{t2t_forward.4} parent=0 // loop_header_branch
    %21 = sbr.rel (%p19) target = $region8
  $region5: #{t2t_forward.4} parent=0 // loop_body
    %s23 = ssub.s32 %s18, 1
    %s24 = ssub.s32 %s18, 2
    %s31 = sadd.s32 1, %s26
    %p32 = scmp.ge.s32.totalorder %s31, 1
    %s33 = scalar_select %p32, 0, %s31
    %s34 = sadd.s32 1, %s25
    %s35 = scalar_select %p32, %s34, %s25
    %p36 = scmp.ge.s32.totalorder %s35, 2
    %s37 = scalar_select %p36, 0, %s35
    %s38 = ssub.s32 %s25, %s37
    %p39 = scmp.eq.s32.totalorder %s38, 0
    %s41 = sadd.s32 %s40, 1
    %s42 = scalar_select %p39, %s40, %s41
    %p45 = pneg %p39
    %p46 = scmp.eq.s32.totalorder %s18, 1
    %p47 = por %p45, %p46
    %p48 = scmp.ne.s32.totalorder %s40, %s43
    %p49 = scmp.eq.s32.totalorder %s18, 0
    %p50 = por %p48, %p49
    %p51 = scmp.ne.s32.totalorder %s40, %s43
    %p52 = scmp.eq.s32.totalorder %s23, 1
    %p53 = por %p51, %p52
    %p54 = scmp.ne.s32.totalorder %s43, %s44
    %p55 = scmp.eq.s32.totalorder %s23, 0
    %p56 = por %p54, %p55
    %p57 = scmp.ne.s32.totalorder %s43, %s44
    %p58 = scmp.eq.s32.totalorder %s24, 1
    %p59 = por %p57, %p58
    %p61 = scmp.ne.s32.totalorder %s44, %s60
    %p62 = scmp.eq.s32.totalorder %s24, 0
    %p63 = por %p61, %p62
    %s65 = sadd.s32 %s64, 1
    %p68 = scmp.eq.s32.totalorder %s18, 1
    %p69 = scmp.ne.s32.totalorder %s64, %s66
    %p70 = scmp.eq.s32.totalorder %s18, 0
    %p71 = por %p69, %p70
    %p72 = scmp.ne.s32.totalorder %s64, %s66
    %p73 = scmp.eq.s32.totalorder %s23, 1
    %p74 = por %p72, %p73
    %p75 = scmp.ne.s32.totalorder %s66, %s67
    %p76 = scmp.eq.s32.totalorder %s23, 0
    %p77 = por %p75, %p76
    %p78 = scmp.ne.s32.totalorder %s66, %s67
    %p79 = scmp.eq.s32.totalorder %s24, 1
    %p80 = por %p78, %p79
    %p82 = scmp.ne.s32.totalorder %s67, %s81
    %p83 = scmp.eq.s32.totalorder %s24, 0
    %p84 = por %p82, %p83
    %s86 = sadd.s32 %s85, 1
    %p89 = scmp.eq.s32.totalorder %s18, 1
    %p90 = scmp.ne.s32.totalorder %s85, %s87
    %p91 = scmp.eq.s32.totalorder %s18, 0
    %p92 = por %p90, %p91
    %p93 = scmp.ne.s32.totalorder %s85, %s87
    %p94 = scmp.eq.s32.totalorder %s23, 1
    %p95 = por %p93, %p94
    %p96 = scmp.ne.s32.totalorder %s87, %s88
    %p97 = scmp.eq.s32.totalorder %s23, 0
    %p98 = por %p96, %p97
    %p99 = scmp.ne.s32.totalorder %s87, %s88
    %p100 = scmp.eq.s32.totalorder %s24, 1
    %p101 = por %p99, %p100
    %p103 = scmp.ne.s32.totalorder %s88, %s102
    %p104 = scmp.eq.s32.totalorder %s24, 0
    %p105 = por %p103, %p104
    %s107 = sadd.s32 %s106, 1
    %p110 = scmp.eq.s32.totalorder %s18, 1
    %p111 = scmp.ne.s32.totalorder %s106, %s108
    %p112 = scmp.eq.s32.totalorder %s18, 0
    %p113 = por %p111, %p112
    %p114 = scmp.ne.s32.totalorder %s106, %s108
    %p115 = scmp.eq.s32.totalorder %s23, 1
    %p116 = por %p114, %p115
    %p117 = scmp.ne.s32.totalorder %s108, %s109
    %p118 = scmp.eq.s32.totalorder %s23, 0
    %p119 = por %p117, %p118
    %p120 = scmp.ne.s32.totalorder %s108, %s109
    %p121 = scmp.eq.s32.totalorder %s24, 1
    %p122 = por %p120, %p121
    %p124 = scmp.ne.s32.totalorder %s109, %s123
    %p125 = scmp.eq.s32.totalorder %s24, 0
    %p126 = por %p124, %p125
    %s128 = sadd.s32 %s127, 1
    %p131 = scmp.eq.s32.totalorder %s18, 1
    %p132 = scmp.ne.s32.totalorder %s127, %s129
    %p133 = scmp.eq.s32.totalorder %s18, 0
    %p134 = por %p132, %p133
    %p135 = scmp.ne.s32.totalorder %s127, %s129
    %p136 = scmp.eq.s32.totalorder %s23, 1
    %p137 = por %p135, %p136
    %p138 = scmp.ne.s32.totalorder %s129, %s130
    %p139 = scmp.eq.s32.totalorder %s23, 0
    %p140 = por %p138, %p139
    %p141 = scmp.ne.s32.totalorder %s129, %s130
    %p142 = scmp.eq.s32.totalorder %s24, 1
    %p143 = por %p141, %p142
    %p145 = scmp.ne.s32.totalorder %s130, %s144
    %p146 = scmp.eq.s32.totalorder %s24, 0
    %p147 = por %p145, %p146
    %s149 = sadd.s32 %s148, 1
    %p152 = scmp.eq.s32.totalorder %s18, 1
    %p153 = scmp.ne.s32.totalorder %s148, %s150
    %p154 = scmp.eq.s32.totalorder %s18, 0
    %p155 = por %p153, %p154
    %p156 = scmp.ne.s32.totalorder %s148, %s150
    %p157 = scmp.eq.s32.totalorder %s23, 1
    %p158 = por %p156, %p157
    %p159 = scmp.ne.s32.totalorder %s150, %s151
    %p160 = scmp.eq.s32.totalorder %s23, 0
    %p161 = por %p159, %p160
    %p162 = scmp.ne.s32.totalorder %s150, %s151
    %p163 = scmp.eq.s32.totalorder %s24, 1
    %p164 = por %p162, %p163
    %p166 = scmp.ne.s32.totalorder %s151, %s165
    %p167 = scmp.eq.s32.totalorder %s24, 0
    %p168 = por %p166, %p167
    %s170 = sadd.s32 %s169, 1
    %p173 = scmp.eq.s32.totalorder %s18, 1
    %p174 = scmp.ne.s32.totalorder %s169, %s171
    %p175 = scmp.eq.s32.totalorder %s18, 0
    %p176 = por %p174, %p175
    %p177 = scmp.ne.s32.totalorder %s169, %s171
    %p178 = scmp.eq.s32.totalorder %s23, 1
    %p179 = por %p177, %p178
    %p180 = scmp.ne.s32.totalorder %s171, %s172
    %p181 = scmp.eq.s32.totalorder %s23, 0
    %p182 = por %p180, %p181
    %p183 = scmp.ne.s32.totalorder %s171, %s172
    %p184 = scmp.eq.s32.totalorder %s24, 1
    %p185 = por %p183, %p184
    %p187 = scmp.ne.s32.totalorder %s172, %s186
    %p188 = scmp.eq.s32.totalorder %s24, 0
    %p189 = por %p187, %p188
    %s191 = sadd.s32 %s190, 1
    %p194 = scmp.eq.s32.totalorder %s18, 1
    %p195 = scmp.ne.s32.totalorder %s190, %s192
    %p196 = scmp.eq.s32.totalorder %s18, 0
    %p197 = por %p195, %p196
    %p198 = scmp.ne.s32.totalorder %s190, %s192
    %p199 = scmp.eq.s32.totalorder %s23, 1
    %p200 = por %p198, %p199
    %p201 = scmp.ne.s32.totalorder %s192, %s193
    %p202 = scmp.eq.s32.totalorder %s23, 0
    %p203 = por %p201, %p202
    %p204 = scmp.ne.s32.totalorder %s192, %s193
    %p205 = scmp.eq.s32.totalorder %s24, 1
    %p206 = por %p204, %p205
    %p208 = scmp.ne.s32.totalorder %s193, %s207
    %p209 = scmp.eq.s32.totalorder %s24, 0
    %p210 = por %p208, %p209
    %s212 = sadd.s32 %s211, 1
    %p215 = scmp.eq.s32.totalorder %s18, 1
    %p216 = scmp.ne.s32.totalorder %s211, %s213
    %p217 = scmp.eq.s32.totalorder %s18, 0
    %p218 = por %p216, %p217
    %p219 = scmp.ne.s32.totalorder %s211, %s213
    %p220 = scmp.eq.s32.totalorder %s23, 1
    %p221 = por %p219, %p220
    %p222 = scmp.ne.s32.totalorder %s213, %s214
    %p223 = scmp.eq.s32.totalorder %s23, 0
    %p224 = por %p222, %p223
    %p225 = scmp.ne.s32.totalorder %s213, %s214
    %p226 = scmp.eq.s32.totalorder %s24, 1
    %p227 = por %p225, %p226
    %p229 = scmp.ne.s32.totalorder %s214, %s228
    %p230 = scmp.eq.s32.totalorder %s24, 0
    %p231 = por %p229, %p230
    %s233 = sadd.s32 %s232, 1
    %p236 = scmp.eq.s32.totalorder %s18, 1
    %p237 = scmp.ne.s32.totalorder %s232, %s234
    %p238 = scmp.eq.s32.totalorder %s18, 0
    %p239 = por %p237, %p238
    %p240 = scmp.ne.s32.totalorder %s232, %s234
    %p241 = scmp.eq.s32.totalorder %s23, 1
    %p242 = por %p240, %p241
    %p243 = scmp.ne.s32.totalorder %s234, %s235
    %p244 = scmp.eq.s32.totalorder %s23, 0
    %p245 = por %p243, %p244
    %p246 = scmp.ne.s32.totalorder %s234, %s235
    %p247 = scmp.eq.s32.totalorder %s24, 1
    %p248 = por %p246, %p247
    %p250 = scmp.ne.s32.totalorder %s235, %s249
    %p251 = scmp.eq.s32.totalorder %s24, 0
    %p252 = por %p250, %p251
    %s254 = sadd.s32 %s253, 1
    %p257 = scmp.eq.s32.totalorder %s18, 1
    %p258 = scmp.ne.s32.totalorder %s253, %s255
    %p259 = scmp.eq.s32.totalorder %s18, 0
    %p260 = por %p258, %p259
    %p261 = scmp.ne.s32.totalorder %s253, %s255
    %p262 = scmp.eq.s32.totalorder %s23, 1
    %p263 = por %p261, %p262
    %p264 = scmp.ne.s32.totalorder %s255, %s256
    %p265 = scmp.eq.s32.totalorder %s23, 0
    %p266 = por %p264, %p265
    %p267 = scmp.ne.s32.totalorder %s255, %s256
    %p268 = scmp.eq.s32.totalorder %s24, 1
    %p269 = por %p267, %p268
    %p271 = scmp.ne.s32.totalorder %s256, %s270
    %p272 = scmp.eq.s32.totalorder %s24, 0
    %p273 = por %p271, %p272
    %s275 = sadd.s32 %s274, 1
    %p278 = scmp.eq.s32.totalorder %s18, 1
    %p279 = scmp.ne.s32.totalorder %s274, %s276
    %p280 = scmp.eq.s32.totalorder %s18, 0
    %p281 = por %p279, %p280
    %p282 = scmp.ne.s32.totalorder %s274, %s276
    %p283 = scmp.eq.s32.totalorder %s23, 1
    %p284 = por %p282, %p283
    %p285 = scmp.ne.s32.totalorder %s276, %s277
    %p286 = scmp.eq.s32.totalorder %s23, 0
    %p287 = por %p285, %p286
    %p288 = scmp.ne.s32.totalorder %s276, %s277
    %p289 = scmp.eq.s32.totalorder %s24, 1
    %p290 = por %p288, %p289
    %p292 = scmp.ne.s32.totalorder %s277, %s291
    %p293 = scmp.eq.s32.totalorder %s24, 0
    %p294 = por %p292, %p293
    %s295 = ssub.s32 %s25, %s37
    %s296 = ssub.s32 %s26, %s33
    %s297 = sor.u32 %s295, %s296
    %p298 = scmp.eq.s32.totalorder %s297, 0
    %s300 = sadd.s32 %s299, 1
    %s301 = scalar_select %p298, %s299, %s300
    %p304 = pneg %p298
    %p305 = scmp.eq.s32.totalorder %s18, 1
    %p306 = por %p304, %p305
    %p307 = scmp.ne.s32.totalorder %s299, %s302
    %p308 = scmp.eq.s32.totalorder %s18, 0
    %p309 = por %p307, %p308
    %p310 = scmp.ne.s32.totalorder %s299, %s302
    %p311 = scmp.eq.s32.totalorder %s23, 1
    %p312 = por %p310, %p311
    %p313 = scmp.ne.s32.totalorder %s302, %s303
    %p314 = scmp.eq.s32.totalorder %s23, 0
    %p315 = por %p313, %p314
    %p316 = scmp.ne.s32.totalorder %s302, %s303
    %p317 = scmp.eq.s32.totalorder %s24, 1
    %p318 = por %p316, %p317
    %p320 = scmp.ne.s32.totalorder %s303, %s319
    %p321 = scmp.eq.s32.totalorder %s24, 0
    %p322 = por %p320, %p321
    %p323 = scmp.le.s32.totalorder 1, %s18
    %p324 = scmp.lt.s32.totalorder %s18, 3
    %p325 = pnand %p323, %p324
    %p326 = pneg %p325
    // Predicated region
    $region9: #{t2t_forward.4} parent=5 // pred_check
      _
    $region10: #{t2t_forward.4} parent=5 // pred_check_branch
      %328 = sbr.rel (%p325) target = $region12
    $region11: #{t2t_forward.4} parent=5 // pred_region
      %s329 = ssub.s32 %s18, 1
      // Predicated region
      $region13: #{t2t_forward.4} parent=11 // pred_check
        %p330 = pneg %p77
      $region14: #{t2t_forward.4} parent=11 // pred_check_branch
        %332 = sbr.rel (%p330) target = $region16
      $region15: #{t2t_forward.4} parent=11 // pred_region
        _
      $region16: #{t2t_forward.4} parent=11 // pred_fallthru
        _
      // Predicated region
      $region17: #{t2t_forward.4} parent=11 // pred_check
        %p333 = pneg %p98
      $region18: #{t2t_forward.4} parent=11 // pred_check_branch
        %335 = sbr.rel (%p333) target = $region20
      $region19: #{t2t_forward.4} parent=11 // pred_region
        _
      $region20: #{t2t_forward.4} parent=11 // pred_fallthru
        _
      // Predicated region
      $region21: #{t2t_forward.4} parent=11 // pred_check
        %p336 = pneg %p119
      $region22: #{t2t_forward.4} parent=11 // pred_check_branch
        %338 = sbr.rel (%p336) target = $region24
      $region23: #{t2t_forward.4} parent=11 // pred_region
        _
      $region24: #{t2t_forward.4} parent=11 // pred_fallthru
        _
      // Predicated region
      $region25: #{t2t_forward.4} parent=11 // pred_check
        %p339 = pneg %p140
      $region26: #{t2t_forward.4} parent=11 // pred_check_branch
        %341 = sbr.rel (%p339) target = $region28
      $region27: #{t2t_forward.4} parent=11 // pred_region
        _
      $region28: #{t2t_forward.4} parent=11 // pred_fallthru
        _
      // Predicated region
      $region29: #{t2t_forward.4} parent=11 // pred_check
        %p342 = pneg %p161
      $region30: #{t2t_forward.4} parent=11 // pred_check_branch
        %344 = sbr.rel (%p342) target = $region32
      $region31: #{t2t_forward.4} parent=11 // pred_region
        _
      $region32: #{t2t_forward.4} parent=11 // pred_fallthru
        _
      // Predicated region
      $region33: #{t2t_forward.4} parent=11 // pred_check
        %p345 = pneg %p182
      $region34: #{t2t_forward.4} parent=11 // pred_check_branch
        %347 = sbr.rel (%p345) target = $region36
      $region35: #{t2t_forward.4} parent=11 // pred_region
        _
      $region36: #{t2t_forward.4} parent=11 // pred_fallthru
        _
      // Predicated region
      $region37: #{t2t_forward.4} parent=11 // pred_check
        %p348 = pneg %p203
      $region38: #{t2t_forward.4} parent=11 // pred_check_branch
        %350 = sbr.rel (%p348) target = $region40
      $region39: #{t2t_forward.4} parent=11 // pred_region
        _
      $region40: #{t2t_forward.4} parent=11 // pred_fallthru
        _
      // Predicated region
      $region41: #{t2t_forward.4} parent=11 // pred_check
        %p351 = pneg %p224
      $region42: #{t2t_forward.4} parent=11 // pred_check_branch
        %353 = sbr.rel (%p351) target = $region44
      $region43: #{t2t_forward.4} parent=11 // pred_region
        _
      $region44: #{t2t_forward.4} parent=11 // pred_fallthru
        _
      // Predicated region
      $region45: #{t2t_forward.4} parent=11 // pred_check
        %p354 = pneg %p245
      $region46: #{t2t_forward.4} parent=11 // pred_check_branch
        %356 = sbr.rel (%p354) target = $region48
      $region47: #{t2t_forward.4} parent=11 // pred_region
        _
      $region48: #{t2t_forward.4} parent=11 // pred_fallthru
        _
      // Predicated region
      $region49: #{t2t_forward.4} parent=11 // pred_check
        %p357 = pneg %p266
      $region50: #{t2t_forward.4} parent=11 // pred_check_branch
        %359 = sbr.rel (%p357) target = $region52
      $region51: #{t2t_forward.4} parent=11 // pred_region
        _
      $region52: #{t2t_forward.4} parent=11 // pred_fallthru
        _
      // Predicated region
      $region53: #{t2t_forward.4} parent=11 // pred_check
        %p360 = pneg %p287
      $region54: #{t2t_forward.4} parent=11 // pred_check_branch
        %362 = sbr.rel (%p360) target = $region56
      $region55: #{t2t_forward.4} parent=11 // pred_region
        _
      $region56: #{t2t_forward.4} parent=11 // pred_fallthru
        _
    $region12: #{t2t_forward.4} parent=5 // pred_fallthru
      _
    %p363 = scmp.lt.s32.totalorder %s18, 2
    // Predicated region
    $region57: #{t2t_forward.4} parent=5 // pred_check
      %p364 = pneg %p363
    $region58: #{t2t_forward.4} parent=5 // pred_check_branch
      %366 = sbr.rel (%p364) target = $region60
    $region59: #{t2t_forward.4} parent=5 // pred_region
      // Predicated region
      $region61: #{t2t_forward.4} parent=59 // pred_check
        %p367 = pneg %p50
      $region62: #{t2t_forward.4} parent=59 // pred_check_branch
        %369 = sbr.rel (%p367) target = $region64
      $region63: #{t2t_forward.4} parent=59 // pred_region
        %p370 = scmp.lt.s32.totalorder %s25, 1
        %s371 = scalar_select %p370, %s25, 1
        %s372 = smul.addr %s371, 6
        %s373 = smul.addr %s372, 4
        %s374 = scalar_lea.vmem %s0, %s373
      $region64: #{t2t_forward.4} parent=59 // pred_fallthru
        _
    $region60: #{t2t_forward.4} parent=5 // pred_fallthru
      _
    %p375 = scmp.le.s32.totalorder 1, %s18
    %p376 = scmp.lt.s32.totalorder %s18, 3
    %p377 = pnand %p375, %p376
    %p378 = pneg %p377
    // Predicated region
    $region65: #{t2t_forward.4} parent=5 // pred_check
      _
    $region66: #{t2t_forward.4} parent=5 // pred_check_branch
      %380 = sbr.rel (%p377) target = $region68
    $region67: #{t2t_forward.4} parent=5 // pred_region
      %s381 = ssub.s32 %s18, 1
      %p382 = scmp.lt.s32.totalorder %s27, 1
      %s383 = scalar_select %p382, %s27, 1
      %s384 = smul.addr %s383, 6
      %s385 = smul.addr %s384, 4
      %s386 = scalar_lea.vmem %s0, %s385
      %p387 = pneg %p56
      %p388 = pneg %p53
      %p389 = pneg %p77
      %p390 = pneg %p74
      %p391 = pneg %p98
      %p392 = pneg %p95
      %p393 = pneg %p119
      %p394 = pneg %p116
      %p395 = pneg %p140
      %p396 = pneg %p137
      %p397 = pneg %p161
      %p398 = pneg %p158
      %p399 = pneg %p182
      %p400 = pneg %p179
      %p401 = pneg %p203
      %p402 = pneg %p200
      %p403 = pneg %p224
      %p404 = pneg %p221
      %p405 = pneg %p245
      %p406 = pneg %p242
      %p407 = pneg %p266
      %p408 = pneg %p263
      %p409 = pneg %p287
      %p410 = pneg %p284
      %p411 = pneg %p315
      %p412 = pneg %p312
      %s413 = smul.u32 2, %s28
      %p414 = scmp.lt.s32.totalorder %s27, 1
      %s415 = scalar_select %p414, %s27, 1
      %p416 = scmp.lt.s32.totalorder %s413, 1
      %s417 = scalar_select %p416, %s413, 1
      %s418 = smul.addr %s415, 2
      %s419 = sadd.s32 %s417, %s418
      %s420 = smul.addr %s419, 4
      %s421 = scalar_lea.vmem %s12, %s420
      %p422 = scmp.lt.s32.totalorder %s27, 1
      %s423 = scalar_select %p422, %s27, 1
      %s424 = smul.addr %s423, 6
      %s425 = smul.addr %s424, 4
      %s426 = scalar_lea.vmem %s0, %s425
      %s427 = smul.u32 2, %s28
      %p428 = scmp.lt.s32.totalorder %s27, 1
      %s429 = scalar_select %p428, %s27, 1
      %p430 = scmp.lt.s32.totalorder %s427, 1
      %s431 = scalar_select %p430, %s427, 1
      %s432 = smul.addr %s429, 2
      %s433 = sadd.s32 %s431, %s432
      %s434 = smul.addr %s433, 4
      %s435 = scalar_lea.vmem %s12, %s434
      %s436 = smul.u32 2, %s28
      %p438 = scmp.eq.s32.totalorder %s28, 0
      // Predicated region
      $region69: #{t2t_forward.4} parent=67 // pred_check
        %p439 = pneg %p438
      $region70: #{t2t_forward.4} parent=67 // pred_check_branch
        %441 = sbr.rel (%p439) target = $region72
      $region71: #{t2t_forward.4} parent=67 // pred_region
        %v442 = vld [vmem:[%s426] sm:$0xff]
        %v443 = vld [vmem:[%s426 + $0x8] sm:$0xf]
        %v444 = vld [vmem:[%s426 + $0xc] sm:$0xff]
        %v445 = vld [vmem:[%s426 + $0x14] sm:$0xf]
        %v446 = vunpack.c.l.bf16 %v442
        %v447 = vunpack.c.h.bf16 %v442
        %v448 = vunpack.c.l.bf16 %v443
        %v449 = vunpack.c.l.bf16 %v444
        %v450 = vunpack.c.h.bf16 %v444
        %v451 = vunpack.c.l.bf16 %v445
        %v452 = vadd.f32 %v446, %v447
        %vm453 = vcmask 261120
        %v454 = vsel %vm453, %v448, 0.0
        %v455 = vadd.f32 %v452, %v454
        %456 = vadd.xlane.f32.xlu0 %v455
        %v457 = vpop.xlane.xlu0 %456
        %v458 = vadd.f32 %v449, %v450
        %v459 = vsel %vm453, %v451, 0.0
        %v460 = vadd.f32 %v458, %v459
        %461 = vadd.xlane.f32.xlu0 %v460
        %v462 = vpop.xlane.xlu0 %461
        %v463 = vrcp.pop 288.0
        %v464 = vmul.f32 %v457, %v463
        %v465 = vmul.f32 %v462, %v463
        %v466 = vsub.f32 %v446, %v464
        %v467 = vsub.f32 %v447, %v464
        %v468 = vsub.f32 %v448, %v464
        %v469 = vsub.f32 %v449, %v465
        %v470 = vsub.f32 %v450, %v465
        %v471 = vsub.f32 %v451, %v465
        %v472 = vmul.f32 %v466, %v466
        %v473 = vmul.f32 %v467, %v467
        %v474 = vmul.f32 %v468, %v468
        %v475 = vmul.f32 %v469, %v469
        %v476 = vmul.f32 %v470, %v470
        %v477 = vmul.f32 %v471, %v471
        %v478 = vadd.f32 %v472, %v473
        %v479 = vsel %vm453, %v474, 0.0
        %v480 = vadd.f32 %v478, %v479
        %481 = vadd.xlane.f32.xlu0 %v480
        %v482 = vpop.xlane.xlu0 %481
        %v483 = vadd.f32 %v475, %v476
        %v484 = vsel %vm453, %v477, 0.0
        %v485 = vadd.f32 %v483, %v484
        %486 = vadd.xlane.f32.xlu0 %v485
        %v487 = vpop.xlane.xlu0 %486
        %v488 = vmul.f32 %v482, %v463
        %v489 = vmul.f32 %v487, %v463
        %v490 = vadd.f32 %v488, 1e-05
        %v491 = vadd.f32 %v489, 1e-05
        %v492 = vrsqrt.pop %v490
        %v493 = vrsqrt.pop %v491
        %v494 = vmul.f32 %v466, %v492
        %v495 = vmul.f32 %v467, %v492
        %v496 = vmul.f32 %v468, %v492
        %v497 = vmul.f32 %v469, %v493
        %v498 = vmul.f32 %v470, %v493
        %v499 = vmul.f32 %v471, %v493
        %v500 = vld [vmem:[%s1] sm:$0x7]
        %v502 = vlaneseq
        %v503 = vshrl.u32 %v502, 7
        %v504 = vsub.s32 0, %v503
        %v505 = vrot.slane %v500, %v504
        %v506 = vlaneseq
        %v507 = vshrl.u32 %v506, 7
        %v508 = vsub.s32 1, %v507
        %v509 = vrot.slane %v500, %v508
        %v510 = vlaneseq
        %v511 = vshrl.u32 %v510, 7
        %v512 = vsub.s32 2, %v511
        %v513 = vrot.slane %v500, %v512
        %v517 = vmul.f32 %v494, %v505
        %v518 = vmul.f32 %v495, %v509
        %v519 = vmul.f32 %v496, %v513
        %v520 = vmul.f32 %v497, %v505
        %v521 = vmul.f32 %v498, %v509
        %v522 = vmul.f32 %v499, %v513
        %v523 = vld [vmem:[%s2] sm:$0x7]
        %v525 = vlaneseq
        %v526 = vshrl.u32 %v525, 7
        %v527 = vsub.s32 0, %v526
        %v528 = vrot.slane %v523, %v527
        %v529 = vlaneseq
        %v530 = vshrl.u32 %v529, 7
        %v531 = vsub.s32 1, %v530
        %v532 = vrot.slane %v523, %v531
        %v533 = vlaneseq
        %v534 = vshrl.u32 %v533, 7
        %v535 = vsub.s32 2, %v534
        %v536 = vrot.slane %v523, %v535
        %v540 = vadd.f32 %v517, %v528
        %v541 = vadd.f32 %v518, %v532
        %v542 = vadd.f32 %v519, %v536
        %v543 = vadd.f32 %v520, %v528
        %v544 = vadd.f32 %v521, %v532
        %v545 = vadd.f32 %v522, %v536
        %v546 = vpack.c.bf16 %v543, %v540
        %v547 = vpack.c.bf16 %v544, %v541
        %v548 = vpack.c.bf16 %v545, %v542
        %v549 = vld [vmem:[%s3] sm:$0xf]
        %v550 = vld [vmem:[%s3 + $0x4] sm:$0xf]
        %v551 = vld [vmem:[%s3 + $0x8] sm:$0xf]
        %v552 = vld [vmem:[%s3 + $0xc] sm:$0xf]
        %v553 = vld [vmem:[%s3 + $0x10] sm:$0xf]
        %v554 = vld [vmem:[%s3 + $0x14] sm:$0xf]
        %v555 = vld [vmem:[%s3 + $0x18] sm:$0xf]
        %v556 = vld [vmem:[%s3 + $0x1c] sm:$0xf]
        %v557 = vld [vmem:[%s3 + $0x20] sm:$0xf]
        %v558 = vld [vmem:[%s3 + $0x24] sm:$0xf]
        %v559 = vld [vmem:[%s3 + $0x28] sm:$0xf]
        %v560 = vld [vmem:[%s3 + $0x2c] sm:$0xf]
        %v561 = vld [vmem:[%s3 + $0x30] sm:$0xf]
        %v562 = vld [vmem:[%s3 + $0x34] sm:$0xf]
        %v563 = vld [vmem:[%s3 + $0x38] sm:$0xf]
        %v564 = vld [vmem:[%s3 + $0x3c] sm:$0xf]
        %v565 = vld [vmem:[%s3 + $0x40] sm:$0xf]
        %v566 = vld [vmem:[%s3 + $0x44] sm:$0xf]
        %v567 = vld [vmem:[%s3 + $0x48] sm:$0xf]
        %v568 = vld [vmem:[%s3 + $0x4c] sm:$0xf]
        %v569 = vld [vmem:[%s3 + $0x50] sm:$0xf]
        %v570 = vld [vmem:[%s3 + $0x54] sm:$0xf]
        %v571 = vld [vmem:[%s3 + $0x58] sm:$0xf]
        %v572 = vld [vmem:[%s3 + $0x5c] sm:$0xf]
        %v573 = vld [vmem:[%s3 + $0x60] sm:$0xf]
        %v574 = vld [vmem:[%s3 + $0x64] sm:$0xf]
        %v575 = vld [vmem:[%s3 + $0x68] sm:$0xf]
        %v576 = vld [vmem:[%s3 + $0x6c] sm:$0xf]
        %v577 = vld [vmem:[%s3 + $0x70] sm:$0xf]
        %v578 = vld [vmem:[%s3 + $0x74] sm:$0xf]
        %v579 = vld [vmem:[%s3 + $0x78] sm:$0xf]
        %v580 = vld [vmem:[%s3 + $0x7c] sm:$0xf]
        %v581 = vld [vmem:[%s3 + $0x80] sm:$0xf]
        %v582 = vld [vmem:[%s3 + $0x84] sm:$0xf]
        %v583 = vld [vmem:[%s3 + $0x88] sm:$0xf]
        %v584 = vld [vmem:[%s3 + $0x8c] sm:$0xf]
        %v621 = vunpack.c.l.b16 %v549
        %v622 = vunpack.c.l.b16 %v550
        %v623 = vunpack.c.l.b16 %v551
        %v624 = vunpack.c.l.b16 %v552
        %v625 = vunpack.c.l.b16 %v553
        %v626 = vunpack.c.l.b16 %v554
        %v627 = vunpack.c.l.b16 %v555
        %v628 = vunpack.c.l.b16 %v556
        %v629 = vunpack.c.l.b16 %v557
        %v630 = vunpack.c.l.b16 %v558
        %v631 = vunpack.c.l.b16 %v559
        %v632 = vunpack.c.l.b16 %v560
        %v633 = vunpack.c.l.b16 %v561
        %v634 = vunpack.c.l.b16 %v562
        %v635 = vunpack.c.l.b16 %v563
        %v636 = vunpack.c.l.b16 %v564
        %v637 = vunpack.c.l.b16 %v565
        %v638 = vunpack.c.l.b16 %v566
        %v639 = vunpack.c.l.b16 %v567
        %v640 = vunpack.c.l.b16 %v568
        %v641 = vunpack.c.l.b16 %v569
        %v642 = vunpack.c.l.b16 %v570
        %v643 = vunpack.c.l.b16 %v571
        %v644 = vunpack.c.l.b16 %v572
        %v645 = vunpack.c.l.b16 %v573
        %v646 = vunpack.c.l.b16 %v574
        %v647 = vunpack.c.l.b16 %v575
        %v648 = vunpack.c.l.b16 %v576
        %v649 = vunpack.c.l.b16 %v577
        %v650 = vunpack.c.l.b16 %v578
        %v651 = vunpack.c.l.b16 %v579
        %v652 = vunpack.c.l.b16 %v580
        %v653 = vunpack.c.l.b16 %v581
        %v654 = vunpack.c.l.b16 %v582
        %v655 = vunpack.c.l.b16 %v583
        %v656 = vunpack.c.l.b16 %v584
        %v657 = vpack.c.b16 %v622, %v621
        %v658 = vpack.c.b16 %v624, %v623
        %v659 = vpack.c.b16 %v626, %v625
        %v660 = vpack.c.b16 %v628, %v627
        %v661 = vpack.c.b16 %v630, %v629
        %v662 = vpack.c.b16 %v632, %v631
        %v663 = vpack.c.b16 %v634, %v633
        %v664 = vpack.c.b16 %v636, %v635
        %v665 = vpack.c.b16 %v638, %v637
        %v666 = vpack.c.b16 %v640, %v639
        %v667 = vpack.c.b16 %v642, %v641
        %v668 = vpack.c.b16 %v644, %v643
        %v669 = vpack.c.b16 %v646, %v645
        %v670 = vpack.c.b16 %v648, %v647
        %v671 = vpack.c.b16 %v650, %v649
        %v672 = vpack.c.b16 %v652, %v651
        %v673 = vpack.c.b16 %v654, %v653
        %v674 = vpack.c.b16 %v656, %v655
        %v694 = vsel %vm453, %v548, 0
        %696 = vmatprep.subr.bf16.mxu0 0
        %697 = vmatpush1.bf16.msra.mxu0 %v657
        %698 = vmatprep.subr.bf16.mxu0 0
        %699 = vmatpush1.bf16.msra.mxu0 %v658
        %700 = vmatprep.subr.bf16.mxu0 0
        %701 = vmatpush1.bf16.msra.mxu0 %v659
        %702 = vmatprep.subr.bf16.mxu0 0
        %703 = vmatpush1.bf16.msra.mxu0 %v660
        %704 = vmatprep.subr.bf16.mxu0 0
        %705 = vmatpush1.bf16.msra.mxu0 %v661
        %706 = vmatprep.subr.bf16.mxu0 0
        %707 = vmatpush1.bf16.msra.mxu0 %v662
        %708 = vmatprep.subr.bf16.mxu0 0
        %709 = vmatpush1.bf16.msra.mxu0 %v663
        %710 = vmatprep.subr.bf16.mxu0 0
        %711 = vmatpush1.bf16.msra.mxu0 %v664
        %712 = vmatprep.subr.bf16.mxu0 0
        %713 = vmatpush1.bf16.msra.mxu0 %v665
        %714 = vmatprep.subr.bf16.mxu0 0
        %715 = vmatpush1.bf16.msra.mxu0 %v666
        %716 = vmatprep.subr.bf16.mxu0 0
        %717 = vmatpush1.bf16.msra.mxu0 %v667
        %718 = vmatprep.subr.bf16.mxu0 0
        %719 = vmatpush1.bf16.msra.mxu0 %v668
        %720 = vmatprep.subr.bf16.mxu0 0
        %721 = vmatpush1.bf16.msra.mxu0 %v669
        %722 = vmatprep.subr.bf16.mxu0 0
        %723 = vmatpush1.bf16.msra.mxu0 %v670
        %724 = vmatprep.subr.bf16.mxu0 0
        %725 = vmatpush1.bf16.msra.mxu0 %v671
        %726 = vmatprep.subr.bf16.mxu0 0
        %727 = vmatpush1.bf16.msra.mxu0 %v672
        %728 = vmatprep.mubr.bf16.mxu0 %v547
        %729 = vmatmul.mubr.bf16.gmra.mrb[0].mxu0 %v546
        %v730 = vpop.f32.mrb[0].mxu0
        %v731 = vadd.f32 0.0, %v730
        %v732 = vpop.f32.mrb[0].mxu0
        %v733 = vpop.f32.mrb[0].mxu0
        %v734 = vadd.f32 0.0, %v733
        %v735 = vpop.f32.mrb[0].mxu0
        %736 = vdwg.mxu0
        %737 = vmatprep.subr.bf16.mxu0 0
        %738 = vmatpush1.bf16.msra.mxu0 %v673
        %739 = vmatprep.subr.bf16.mxu0 0
        %740 = vmatpush1.bf16.msra.mxu0 %v674
        %741 = vmatprep.subr.bf16.mxu0 0
        %742 = vmatpush1.bf16.msra.mxu0 0
        %743 = vmatprep.subr.bf16.mxu0 0
        %744 = vmatpush1.bf16.msra.mxu0 0
        %745 = vmatprep.subr.bf16.mxu0 0
        %746 = vmatpush1.bf16.msra.mxu0 0
        %747 = vmatprep.subr.bf16.mxu0 0
        %748 = vmatpush1.bf16.msra.mxu0 0
        %749 = vmatprep.subr.bf16.mxu0 0
        %750 = vmatpush1.bf16.msra.mxu0 0
        %751 = vmatprep.subr.bf16.mxu0 0
        %752 = vmatpush1.bf16.msra.mxu0 0
        %753 = vmatprep.subr.bf16.mxu0 0
        %754 = vmatpush1.bf16.msra.mxu0 0
        %755 = vmatprep.subr.bf16.mxu0 0
        %756 = vmatpush1.bf16.msra.mxu0 0
        %757 = vmatprep.subr.bf16.mxu0 0
        %758 = vmatpush1.bf16.msra.mxu0 0
        %759 = vmatprep.subr.bf16.mxu0 0
        %760 = vmatpush1.bf16.msra.mxu0 0
        %761 = vmatprep.subr.bf16.mxu0 0
        %762 = vmatpush1.bf16.msra.mxu0 0
        %763 = vmatprep.subr.bf16.mxu0 0
        %764 = vmatpush1.bf16.msra.mxu0 0
        %765 = vmatprep.subr.bf16.mxu0 0
        %766 = vmatpush1.bf16.msra.mxu0 0
        %767 = vmatprep.subr.bf16.mxu0 0
        %768 = vmatpush1.bf16.msra.mxu0 0
        %769 = vmatprep.mubr.bf16.mxu0 0
        %770 = vmatmul.mubr.bf16.gmra.mrb[0].mxu0 %v694
        %v771 = vpop.f32.mrb[0].mxu0
        %v772 = vadd.f32 %v731, %v771
        %v773 = vpop.f32.mrb[0].mxu0
        %v774 = vpop.f32.mrb[0].mxu0
        %v775 = vadd.f32 %v734, %v774
        %v776 = vpop.f32.mrb[0].mxu0
        %777 = vdwg.mxu0
        %v778 = vmul.f32 %v772, 0.058925565
        %v779 = vmul.f32 %v775, 0.058925565
        %v780 = vpack.c.bf16 %v779, %v778
        %781 = vst.msk [vmem:[#allocation2] sm:$0xff] %vm453, %v780
        %784 = vrot.lane.b32.xlu0 %v772, 96
        %v785 = vpop.permute.xlu0 %784
        %786 = vrot.lane.b32.xlu0 %v775, 96
        %v787 = vpop.permute.xlu0 %786
        %790 = vxpose.xlu0.b32.start [1/16] %v785, 128
        %791 = vxpose.xlu0.b32.cont [2/16] %v787, 128
        %792 = vxpose.xlu0.b32.cont [3/16] 0.0, 128
        %793 = vxpose.xlu0.b32.cont [4/16] 0.0, 128
        %794 = vxpose.xlu0.b32.cont [5/16] 0.0, 128
        %795 = vxpose.xlu0.b32.cont [6/16] 0.0, 128
        %796 = vxpose.xlu0.b32.cont [7/16] 0.0, 128
        %797 = vxpose.xlu0.b32.cont [8/16] 0.0, 128
        %798 = vxpose.xlu0.b32.cont [9/16] 0.0, 128
        %799 = vxpose.xlu0.b32.cont [10/16] 0.0, 128
        %800 = vxpose.xlu0.b32.cont [11/16] 0.0, 128
        %801 = vxpose.xlu0.b32.cont [12/16] 0.0, 128
        %802 = vxpose.xlu0.b32.cont [13/16] 0.0, 128
        %803 = vxpose.xlu0.b32.cont [14/16] 0.0, 128
        %804 = vxpose.xlu0.b32.cont [15/16] 0.0, 128
        %805 = vxpose.xlu0.b32.end [16/16] 0.0, 128
        %v806 = vpop.trf.xlu0
        %v807 = vpop.trf.xlu0
        %v808 = vpop.trf.xlu0
        %v809 = vpop.trf.xlu0
        %v810 = vpop.trf.xlu0
        %v811 = vpop.trf.xlu0
        %v812 = vpop.trf.xlu0
        %v813 = vpop.trf.xlu0
        %v814 = vpop.trf.xlu0
        %v815 = vpop.trf.xlu0
        %v816 = vpop.trf.xlu0
        %v817 = vpop.trf.xlu0
        %v818 = vpop.trf.xlu0
        %v819 = vpop.trf.xlu0
        %v820 = vpop.trf.xlu0
        %v821 = vpop.trf.xlu0
        %v822 = vpack.c.bf16 %v807, %v806
        %v823 = vpack.c.bf16 %v809, %v808
        %vm824 = vcmask 130048
        %825 = vst.msk [vmem:[#allocation3] sm:$0xff] %vm824, %v822
        %826 = vst.msk [vmem:[#allocation3 + $0x8] sm:$0xff] %vm824, %v823
        %v827 = vpack.c.bf16 %v775, %v772
        %829 = vrot.lane.b32.xlu0 %v827, 64
        %v830 = vpop.permute.xlu0 %829
        %832 = vst.msk [vmem:[#allocation4] sm:$0xff] %vm453, %v830
        %833 = vrot.lane.b32.xlu0 %v772, 64
        %v834 = vpop.permute.xlu0 %833
        %835 = vrot.lane.b32.xlu0 %v775, 64
        %v836 = vpop.permute.xlu0 %835
        %839 = vst.msk [vmem:[#allocation5] sm:$0xff] %vm453, %v834
        %840 = vst.msk [vmem:[#allocation5 + $0x8] sm:$0xff] %vm453, %v836
      $region72: #{t2t_forward.4} parent=67 // pred_fallthru
        _
      %s841 = smul.u32 %s28, 16
      %s842 = sshra.s32 %s841, 4
      %s843 = sand.u32 %s841, 15
      %s844 = smul.addr %s842, 8
      %s845 = scalar_lea.vmem [#allocation2], %s844
      %v846 = vld [vmem:[%s845] sm:$0xff]
      %v847 = vld [vmem:[#allocation3] sm:$0xff]
      %v848 = vld [vmem:[#allocation3 + $0x8] sm:$0xff]
      %vm849 = vcmask 261120
      %v851 = vsel %vm849, %v846, 0
      %853 = vmatprep.subr.bf16.mxu0 0
      %854 = vmatpush1.bf16.msra.mxu0 %v847
      %855 = vmatprep.subr.bf16.mxu0 0
      %856 = vmatpush1.bf16.msra.mxu0 %v848
      %857 = vmatprep.subr.bf16.mxu0 0
      %858 = vmatpush1.bf16.msra.mxu0 0
      %859 = vmatprep.subr.bf16.mxu0 0
      %860 = vmatpush1.bf16.msra.mxu0 0
      %861 = vmatprep.subr.bf16.mxu0 0
      %862 = vmatpush1.bf16.msra.mxu0 0
      %863 = vmatprep.subr.bf16.mxu0 0
      %864 = vmatpush1.bf16.msra.mxu0 0
      %865 = vmatprep.subr.bf16.mxu0 0
      %866 = vmatpush1.bf16.msra.mxu0 0
      %867 = vmatprep.subr.bf16.mxu0 0
      %868 = vmatpush1.bf16.msra.mxu0 0
      %869 = vmatprep.subr.bf16.mxu0 0
      %870 = vmatpush1.bf16.msra.mxu0 0
      %871 = vmatprep.subr.bf16.mxu0 0
      %872 = vmatpush1.bf16.msra.mxu0 0
      %873 = vmatprep.subr.bf16.mxu0 0
      %874 = vmatpush1.bf16.msra.mxu0 0
      %875 = vmatprep.subr.bf16.mxu0 0
      %876 = vmatpush1.bf16.msra.mxu0 0
      %877 = vmatprep.subr.bf16.mxu0 0
      %878 = vmatpush1.bf16.msra.mxu0 0
      %879 = vmatprep.subr.bf16.mxu0 0
      %880 = vmatpush1.bf16.msra.mxu0 0
      %881 = vmatprep.subr.bf16.mxu0 0
      %882 = vmatpush1.bf16.msra.mxu0 0
      %883 = vmatprep.subr.bf16.mxu0 0
      %884 = vmatpush1.bf16.msra.mxu0 0
      %885 = vmatprep.mubr.bf16.mxu0 0
      %886 = vmatmul.mubr.bf16.gmra.mrb[0].mxu0 %v851
      %v887 = vpop.f32.mrb[0].mxu0
      %v888 = vadd.f32 0.0, %v887
      %v889 = vpop.f32.mrb[0].mxu0
      %v890 = vpop.f32.mrb[0].mxu0
      %v891 = vadd.f32 0.0, %v890
      %v892 = vpop.f32.mrb[0].mxu0
      %893 = vdwg.mxu0
      %vm894 = vcmask 130048
      %v895 = vsel %vm894, %v888, -inf
      %896 = vmax.xlane.f32.xlu0 %v895
      %v897 = vpop.xlane.xlu0 %896
      %v898 = vsel %vm894, %v891, -inf
      %899 = vmax.xlane.f32.xlu0 %v898
      %v900 = vpop.xlane.xlu0 %899
      %v901 = vsub.f32 %v888, %v897
      %v902 = vsub.f32 %v891, %v900
      %v903 = vmul.f32 %v901, 1.442695
      %v904 = vpow.pop %v903
      %v905 = vmul.f32 %v902, 1.442695
      %v906 = vpow.pop %v905
      %v907 = vsel %vm894, %v904, 0.0
      %908 = vadd.xlane.f32.xlu0 %v907
      %v909 = vpop.xlane.xlu0 %908
      %v910 = vsel %vm894, %v906, 0.0
      %911 = vadd.xlane.f32.xlu0 %v910
      %v912 = vpop.xlane.xlu0 %911
      %v913 = vpack.c.bf16 %v906, %v904
      %v914 = vld [vmem:[#allocation4] sm:$0xff]
      %v916 = vsel %vm894, %v913, 0
      %918 = vmatprep.subr.bf16.mxu0 0
      %919 = vmatpush1.bf16.msra.mxu0 %v914
      %920 = vmatprep.subr.bf16.mxu0 0
      %921 = vmatpush1.bf16.msra.mxu0 0
      %922 = vmatprep.subr.bf16.mxu0 0
      %923 = vmatpush1.bf16.msra.mxu0 0
      %924 = vmatprep.subr.bf16.mxu0 0
      %925 = vmatpush1.bf16.msra.mxu0 0
      %926 = vmatprep.subr.bf16.mxu0 0
      %927 = vmatpush1.bf16.msra.mxu0 0
      %928 = vmatprep.subr.bf16.mxu0 0
      %929 = vmatpush1.bf16.msra.mxu0 0
      %930 = vmatprep.subr.bf16.mxu0 0
      %931 = vmatpush1.bf16.msra.mxu0 0
      %932 = vmatprep.subr.bf16.mxu0 0
      %933 = vmatpush1.bf16.msra.mxu0 0
      %934 = vmatprep.subr.bf16.mxu0 0
      %935 = vmatpush1.bf16.msra.mxu0 0
      %936 = vmatprep.subr.bf16.mxu0 0
      %937 = vmatpush1.bf16.msra.mxu0 0
      %938 = vmatprep.subr.bf16.mxu0 0
      %939 = vmatpush1.bf16.msra.mxu0 0
      %940 = vmatprep.subr.bf16.mxu0 0
      %941 = vmatpush1.bf16.msra.mxu0 0
      %942 = vmatprep.subr.bf16.mxu0 0
      %943 = vmatpush1.bf16.msra.mxu0 0
      %944 = vmatprep.subr.bf16.mxu0 0
      %945 = vmatpush1.bf16.msra.mxu0 0
      %946 = vmatprep.subr.bf16.mxu0 0
      %947 = vmatpush1.bf16.msra.mxu0 0
      %948 = vmatprep.subr.bf16.mxu0 0
      %949 = vmatpush1.bf16.msra.mxu0 0
      %950 = vmatprep.mubr.bf16.mxu0 0
      %951 = vmatmul.mubr.bf16.gmra.mrb[0].mxu0 %v916
      %v952 = vpop.f32.mrb[0].mxu0
      %v953 = vadd.f32 0.0, %v952
      %v954 = vpop.f32.mrb[0].mxu0
      %v955 = vpop.f32.mrb[0].mxu0
      %v956 = vadd.f32 0.0, %v955
      %v957 = vpop.f32.mrb[0].mxu0
      %958 = vdwg.mxu0
      %v959 = vrcp.pop %v909
      %v960 = vrcp.pop %v912
      %v961 = vmul.f32 %v953, %v959
      %v962 = vmul.f32 %v956, %v960
      %v963 = vpack.c.bf16 %v962, %v961
      %v964 = vld [vmem:[%s4] sm:$0xf]
      %v965 = vld [vmem:[%s4 + $0x4] sm:$0xf]
      %v966 = vld [vmem:[%s4 + $0x8] sm:$0xf]
      %v967 = vld [vmem:[%s4 + $0xc] sm:$0xf]
      %v968 = vld [vmem:[%s5] sm:$0x1]
      %v970 = vlaneseq
      %v971 = vshrl.u32 %v970, 7
      %v972 = vsub.s32 0, %v971
      %v973 = vrot.slane %v968, %v972
      %v979 = vunpack.c.l.b16 %v964
      %v980 = vunpack.c.l.b16 %v965
      %v981 = vunpack.c.l.b16 %v966
      %v982 = vunpack.c.l.b16 %v967
      %v983 = vpack.c.b16 %v980, %v979
      %v984 = vpack.c.b16 %v982, %v981
      %v988 = vsel %vm849, %v963, 0
      %990 = vmatprep.subr.bf16.mxu0 0
      %991 = vmatpush1.bf16.msra.mxu0 %v983
      %992 = vmatprep.subr.bf16.mxu0 0
      %993 = vmatpush1.bf16.msra.mxu0 %v984
      %994 = vmatprep.subr.bf16.mxu0 0
      %995 = vmatpush1.bf16.msra.mxu0 0
      %996 = vmatprep.subr.bf16.mxu0 0
      %997 = vmatpush1.bf16.msra.mxu0 0
      %998 = vmatprep.subr.bf16.mxu0 0
      %999 = vmatpush1.bf16.msra.mxu0 0
      %1000 = vmatprep.subr.bf16.mxu0 0
      %1001 = vmatpush1.bf16.msra.mxu0 0
      %1002 = vmatprep.subr.bf16.mxu0 0
      %1003 = vmatpush1.bf16.msra.mxu0 0
      %1004 = vmatprep.subr.bf16.mxu0 0
      %1005 = vmatpush1.bf16.msra.mxu0 0
      %1006 = vmatprep.subr.bf16.mxu0 0
      %1007 = vmatpush1.bf16.msra.mxu0 0
      %1008 = vmatprep.subr.bf16.mxu0 0
      %1009 = vmatpush1.bf16.msra.mxu0 0
      %1010 = vmatprep.subr.bf16.mxu0 0
      %1011 = vmatpush1.bf16.msra.mxu0 0
      %1012 = vmatprep.subr.bf16.mxu0 0
      %1013 = vmatpush1.bf16.msra.mxu0 0
      %1014 = vmatprep.subr.bf16.mxu0 0
      %1015 = vmatpush1.bf16.msra.mxu0 0
      %1016 = vmatprep.subr.bf16.mxu0 0
      %1017 = vmatpush1.bf16.msra.mxu0 0
      %1018 = vmatprep.subr.bf16.mxu0 0
      %1019 = vmatpush1.bf16.msra.mxu0 0
      %1020 = vmatprep.subr.bf16.mxu0 0
      %1021 = vmatpush1.bf16.msra.mxu0 0
      %1022 = vmatprep.mubr.bf16.mxu0 0
      %1023 = vmatmul.mubr.bf16.gmra.mrb[0].mxu0 %v988
      %v1024 = vpop.f32.mrb[0].mxu0
      %v1025 = vadd.f32 %v973, %v1024
      %v1026 = vpop.f32.mrb[0].mxu0
      %v1027 = vpop.f32.mrb[0].mxu0
      %v1028 = vadd.f32 %v973, %v1027
      %v1029 = vpop.f32.mrb[0].mxu0
      %1030 = vdwg.mxu0
      %s1031 = scalar_lea.vmem [#allocation5], %s841
      %v1032 = vld [vmem:[%s1031] sm:$0xff]
      %v1033 = vld [vmem:[%s1031 + $0x8] sm:$0xff]
      %v1034 = vadd.f32 %v1032, %v1025
      %v1035 = vadd.f32 %v1033, %v1028
      %v1036 = vsel %vm849, %v1034, 0.0
      %1037 = vadd.xlane.f32.xlu0 %v1036
      %v1038 = vpop.xlane.xlu0 %1037
      %v1039 = vsel %vm849, %v1035, 0.0
      %1040 = vadd.xlane.f32.xlu0 %v1039
      %v1041 = vpop.xlane.xlu0 %1040
      %v1042 = vrcp.pop 32.0
      %v1043 = vmul.f32 %v1038, %v1042
      %v1044 = vmul.f32 %v1041, %v1042
      %v1045 = vsub.f32 %v1034, %v1043
      %v1046 = vsub.f32 %v1035, %v1044
      %v1047 = vmul.f32 %v1045, %v1045
      %v1048 = vmul.f32 %v1046, %v1046
      %v1049 = vsel %vm849, %v1047, 0.0
      %1050 = vadd.xlane.f32.xlu0 %v1049
      %v1051 = vpop.xlane.xlu0 %1050
      %v1052 = vsel %vm849, %v1048, 0.0
      %1053 = vadd.xlane.f32.xlu0 %v1052
      %v1054 = vpop.xlane.xlu0 %1053
      %v1055 = vmul.f32 %v1051, %v1042
      %v1056 = vmul.f32 %v1054, %v1042
      %v1057 = vadd.f32 %v1055, 1e-05
      %v1058 = vadd.f32 %v1056, 1e-05
      %v1059 = vrsqrt.pop %v1057
      %v1060 = vrsqrt.pop %v1058
      %v1061 = vmul.f32 %v1045, %v1059
      %v1062 = vmul.f32 %v1046, %v1060
      %v1063 = vld [vmem:[%s6] sm:$0x1]
      %v1065 = vlaneseq
      %v1066 = vshrl.u32 %v1065, 7
      %v1067 = vsub.s32 0, %v1066
      %v1068 = vrot.slane %v1063, %v1067
      %v1070 = vmul.f32 %v1061, %v1068
      %v1071 = vmul.f32 %v1062, %v1068
      %v1072 = vld [vmem:[%s7] sm:$0x1]
      %v1074 = vlaneseq
      %v1075 = vshrl.u32 %v1074, 7
      %v1076 = vsub.s32 0, %v1075
      %v1077 = vrot.slane %v1072, %v1076
      %v1079 = vadd.f32 %v1070, %v1077
      %v1080 = vadd.f32 %v1071, %v1077
      %v1081 = vpack.c.bf16 %v1080, %v1079
      %v1082 = vld [vmem:[%s8] sm:$0xf]
      %v1083 = vld [vmem:[%s8 + $0x4] sm:$0xf]
      %v1084 = vld [vmem:[%s8 + $0x8] sm:$0xf]
      %v1085 = vld [vmem:[%s8 + $0xc] sm:$0xf]
      %v1086 = vld [vmem:[%s9] sm:$0x1]
      %v1088 = vlaneseq
      %v1089 = vshrl.u32 %v1088, 7
      %v1090 = vsub.s32 0, %v1089
      %v1091 = vrot.slane %v1086, %v1090
      %v1097 = vunpack.c.l.b16 %v1082
      %v1098 = vunpack.c.l.b16 %v1083
      %v1099 = vunpack.c.l.b16 %v1084
      %v1100 = vunpack.c.l.b16 %v1085
      %v1101 = vpack.c.b16 %v1098, %v1097
      %v1102 = vpack.c.b16 %v1100, %v1099
      %v1106 = vsel %vm849, %v1081, 0
      %1108 = vmatprep.subr.bf16.mxu0 0
      %1109 = vmatpush1.bf16.msra.mxu0 %v1101
      %1110 = vmatprep.subr.bf16.mxu0 0
      %1111 = vmatpush1.bf16.msra.mxu0 %v1102
      %1112 = vmatprep.subr.bf16.mxu0 0
      %1113 = vmatpush1.bf16.msra.mxu0 0
      %1114 = vmatprep.subr.bf16.mxu0 0
      %1115 = vmatpush1.bf16.msra.mxu0 0
      %1116 = vmatprep.subr.bf16.mxu0 0
      %1117 = vmatpush1.bf16.msra.mxu0 0
      %1118 = vmatprep.subr.bf16.mxu0 0
      %1119 = vmatpush1.bf16.msra.mxu0 0
      %1120 = vmatprep.subr.bf16.mxu0 0
      %1121 = vmatpush1.bf16.msra.mxu0 0
      %1122 = vmatprep.subr.bf16.mxu0 0
      %1123 = vmatpush1.bf16.msra.mxu0 0
      %1124 = vmatprep.subr.bf16.mxu0 0
      %1125 = vmatpush1.bf16.msra.mxu0 0
      %1126 = vmatprep.subr.bf16.mxu0 0
      %1127 = vmatpush1.bf16.msra.mxu0 0
      %1128 = vmatprep.subr.bf16.mxu0 0
      %1129 = vmatpush1.bf16.msra.mxu0 0
      %1130 = vmatprep.subr.bf16.mxu0 0
      %1131 = vmatpush1.bf16.msra.mxu0 0
      %1132 = vmatprep.subr.bf16.mxu0 0
      %1133 = vmatpush1.bf16.msra.mxu0 0
      %1134 = vmatprep.subr.bf16.mxu0 0
      %1135 = vmatpush1.bf16.msra.mxu0 0
      %1136 = vmatprep.subr.bf16.mxu0 0
      %1137 = vmatpush1.bf16.msra.mxu0 0
      %1138 = vmatprep.subr.bf16.mxu0 0
      %1139 = vmatpush1.bf16.msra.mxu0 0
      %1140 = vmatprep.mubr.bf16.mxu0 0
      %1141 = vmatmul.mubr.bf16.gmra.mrb[0].mxu0 %v1106
      %v1142 = vpop.f32.mrb[0].mxu0
      %v1143 = vadd.f32 %v1091, %v1142
      %v1144 = vpop.f32.mrb[0].mxu0
      %v1145 = vpop.f32.mrb[0].mxu0
      %v1146 = vadd.f32 %v1091, %v1145
      %v1147 = vpop.f32.mrb[0].mxu0
      %1148 = vdwg.mxu0
      %v1149 = vmul.f32 %v1143, 0.5
      %v1150 = vmul.f32 %v1146, 0.5
      %v1151 = vmul.f32 %v1143, 0.70710677
      %v1152 = vmul.f32 %v1146, 0.70710677
      %v1153 = verf.f32.pop %v1151
      %v1154 = verf.f32.pop %v1152
      %v1155 = vadd.f32 %v1153, 1.0
      %v1156 = vadd.f32 %v1154, 1.0
      %v1157 = vmul.f32 %v1149, %v1155
      %v1158 = vmul.f32 %v1150, %v1156
      %v1159 = vpack.c.bf16 %v1158, %v1157
      %v1160 = vld [vmem:[%s10] sm:$0xf]
      %v1161 = vld [vmem:[%s10 + $0x4] sm:$0xf]
      %v1162 = vld [vmem:[%s10 + $0x8] sm:$0xf]
      %v1163 = vld [vmem:[%s10 + $0xc] sm:$0xf]
      %v1164 = vld [vmem:[%s11] sm:$0x1]
      %v1166 = vlaneseq
      %v1167 = vshrl.u32 %v1166, 7
      %v1168 = vsub.s32 0, %v1167
      %v1169 = vrot.slane %v1164, %v1168
      %v1175 = vunpack.c.l.b16 %v1160
      %v1176 = vunpack.c.l.b16 %v1161
      %v1177 = vunpack.c.l.b16 %v1162
      %v1178 = vunpack.c.l.b16 %v1163
      %v1179 = vpack.c.b16 %v1176, %v1175
      %v1180 = vpack.c.b16 %v1178, %v1177
      %v1184 = vsel %vm849, %v1159, 0
      %1186 = vmatprep.subr.bf16.mxu0 0
      %1187 = vmatpush1.bf16.msra.mxu0 %v1179
      %1188 = vmatprep.subr.bf16.mxu0 0
      %1189 = vmatpush1.bf16.msra.mxu0 %v1180
      %1190 = vmatprep.subr.bf16.mxu0 0
      %1191 = vmatpush1.bf16.msra.mxu0 0
      %1192 = vmatprep.subr.bf16.mxu0 0
      %1193 = vmatpush1.bf16.msra.mxu0 0
      %1194 = vmatprep.subr.bf16.mxu0 0
      %1195 = vmatpush1.bf16.msra.mxu0 0
      %1196 = vmatprep.subr.bf16.mxu0 0
      %1197 = vmatpush1.bf16.msra.mxu0 0
      %1198 = vmatprep.subr.bf16.mxu0 0
      %1199 = vmatpush1.bf16.msra.mxu0 0
      %1200 = vmatprep.subr.bf16.mxu0 0
      %1201 = vmatpush1.bf16.msra.mxu0 0
      %1202 = vmatprep.subr.bf16.mxu0 0
      %1203 = vmatpush1.bf16.msra.mxu0 0
      %1204 = vmatprep.subr.bf16.mxu0 0
      %1205 = vmatpush1.bf16.msra.mxu0 0
      %1206 = vmatprep.subr.bf16.mxu0 0
      %1207 = vmatpush1.bf16.msra.mxu0 0
      %1208 = vmatprep.subr.bf16.mxu0 0
      %1209 = vmatpush1.bf16.msra.mxu0 0
      %1210 = vmatprep.subr.bf16.mxu0 0
      %1211 = vmatpush1.bf16.msra.mxu0 0
      %1212 = vmatprep.subr.bf16.mxu0 0
      %1213 = vmatpush1.bf16.msra.mxu0 0
      %1214 = vmatprep.subr.bf16.mxu0 0
      %1215 = vmatpush1.bf16.msra.mxu0 0
      %1216 = vmatprep.subr.bf16.mxu0 0
      %1217 = vmatpush1.bf16.msra.mxu0 0
      %1218 = vmatprep.mubr.bf16.mxu0 0
      %1219 = vmatmul.mubr.bf16.gmra.mrb[0].mxu0 %v1184
      %v1220 = vpop.f32.mrb[0].mxu0
      %v1221 = vadd.f32 %v1169, %v1220
      %v1222 = vpop.f32.mrb[0].mxu0
      %v1223 = vpop.f32.mrb[0].mxu0
      %v1224 = vadd.f32 %v1169, %v1223
      %v1225 = vpop.f32.mrb[0].mxu0
      %1226 = vdwg.mxu0
      %v1227 = vadd.f32 %v1034, %v1221
      %v1228 = vadd.f32 %v1035, %v1224
      %v1229 = vpack.c.bf16 %v1228, %v1227
      %v1231 = vunpack.c.l.b16 %v1229
      %v1232 = vunpack.c.h.b16 %v1229
      %v1233 = vpack.c.b16 %v1231, %v1231
      %v1234 = vpack.c.b16 %v1232, %v1232
      %vm1237 = vcmask 257024
      %1238 = vst.msk [vmem:[%s435] sm:$0xf] %vm1237, %v1233
      %1239 = vst.msk [vmem:[%s435 + $0x4] sm:$0xf] %vm1237, %v1234
      %s1240 = smul.u32 2, %s28
      %p1241 = scmp.lt.s32.totalorder %s27, 1
      %s1242 = scalar_select %p1241, %s27, 1
      %p1243 = scmp.lt.s32.totalorder %s1240, 1
      %s1244 = scalar_select %p1243, %s1240, 1
      %s1245 = smul.addr %s1242, 2
      %s1246 = sadd.s32 %s1244, %s1245
      %s1247 = smul.addr %s1246, 4
      %s1248 = scalar_lea.vmem %s12, %s1247
      // Predicated region
      $region73: #{t2t_forward.4} parent=67 // pred_check
        %p1249 = pneg %p312
      $region74: #{t2t_forward.4} parent=67 // pred_check_branch
        %1251 = sbr.rel (%p1249) target = $region76
      $region75: #{t2t_forward.4} parent=67 // pred_region
        %s1252 = smul.u32 2, %s28
      $region76: #{t2t_forward.4} parent=67 // pred_fallthru
        _
    $region68: #{t2t_forward.4} parent=5 // pred_fallthru
      _
    %p1253 = scmp.le.s32.totalorder 2, %s18
    // Predicated region
    $region77: #{t2t_forward.4} parent=5 // pred_check
      %p1254 = pneg %p1253
    $region78: #{t2t_forward.4} parent=5 // pred_check_branch
      %1256 = sbr.rel (%p1254) target = $region80
    $region79: #{t2t_forward.4} parent=5 // pred_region
      %s1257 = ssub.s32 %s18, 2
      // Predicated region
      $region81: #{t2t_forward.4} parent=79 // pred_check
        %p1258 = pneg %p318
      $region82: #{t2t_forward.4} parent=79 // pred_check_branch
        %1260 = sbr.rel (%p1258) target = $region84
      $region83: #{t2t_forward.4} parent=79 // pred_region
        %s1261 = smul.u32 2, %s30
        %p1262 = scmp.lt.s32.totalorder %s29, 1
        %s1263 = scalar_select %p1262, %s29, 1
        %p1264 = scmp.lt.s32.totalorder %s1261, 1
        %s1265 = scalar_select %p1264, %s1261, 1
        %s1266 = smul.addr %s1263, 2
        %s1267 = sadd.s32 %s1265, %s1266
        %s1268 = smul.addr %s1267, 4
        %s1269 = scalar_lea.vmem %s12, %s1268
      $region84: #{t2t_forward.4} parent=79 // pred_fallthru
        _
    $region80: #{t2t_forward.4} parent=5 // pred_fallthru
      _
  $region6: #{t2t_forward.4} parent=0 // loop_footer
    %s22 = sadd.s32 1, %s18
  $region7: #{t2t_forward.4} parent=0 // loop_footer_branch
    %17 = sbr.rel target = $region3
  $region8: #{t2t_forward.4} parent=0 // loop_exit
    _

// kernel: t2t_forward.5
$region0: #{t2t_forward.5}
  #allocation0 [shape = 'u32[]', space=smem, size = 0x4, offset = 0x4, fixed_abs, tag = 'smem constant byte address 0x4 - core index']
  #allocation1 [shape = 'u32[144,128]{1,0:T(1,128)}', space=vmem, size = 0x12000, scoped, tag = 'internal scratch']
  %s0 = inlined_call_operand.vmem [shape: bf16[8,288], index: 0, kind: input, shape index: {}]
  %s1 = inlined_call_operand.vmem [shape: bf16[288,64], index: 1, kind: input, shape index: {}]
  %s2 = inlined_call_operand.vmem [shape: f32[1,64], index: 2, kind: input, shape index: {}]
  %s3 = inlined_call_operand.hbm [shape: f32[8,64], index: 3, kind: output, shape index: {}]
  %s4 = sld [smem:[#allocation0]]
  $region22: #{t2t_forward.5} parent=0
    _
  %s6 = ssub.s32 1, %s4
  %s7 = scalar_select 0, %s6, %s4
  $region1: #{t2t_forward.5} parent=0
    #allocation2 [shape = 'u8[4096]{0}', space=vmem, size = 0x1000, scoped, tag = 'output window, operand 0, single buffered']
    #allocation3 [shape = 's32[1]{0}', space=sflag, size = 0x4, scoped, tag = 'scoped memory for t2t_forward.5']
    %8 = vsyncpa [#allocation3], 0
    // Predicated region
    $region2: #{t2t_forward.5} parent=1 // pred_check
      _
    $region3: #{t2t_forward.5} parent=1 // pred_check_branch
      %10 = sbr.rel (0) target = $region5
    $region4: #{t2t_forward.5} parent=1 // pred_region
      _
    $region5: #{t2t_forward.5} parent=1 // pred_fallthru
      _
    // Predicated region
    $region6: #{t2t_forward.5} parent=1 // pred_check
      _
    $region7: #{t2t_forward.5} parent=1 // pred_check_branch
      %12 = sbr.rel (0) target = $region9
    $region8: #{t2t_forward.5} parent=1 // pred_region
      _
    $region9: #{t2t_forward.5} parent=1 // pred_fallthru
      _
    // Predicated region
    $region10: #{t2t_forward.5} parent=1 // pred_check
      _
    $region11: #{t2t_forward.5} parent=1 // pred_check_branch
      %14 = sbr.rel (0) target = $region13
    $region12: #{t2t_forward.5} parent=1 // pred_region
      _
    $region13: #{t2t_forward.5} parent=1 // pred_fallthru
      _
    %v16 = vld [vmem:[%s0] sm:$0xff]
    %v17 = vld [vmem:[%s0 + $0x8] sm:$0xf]
    %v18 = vld [vmem:[%s1] sm:$0xf]
    %v19 = vld [vmem:[%s1 + $0x4] sm:$0xf]
    %v20 = vld [vmem:[%s1 + $0x8] sm:$0xf]
    %v21 = vld [vmem:[%s1 + $0xc] sm:$0xf]
    %v22 = vld [vmem:[%s1 + $0x10] sm:$0xf]
    %v23 = vld [vmem:[%s1 + $0x14] sm:$0xf]
    %v24 = vld [vmem:[%s1 + $0x18] sm:$0xf]
    %v25 = vld [vmem:[%s1 + $0x1c] sm:$0xf]
    %v26 = vld [vmem:[%s1 + $0x20] sm:$0xf]
    %v27 = vld [vmem:[%s1 + $0x24] sm:$0xf]
    %v28 = vld [vmem:[%s1 + $0x28] sm:$0xf]
    %v29 = vld [vmem:[%s1 + $0x2c] sm:$0xf]
    %v30 = vld [vmem:[%s1 + $0x30] sm:$0xf]
    %v31 = vld [vmem:[%s1 + $0x34] sm:$0xf]
    %v32 = vld [vmem:[%s1 + $0x38] sm:$0xf]
    %v33 = vld [vmem:[%s1 + $0x3c] sm:$0xf]
    %v34 = vld [vmem:[%s1 + $0x40] sm:$0xf]
    %v35 = vld [vmem:[%s1 + $0x44] sm:$0xf]
    %v36 = vld [vmem:[%s1 + $0x48] sm:$0xf]
    %v37 = vld [vmem:[%s1 + $0x4c] sm:$0xf]
    %v38 = vld [vmem:[%s1 + $0x50] sm:$0xf]
    %v39 = vld [vmem:[%s1 + $0x54] sm:$0xf]
    %v40 = vld [vmem:[%s1 + $0x58] sm:$0xf]
    %v41 = vld [vmem:[%s1 + $0x5c] sm:$0xf]
    %v42 = vld [vmem:[%s1 + $0x60] sm:$0xf]
    %v43 = vld [vmem:[%s1 + $0x64] sm:$0xf]
    %v44 = vld [vmem:[%s1 + $0x68] sm:$0xf]
    %v45 = vld [vmem:[%s1 + $0x6c] sm:$0xf]
    %v46 = vld [vmem:[%s1 + $0x70] sm:$0xf]
    %v47 = vld [vmem:[%s1 + $0x74] sm:$0xf]
    %v48 = vld [vmem:[%s1 + $0x78] sm:$0xf]
    %v49 = vld [vmem:[%s1 + $0x7c] sm:$0xf]
    %v50 = vld [vmem:[%s1 + $0x80] sm:$0xf]
    %v51 = vld [vmem:[%s1 + $0x84] sm:$0xf]
    %v52 = vld [vmem:[%s1 + $0x88] sm:$0xf]
    %v53 = vld [vmem:[%s1 + $0x8c] sm:$0xf]
    %v54 = vld [vmem:[%s2] sm:$0x1]
    %v56 = vlaneseq
    %v57 = vshrl.u32 %v56, 7
    %v58 = vsub.s32 0, %v57
    %v59 = vrot.slane %v54, %v58
    %v63 = vunpack.c.l.b16 %v16
    %v64 = vunpack.c.h.b16 %v16
    %v65 = vunpack.c.l.b16 %v17
    %v66 = vpack.c.b16 %v63, %v63
    %v67 = vpack.c.b16 %v64, %v64
    %v68 = vpack.c.b16 %v65, %v65
    %v107 = vunpack.c.l.b16 %v18
    %v108 = vunpack.c.l.b16 %v19
    %v109 = vunpack.c.l.b16 %v20
    %v110 = vunpack.c.l.b16 %v21
    %v111 = vunpack.c.l.b16 %v22
    %v112 = vunpack.c.l.b16 %v23
    %v113 = vunpack.c.l.b16 %v24
    %v114 = vunpack.c.l.b16 %v25
    %v115 = vunpack.c.l.b16 %v26
    %v116 = vunpack.c.l.b16 %v27
    %v117 = vunpack.c.l.b16 %v28
    %v118 = vunpack.c.l.b16 %v29
    %v119 = vunpack.c.l.b16 %v30
    %v120 = vunpack.c.l.b16 %v31
    %v121 = vunpack.c.l.b16 %v32
    %v122 = vunpack.c.l.b16 %v33
    %v123 = vunpack.c.l.b16 %v34
    %v124 = vunpack.c.l.b16 %v35
    %v125 = vunpack.c.l.b16 %v36
    %v126 = vunpack.c.l.b16 %v37
    %v127 = vunpack.c.l.b16 %v38
    %v128 = vunpack.c.l.b16 %v39
    %v129 = vunpack.c.l.b16 %v40
    %v130 = vunpack.c.l.b16 %v41
    %v131 = vunpack.c.l.b16 %v42
    %v132 = vunpack.c.l.b16 %v43
    %v133 = vunpack.c.l.b16 %v44
    %v134 = vunpack.c.l.b16 %v45
    %v135 = vunpack.c.l.b16 %v46
    %v136 = vunpack.c.l.b16 %v47
    %v137 = vunpack.c.l.b16 %v48
    %v138 = vunpack.c.l.b16 %v49
    %v139 = vunpack.c.l.b16 %v50
    %v140 = vunpack.c.l.b16 %v51
    %v141 = vunpack.c.l.b16 %v52
    %v142 = vunpack.c.l.b16 %v53
    %v143 = vpack.c.b16 %v108, %v107
    %v144 = vpack.c.b16 %v110, %v109
    %v145 = vpack.c.b16 %v112, %v111
    %v146 = vpack.c.b16 %v114, %v113
    %v147 = vpack.c.b16 %v116, %v115
    %v148 = vpack.c.b16 %v118, %v117
    %v149 = vpack.c.b16 %v120, %v119
    %v150 = vpack.c.b16 %v122, %v121
    %v151 = vpack.c.b16 %v124, %v123
    %v152 = vpack.c.b16 %v126, %v125
    %v153 = vpack.c.b16 %v128, %v127
    %v154 = vpack.c.b16 %v130, %v129
    %v155 = vpack.c.b16 %v132, %v131
    %v156 = vpack.c.b16 %v134, %v133
    %v157 = vpack.c.b16 %v136, %v135
    %v158 = vpack.c.b16 %v138, %v137
    %v159 = vpack.c.b16 %v140, %v139
    %v160 = vpack.c.b16 %v142, %v141
    %vm179 = vcmask 261120
    %v181 = vsel %vm179, %v68, 0
    %183 = vmatprep.subr.bf16.mxu0 0
    %184 = vmatpush1.bf16.msra.mxu0 %v143
    %185 = vmatprep.subr.bf16.mxu0 0
    %186 = vmatpush1.bf16.msra.mxu0 %v144
    %187 = vmatprep.subr.bf16.mxu0 0
    %188 = vmatpush1.bf16.msra.mxu0 %v145
    %189 = vmatprep.subr.bf16.mxu0 0
    %190 = vmatpush1.bf16.msra.mxu0 %v146
    %191 = vmatprep.subr.bf16.mxu0 0
    %192 = vmatpush1.bf16.msra.mxu0 %v147
    %193 = vmatprep.subr.bf16.mxu0 0
    %194 = vmatpush1.bf16.msra.mxu0 %v148
    %195 = vmatprep.subr.bf16.mxu0 0
    %196 = vmatpush1.bf16.msra.mxu0 %v149
    %197 = vmatprep.subr.bf16.mxu0 0
    %198 = vmatpush1.bf16.msra.mxu0 %v150
    %199 = vmatprep.subr.bf16.mxu0 0
    %200 = vmatpush1.bf16.msra.mxu0 %v151
    %201 = vmatprep.subr.bf16.mxu0 0
    %202 = vmatpush1.bf16.msra.mxu0 %v152
    %203 = vmatprep.subr.bf16.mxu0 0
    %204 = vmatpush1.bf16.msra.mxu0 %v153
    %205 = vmatprep.subr.bf16.mxu0 0
    %206 = vmatpush1.bf16.msra.mxu0 %v154
    %207 = vmatprep.subr.bf16.mxu0 0
    %208 = vmatpush1.bf16.msra.mxu0 %v155
    %209 = vmatprep.subr.bf16.mxu0 0
    %210 = vmatpush1.bf16.msra.mxu0 %v156
    %211 = vmatprep.subr.bf16.mxu0 0
    %212 = vmatpush1.bf16.msra.mxu0 %v157
    %213 = vmatprep.subr.bf16.mxu0 0
    %214 = vmatpush1.bf16.msra.mxu0 %v158
    %215 = vmatprep.mubr.bf16.mxu0 %v67
    %216 = vmatmul.mubr.bf16.gmra.mrb[0].mxu0 %v66
    %v217 = vpop.f32.mrb[0].mxu0
    %v218 = vadd.f32 %v59, %v217
    %v219 = vpop.f32.mrb[0].mxu0
    %v220 = vpop.f32.mrb[0].mxu0
    %v221 = vpop.f32.mrb[0].mxu0
    %222 = vdwg.mxu0
    %223 = vmatprep.subr.bf16.mxu0 0
    %224 = vmatpush1.bf16.msra.mxu0 %v159
    %225 = vmatprep.subr.bf16.mxu0 0
    %226 = vmatpush1.bf16.msra.mxu0 %v160
    %227 = vmatprep.subr.bf16.mxu0 0
    %228 = vmatpush1.bf16.msra.mxu0 0
    %229 = vmatprep.subr.bf16.mxu0 0
    %230 = vmatpush1.bf16.msra.mxu0 0
    %231 = vmatprep.subr.bf16.mxu0 0
    %232 = vmatpush1.bf16.msra.mxu0 0
    %233 = vmatprep.subr.bf16.mxu0 0
    %234 = vmatpush1.bf16.msra.mxu0 0
    %235 = vmatprep.subr.bf16.mxu0 0
    %236 = vmatpush1.bf16.msra.mxu0 0
    %237 = vmatprep.subr.bf16.mxu0 0
    %238 = vmatpush1.bf16.msra.mxu0 0
    %239 = vmatprep.subr.bf16.mxu0 0
    %240 = vmatpush1.bf16.msra.mxu0 0
    %241 = vmatprep.subr.bf16.mxu0 0
    %242 = vmatpush1.bf16.msra.mxu0 0
    %243 = vmatprep.subr.bf16.mxu0 0
    %244 = vmatpush1.bf16.msra.mxu0 0
    %245 = vmatprep.subr.bf16.mxu0 0
    %246 = vmatpush1.bf16.msra.mxu0 0
    %247 = vmatprep.subr.bf16.mxu0 0
    %248 = vmatpush1.bf16.msra.mxu0 0
    %249 = vmatprep.subr.bf16.mxu0 0
    %250 = vmatpush1.bf16.msra.mxu0 0
    %251 = vmatprep.subr.bf16.mxu0 0
    %252 = vmatpush1.bf16.msra.mxu0 0
    %253 = vmatprep.subr.bf16.mxu0 0
    %254 = vmatpush1.bf16.msra.mxu0 0
    %255 = vmatprep.mubr.bf16.mxu0 0
    %256 = vmatmul.mubr.bf16.gmra.mrb[0].mxu0 %v181
    %v257 = vpop.f32.mrb[0].mxu0
    %v258 = vadd.f32 %v218, %v257
    %v259 = vpop.f32.mrb[0].mxu0
    %v260 = vpop.f32.mrb[0].mxu0
    %v261 = vpop.f32.mrb[0].mxu0
    %262 = vdwg.mxu0
    %vm263 = vcmask 523264
    %264 = vst.msk [vmem:[#allocation2] sm:$0xff] %vm263, %v258
    // Predicated region
    $region14: #{t2t_forward.5} parent=1 // pred_check
      _
    $region15: #{t2t_forward.5} parent=1 // pred_check_branch
      %266 = sbr.rel (0) target = $region17
    $region16: #{t2t_forward.5} parent=1 // pred_region
      %s268 = ssub.s32 128, 128
      %269 = vsyncadd [#allocation3], %s268
      %s271 = sshll.u32 [#allocation2], 4
      %s272 = int_to_ptr.vmem [resolvable:$true] %s271
      %274 = dma.vmem_to_hbm [thread:$0]  %s272, 128, %s3, [#allocation3]
    $region17: #{t2t_forward.5} parent=1 // pred_fallthru
      _
    // Predicated region
    $region18: #{t2t_forward.5} parent=1 // pred_check
      _
    $region19: #{t2t_forward.5} parent=1 // pred_check_branch
      %276 = sbr.rel (0) target = $region21
    $region20: #{t2t_forward.5} parent=1 // pred_region
      %277 = dma.done [#allocation3], 128
    $region21: #{t2t_forward.5} parent=1 // pred_fallthru
      _
    %278 = vsyncpa [#allocation3], 1

</llo_original>
